<compile_context>
chip_gen: v7x
topology: tpu7x:2x2x1
jax: 0.10.0
libtpu: 0.0.40
codegen_flags: <defaults>
</compile_context>

<pallas_src>
import math
from functools import partial

import jax
import jax.numpy as jnp
import numpy as np
from jax.experimental import pallas as pl
from jax.experimental.pallas import tpu as pltpu

EPS = 1e-5
NEG_INF = -1e30


# -----------------------------------------------------------------------------
# In-kernel helpers
# -----------------------------------------------------------------------------
def _rmsnorm_f32(x, w, eps):
  ms = jnp.mean(x * x, axis=-1, keepdims=True)
  return x * jax.lax.rsqrt(ms + eps) * w


# -----------------------------------------------------------------------------
# Fused EncoderLayer kernel: grid point = (batch, q_tile, kv_tile)
# -----------------------------------------------------------------------------
def _encoder_layer_kernel(*args, H, TQ, TKV, eps, has_residual, fuse_final):
  idx = 0
  h_q_ref = args[idx]; idx += 1
  r_q_ref = None
  if has_residual:
    r_q_ref = args[idx]; idx += 1
  h_kv_ref = args[idx]; idx += 1
  r_kv_ref = None
  if has_residual:
    r_kv_ref = args[idx]; idx += 1
  n1_ref, wqkv_ref, wo_ref, n2_ref, w1_ref, w2_ref = args[idx:idx + 6]
  idx += 6
  wf_ref = None
  if fuse_final:
    wf_ref = args[idx]; idx += 1
  if fuse_final:
    out_ref = args[idx]; idx += 1
    h_out_ref = r_out_ref = None
  else:
    h_out_ref, r_out_ref = args[idx:idx + 2]; idx += 2
  q_sc, res1_sc, m_sc, l_sc, acc_sc = args[idx:idx + 5]

  D = h_q_ref.shape[-1]
  dh = D // H
  scale = 1.0 / math.sqrt(dh)
  qi = pl.program_id(1)
  ki = pl.program_id(2)
  n_kv = pl.num_programs(2)

  # ---- kv step 0: fused add + RMSNorm #1 for the q tile, Q projection, flash init
  @pl.when(ki == 0)
  def _init():
    res1_q = h_q_ref[0].astype(jnp.float32)
    if has_residual:
      res1_q = res1_q + r_q_ref[0].astype(jnp.float32)
    hn_q = _rmsnorm_f32(res1_q, n1_ref[0].astype(jnp.float32), eps)
    hn_q_b = jnp.broadcast_to(hn_q.astype(jnp.bfloat16)[None], (H, TQ, D))
    # Q slab of the fused per-head QKV weight; 1/sqrt(dh) folded in once here.
    q = jnp.einsum("hqd,hde->hqe", hn_q_b, wqkv_ref[:, :, 0:dh],
                   preferred_element_type=jnp.float32) * scale
    q_sc[...] = q.astype(jnp.bfloat16)
    res1_sc[...] = res1_q
    m_sc[...] = jnp.full(m_sc.shape, -jnp.inf, dtype=m_sc.dtype)
    l_sc[...] = jnp.zeros(l_sc.shape, dtype=l_sc.dtype)
    acc_sc[...] = jnp.zeros(acc_sc.shape, dtype=acc_sc.dtype)

  # ---- accumulate this kv tile (skipped when entirely in the causal future)
  @pl.when(ki * TKV <= qi * TQ + (TQ - 1))
  def _accumulate():
    res1_kv = h_kv_ref[0].astype(jnp.float32)
    if has_residual:
      res1_kv = res1_kv + r_kv_ref[0].astype(jnp.float32)
    hn_kv = _rmsnorm_f32(res1_kv, n1_ref[0].astype(jnp.float32), eps)
    hn_kv_b = jnp.broadcast_to(hn_kv.astype(jnp.bfloat16)[None], (H, TKV, D))
    k = jnp.einsum("hkd,hde->hke", hn_kv_b, wqkv_ref[:, :, dh:2 * dh],
                   preferred_element_type=jnp.float32).astype(jnp.bfloat16)
    v = jnp.einsum("hkd,hde->hke", hn_kv_b, wqkv_ref[:, :, 2 * dh:3 * dh],
                   preferred_element_type=jnp.float32).astype(jnp.bfloat16)

    # Batched-head scores in f32; causal mask on global token positions.
    s = jnp.einsum("hqd,hkd->hqk", q_sc[...], k,
                   preferred_element_type=jnp.float32)          # (H, TQ, TKV)
    rows = qi * TQ + jax.lax.broadcasted_iota(jnp.int32, (H, TQ, TKV), 1)
    cols = ki * TKV + jax.lax.broadcasted_iota(jnp.int32, (H, TQ, TKV), 2)
    s = jnp.where(rows >= cols, s, NEG_INF)

    m_prev = m_sc[...]
    m_new = jnp.maximum(m_prev, jnp.max(s, axis=-1, keepdims=True))
    alpha = jnp.exp(m_prev - m_new)
    p = jnp.exp(s - m_new)
    l_sc[...] = alpha * l_sc[...] + jnp.sum(p, axis=-1, keepdims=True)
    acc_sc[...] = alpha * acc_sc[...] + jnp.einsum(
        "hqk,hkd->hqd", p.astype(jnp.bfloat16), v,
        preferred_element_type=jnp.float32)
    m_sc[...] = m_new

  # ---- last kv step: output projection, fused add+RMSNorm #2, SiLU MLP
  @pl.when(ki == n_kv - 1)
  def _finalize():
    inv_l = pl.reciprocal(l_sc[...], approx=True)               # EUP slot
    attn_h = (acc_sc[...] * inv_l).astype(jnp.bfloat16)         # (H, TQ, dh)
    attn = jnp.sum(
        jnp.einsum("hqd,hde->hqe", attn_h, wo_ref[...],
                   preferred_element_type=jnp.float32), axis=0)  # (TQ, D)
    res2 = attn + res1_sc[...]
    hn2 = _rmsnorm_f32(res2, n2_ref[0].astype(jnp.float32), eps)
    u = jnp.dot(hn2.astype(jnp.bfloat16), w1_ref[...],
                preferred_element_type=jnp.float32)
    u = u * jax.nn.sigmoid(u)                                   # SiLU kept in f32
    y = jnp.dot(u.astype(jnp.bfloat16), w2_ref[...],
                preferred_element_type=jnp.float32)
    if fuse_final:
      out_ref[0] = _rmsnorm_f32(y + res2, wf_ref[0].astype(jnp.float32),
                                eps).astype(out_ref.dtype)
    else:
      h_out_ref[0] = y.astype(h_out_ref.dtype)
      r_out_ref[0] = res2.astype(r_out_ref.dtype)


# -----------------------------------------------------------------------------
# pallas_call builder
# -----------------------------------------------------------------------------
def _weight_spec(shape, buffered):
  zeros = (0,) * len(shape)
  if buffered:
    # Constant block across the whole grid -> single-buffer it (halves its VMEM).
    return pl.BlockSpec(shape, lambda b, qi, ki: zeros,
                        pipeline_mode=pl.Buffered(1))
  return pl.BlockSpec(shape, lambda b, qi, ki: zeros)


def make_encoder_layer_call(B, S, D, H, F, *, TQ, TKV, has_residual, fuse_final,
                            buffered_weights, eps=EPS):
  assert D % H == 0 and S % TQ == 0 and S % TKV == 0
  dh = D // H
  n_q, n_kv = S // TQ, S // TKV

  hq_spec = pl.BlockSpec((1, TQ, D), lambda b, qi, ki: (b, qi, 0))
  hkv_spec = pl.BlockSpec((1, TKV, D), lambda b, qi, ki: (b, ki, 0))
  out_spec = pl.BlockSpec((1, TQ, D), lambda b, qi, ki: (b, qi, 0))

  in_specs = [hq_spec]
  if has_residual:
    in_specs.append(hq_spec)
  in_specs.append(hkv_spec)
  if has_residual:
    in_specs.append(hkv_spec)
  in_specs += [
      _weight_spec((1, D), buffered_weights),           # n1
      _weight_spec((H, D, 3 * dh), buffered_weights),   # fused QKV (head-major)
      _weight_spec((H, dh, D), buffered_weights),       # Wo (head-major)
      _weight_spec((1, D), buffered_weights),           # n2
      _weight_spec((D, F), buffered_weights),           # W1
      _weight_spec((F, D), buffered_weights),           # W2
  ]
  if fuse_final:
    in_specs.append(_weight_spec((1, D), buffered_weights))   # final norm weight

  if fuse_final:
    out_shape = jax.ShapeDtypeStruct((B, S, D), jnp.float32)
    out_specs = out_spec
  else:
    out_shape = (jax.ShapeDtypeStruct((B, S, D), jnp.bfloat16),   # hidden (bf16)
                 jax.ShapeDtypeStruct((B, S, D), jnp.float32))    # residual (fp32)
    out_specs = [out_spec, out_spec]

  scratch_shapes = [
      pltpu.VMEM((H, TQ, dh), jnp.bfloat16),   # q heads (pre-scaled)
      pltpu.VMEM((TQ, D), jnp.float32),        # res1 for this q tile
      pltpu.VMEM((H, TQ, 1), jnp.float32),     # running max
      pltpu.VMEM((H, TQ, 1), jnp.float32),     # running denominator
      pltpu.VMEM((H, TQ, dh), jnp.float32),    # output accumulator
  ]

  # VMEM budget: weights (x1 when single-buffered) + double-buffered activation
  # tiles + scratch, 2x headroom, clamped to v7x's 64 MiB physical VMEM.
  bf16, f32 = 2, 4
  w_buf = 1 if buffered_weights else 2
  weight_bytes = w_buf * (bf16 * (3 * D * D + D * D + 2 * D * F)
                          + f32 * D * (3 if fuse_final else 2))
  act_in = 2 * bf16 * (TQ + TKV) * D
  if has_residual:
    act_in += 2 * f32 * (TQ + TKV) * D
  act_out = 2 * TQ * D * (f32 if fuse_final else (bf16 + f32))
  scratch_bytes = (2 * H * TQ * dh * f32) + (TQ * D * f32) + (2 * H * TQ * 128 * f32)
  est = weight_bytes + act_in + act_out + scratch_bytes
  vmem_limit = int(min(max(2 * est + (8 << 20), 32 << 20), 64 << 20))

  kernel = partial(_encoder_layer_kernel, H=H, TQ=TQ, TKV=TKV, eps=eps,
                   has_residual=has_residual, fuse_final=fuse_final)
  return pl.pallas_call(
      kernel,
      out_shape=out_shape,
      grid_spec=pltpu.PrefetchScalarGridSpec(
          num_scalar_prefetch=0,
          grid=(B, n_q, n_kv),
          in_specs=in_specs,
          out_specs=out_specs,
          scratch_shapes=scratch_shapes),
      compiler_params=pltpu.CompilerParams(
          dimension_semantics=("parallel", "parallel", "arbitrary"),
          vmem_limit_bytes=vmem_limit),
  )


# -----------------------------------------------------------------------------
# Probe: is pipeline_mode=pl.Buffered(1) supported by this jax/libtpu?
# -----------------------------------------------------------------------------
_BUFFERED_WEIGHTS_OK = None


def _buffered_weights_supported():
  global _BUFFERED_WEIGHTS_OK
  if _BUFFERED_WEIGHTS_OK is not None:
    return _BUFFERED_WEIGHTS_OK
  try:
    def k(x_ref, w_ref, o_ref):
      o_ref[...] = x_ref[...] + w_ref[...]

    f = pl.pallas_call(
        k,
        out_shape=jax.ShapeDtypeStruct((16, 256), jnp.float32),
        grid_spec=pltpu.PrefetchScalarGridSpec(
            num_scalar_prefetch=0,
            grid=(2, 2),
            in_specs=[pl.BlockSpec((8, 128), lambda i, j: (i, j)),
                      pl.BlockSpec((8, 128), lambda i, j: (0, 0),
                                   pipeline_mode=pl.Buffered(1))],
            out_specs=pl.BlockSpec((8, 128), lambda i, j: (i, j))),
    )
    x = jnp.arange(16 * 256, dtype=jnp.float32).reshape(16, 256)
    w = jnp.full((8, 128), 3.0, jnp.float32)
    got = np.asarray(jax.block_until_ready(f(x, w)))
    expect = np.asarray(x) + np.tile(np.asarray(w), (2, 2))
    _BUFFERED_WEIGHTS_OK = bool(np.allclose(got, expect))
  except Exception:
    _BUFFERED_WEIGHTS_OK = False
  return _BUFFERED_WEIGHTS_OK


# -----------------------------------------------------------------------------
# Host-side weight layout plumbing + forward pass
# -----------------------------------------------------------------------------
def _head_major_qkv(wqkv, H):
  """(D, 3D) fused QKV -> (H, D, 3*dh) head-major slab [q | k | v] per head."""
  D = wqkv.shape[0]
  dh = D // H
  return wqkv.reshape(D, 3, H, dh).transpose(2, 0, 1, 3).reshape(H, D, 3 * dh)


def _pick_tile(S, target=128):
  return target if (S > target and S % target == 0) else S


def encoder_forward(hidden_states, params, *, H, tq=None, tkv=None):
  B, S, D = hidden_states.shape
  F = params["layers"][0]["w1"].shape[1]
  dh = D // H
  TQ = tq or _pick_tile(S)
  TKV = tkv or _pick_tile(S)
  n_layers = len(params["layers"])
  buffered = _buffered_weights_supported()

  h = hidden_states.astype(jnp.bfloat16)
  residual = None
  for i, lp in enumerate(params["layers"]):
    is_first = i == 0
    is_last = i == n_layers - 1
    call = make_encoder_layer_call(
        B, S, D, H, F, TQ=TQ, TKV=TKV,
        has_residual=not is_first, fuse_final=is_last,
        buffered_weights=buffered)
    wqkv_h = _head_major_qkv(lp["wqkv"], H)     # (H, D, 3*dh) bf16
    wo_h = lp["wo"].reshape(H, dh, D)           # (H, dh, D)   bf16
    args = [h]
    if not is_first:
      args.append(residual)
    args.append(h)
    if not is_first:
      args.append(residual)
    args += [lp["n1"], wqkv_h, wo_h, lp["n2"], lp["w1"], lp["w2"]]
    if is_last:
      args.append(params["final_w"])
      return call(*args)
    h, residual = call(*args)
  raise AssertionError("params['layers'] must be non-empty")


# -----------------------------------------------------------------------------
# Pure-JAX f32 reference (same math, same bf16-rounded weights)
# -----------------------------------------------------------------------------
def _rmsnorm_ref(x, w, eps=EPS):
  ms = jnp.mean(x * x, axis=-1, keepdims=True)
  return x * jax.lax.rsqrt(ms + eps) * w


def encoder_ref(hidden_states, params, *, H, eps=EPS):
  B, S, D = hidden_states.shape
  dh = D // H
  h = hidden_states.astype(jnp.float32)
  res = None
  causal = jnp.tril(jnp.ones((S, S), bool))
  for lp in params["layers"]:
    wqkv = lp["wqkv"].astype(jnp.float32)
    wq, wk, wv = wqkv[:, :D], wqkv[:, D:2 * D], wqkv[:, 2 * D:]
    wo = lp["wo"].astype(jnp.float32)
    w1 = lp["w1"].astype(jnp.float32)
    w2 = lp["w2"].astype(jnp.float32)
    res1 = h if res is None else h + res
    hn = _rmsnorm_ref(res1, lp["n1"], eps)
    q = (hn @ wq).reshape(B, S, H, dh).transpose(0, 2, 1, 3)
    k = (hn @ wk).reshape(B, S, H, dh).transpose(0, 2, 1, 3)
    v = (hn @ wv).reshape(B, S, H, dh).transpose(0, 2, 1, 3)
    s = jnp.einsum("bhqd,bhkd->bhqk", q, k) / math.sqrt(dh)
    s = jnp.where(causal, s, NEG_INF)
    p = jax.nn.softmax(s, axis=-1)
    o = jnp.einsum("bhqk,bhkd->bhqd", p, v).transpose(0, 2, 1, 3).reshape(B, S, D)
    attn = o @ wo
    res2 = attn + res1
    hn2 = _rmsnorm_ref(res2, lp["n2"], eps)
    u = hn2 @ w1
    u = u * jax.nn.sigmoid(u)
    h = u @ w2
    res = res2
  return _rmsnorm_ref(h + res, params["final_w"], eps)


# -----------------------------------------------------------------------------
# Deterministic parameter init (mirrors _init_weights: N(0, 0.02); residual-out
# projections rescaled by 1/sqrt(2*num_layers); RMSNorm weights = 1)
# -----------------------------------------------------------------------------
def init_params(key, num_layers, D, F):
  layers = []
  rescale = 1.0 / math.sqrt(2 * num_layers)
  for _ in range(num_layers):
    key, *ks = jax.random.split(key, 7)
    wq = 0.02 * jax.random.normal(ks[0], (D, D), jnp.float32)
    wk = 0.02 * jax.random.normal(ks[1], (D, D), jnp.float32)
    wv = 0.02 * jax.random.normal(ks[2], (D, D), jnp.float32)
    wo = 0.02 * rescale * jax.random.normal(ks[3], (D, D), jnp.float32)
    w1 = 0.02 * jax.random.normal(ks[4], (D, F), jnp.float32)
    w2 = 0.02 * rescale * jax.random.normal(ks[5], (F, D), jnp.float32)
    layers.append({
        "n1": jnp.ones((1, D), jnp.float32),
        "wqkv": jnp.concatenate([wq, wk, wv], axis=1).astype(jnp.bfloat16),
        "wo": wo.astype(jnp.bfloat16),
        "n2": jnp.ones((1, D), jnp.float32),
        "w1": w1.astype(jnp.bfloat16),
        "w2": w2.astype(jnp.bfloat16),
    })
  return {"layers": layers, "final_w": jnp.ones((1, D), jnp.float32)}


# -----------------------------------------------------------------------------
if __name__ == "__main__":
  B, S, D = 2, 16, 32        # batch, sequence_length, hidden_dim
  H, F = 4, 64               # attention heads, MLP hidden size
  NUM_LAYERS = 2

  key = jax.random.PRNGKey(0)
  key, pkey, xkey = jax.random.split(key, 3)
  params = init_params(pkey, NUM_LAYERS, D, F)
  x = jax.random.normal(xkey, (B, S, D), jnp.float32)

  out = jax.block_until_ready(encoder_forward(x, params, H=H))

  # Reference sees the same bf16-rounded input/weights but computes fully in f32.
  x_ref = x.astype(jnp.bfloat16).astype(jnp.float32)
  ref = jax.block_until_ready(encoder_ref(x_ref, params, H=H))
  np.testing.assert_allclose(np.asarray(out), np.asarray(ref), rtol=3e-2, atol=3e-2)

  print("KERNEL_OK")
</pallas_src>

<mosaic_0001>
module attributes {stable_mosaic.version = 11 : i64} {
  func.func @k(%arg0: i32, %arg1: i32, %arg2: memref<8x128xf32, #tpu.memory_space<vmem>>, %arg3: memref<8x128xf32, #tpu.memory_space<vmem>>, %arg4: memref<8x128xf32, #tpu.memory_space<vmem>>) attributes {dimension_semantics = [#tpu.dimension_semantics<arbitrary>, #tpu.dimension_semantics<arbitrary>], iteration_bounds = array<i64: 2, 2>, scalar_prefetch = 0 : i64, scratch_operands = 0 : i64, tpu.core_type = #tpu.core_type<tc>, window_params = [{transform_indices = @transform_0, window_bounds = array<i64: 8, 128>}, {pipeline_mode = #tpu.pipeline_mode<synchronous>, transform_indices = @transform_1, window_bounds = array<i64: 8, 128>}, {transform_indices = @transform_2, window_bounds = array<i64: 8, 128>}]} {
    %c0 = arith.constant 0 : index
    %c0_0 = arith.constant 0 : index
    %0 = vector.load %arg2[%c0, %c0_0] : memref<8x128xf32, #tpu.memory_space<vmem>>, vector<8x128xf32>
    %c0_1 = arith.constant 0 : index
    %c0_2 = arith.constant 0 : index
    %1 = vector.load %arg3[%c0_1, %c0_2] : memref<8x128xf32, #tpu.memory_space<vmem>>, vector<8x128xf32>
    %2 = arith.addf %0, %1 : vector<8x128xf32>
    %c0_3 = arith.constant 0 : index
    %c0_4 = arith.constant 0 : index
    %3 = vector.load %arg4[%c0_3, %c0_4] : memref<8x128xf32, #tpu.memory_space<vmem>>, vector<8x128xf32>
    tpu.vector_store %arg4[%c0_3, %c0_4], %2 {strides = array<i32>} : memref<8x128xf32, #tpu.memory_space<vmem>>, vector<8x128xf32>,
    return
  }
  func.func @transform_0(%arg0: i32, %arg1: i32) -> (i32, i32) {
    %c0_i32 = arith.constant 0 : i32
    return %arg0, %arg1 : i32, i32
  }
  func.func @transform_1(%arg0: i32, %arg1: i32) -> (i32, i32) {
    %c0_i32 = arith.constant 0 : i32
    %c0_i32_0 = arith.constant 0 : i32
    %c0_i32_1 = arith.constant 0 : i32
    return %c0_i32, %c0_i32_0 : i32, i32
  }
  func.func @transform_2(%arg0: i32, %arg1: i32) -> (i32, i32) {
    %c0_i32 = arith.constant 0 : i32
    return %arg0, %arg1 : i32, i32
  }
}

module attributes {stable_mosaic.version = 11 : i64} {
  func.func @_encoder_layer_kernel(%arg0: i32, %arg1: i32, %arg2: i32, %arg3: memref<1x16x32xbf16, #tpu.memory_space<vmem>>, %arg4: memref<1x16x32xbf16, #tpu.memory_space<vmem>>, %arg5: memref<1x32xf32, #tpu.memory_space<vmem>>, %arg6: memref<4x32x24xbf16, #tpu.memory_space<vmem>>, %arg7: memref<4x8x32xbf16, #tpu.memory_space<vmem>>, %arg8: memref<1x32xf32, #tpu.memory_space<vmem>>, %arg9: memref<32x64xbf16, #tpu.memory_space<vmem>>, %arg10: memref<64x32xbf16, #tpu.memory_space<vmem>>, %arg11: memref<1x16x32xbf16, #tpu.memory_space<vmem>>, %arg12: memref<1x16x32xf32, #tpu.memory_space<vmem>>, %arg13: memref<4x16x8xbf16, #tpu.memory_space<vmem>>, %arg14: memref<16x32xf32, #tpu.memory_space<vmem>>, %arg15: memref<4x16x1xf32, #tpu.memory_space<vmem>>, %arg16: memref<4x16x1xf32, #tpu.memory_space<vmem>>, %arg17: memref<4x16x8xf32, #tpu.memory_space<vmem>>) attributes {dimension_semantics = [#tpu.dimension_semantics<parallel>, #tpu.dimension_semantics<parallel>, #tpu.dimension_semantics<arbitrary>], iteration_bounds = array<i64: 2, 1, 1>, scalar_prefetch = 0 : i64, scratch_operands = 5 : i64, tpu.core_type = #tpu.core_type<tc>, window_params = [{transform_indices = @transform_0, window_bounds = array<i64: 1, 16, 32>}, {transform_indices = @transform_1, window_bounds = array<i64: 1, 16, 32>}, {pipeline_mode = #tpu.pipeline_mode<synchronous>, transform_indices = @transform_2, window_bounds = array<i64: 1, 32>}, {pipeline_mode = #tpu.pipeline_mode<synchronous>, transform_indices = @transform_3, window_bounds = array<i64: 4, 32, 24>}, {pipeline_mode = #tpu.pipeline_mode<synchronous>, transform_indices = @transform_4, window_bounds = array<i64: 4, 8, 32>}, {pipeline_mode = #tpu.pipeline_mode<synchronous>, transform_indices = @transform_5, window_bounds = array<i64: 1, 32>}, {pipeline_mode = #tpu.pipeline_mode<synchronous>, transform_indices = @transform_6, window_bounds = array<i64: 32, 64>}, {pipeline_mode = #tpu.pipeline_mode<synchronous>, transform_indices = @transform_7, window_bounds = array<i64: 64, 32>}, {transform_indices = @transform_8, window_bounds = array<i64: 1, 16, 32>}, {transform_indices = @transform_9, window_bounds = array<i64: 1, 16, 32>}]} {
    %c0_i32 = arith.constant 0 : i32
    %0 = arith.cmpi eq, %arg2, %c0_i32 : i32
    %1 = arith.extui %0 : i1 to i32
    %c0_i32_0 = arith.constant 0 : i32
    %2 = arith.cmpi ne, %1, %c0_i32_0 : i32
    scf.if %2 {
      %c0 = arith.constant 0 : index
      %c0_5 = arith.constant 0 : index
      %c0_6 = arith.constant 0 : index
      %12 = vector.load %arg3[%c0, %c0_5, %c0_6] : memref<1x16x32xbf16, #tpu.memory_space<vmem>>, vector<1x16x32xbf16>
      %13 = vector.shape_cast %12 : vector<1x16x32xbf16> to vector<16x32xbf16>
      %14 = arith.extf %13 : vector<16x32xbf16> to vector<16x32xf32>
      %c0_7 = arith.constant 0 : index
      %c0_8 = arith.constant 0 : index
      %15 = vector.load %arg5[%c0_7, %c0_8] : memref<1x32xf32, #tpu.memory_space<vmem>>, vector<1x32xf32>
      %16 = vector.shape_cast %15 : vector<1x32xf32> to vector<32xf32>
      %17 = arith.mulf %14, %14 : vector<16x32xf32>
      %cst = arith.constant dense<0.000000e+00> : vector<16xf32>
      %18 = vector.multi_reduction <add>, %17, %cst [1] : vector<16x32xf32> to vector<16xf32>
      %19 = vector.shape_cast %18 : vector<16xf32> to vector<16x1xf32>
      %cst_9 = arith.constant 3.200000e+01 : f32
      %20 = vector.broadcast %cst_9 : f32 to vector<16x1xf32>
      %21 = arith.divf %19, %20 : vector<16x1xf32>
      %cst_10 = arith.constant 9.99999974E-6 : f32
      %22 = vector.broadcast %cst_10 : f32 to vector<16x1xf32>
      %23 = arith.addf %21, %22 : vector<16x1xf32>
      %24 = math.rsqrt %23 : vector<16x1xf32>
      %25 = vector.broadcast %24 : vector<16x1xf32> to vector<16x32xf32>
      %26 = arith.mulf %14, %25 : vector<16x32xf32>
      %27 = vector.shape_cast %16 : vector<32xf32> to vector<1x32xf32>
      %28 = vector.broadcast %27 : vector<1x32xf32> to vector<16x32xf32>
      %29 = arith.mulf %26, %28 : vector<16x32xf32>
      %30 = arith.truncf %29 : vector<16x32xf32> to vector<16x32xbf16>
      %31 = vector.shape_cast %30 : vector<16x32xbf16> to vector<1x16x32xbf16>
      %32 = vector.shape_cast %31 : vector<1x16x32xbf16> to vector<1x16x32xbf16>
      %33 = vector.broadcast %32 : vector<1x16x32xbf16> to vector<4x16x32xbf16>
      %c0_11 = arith.constant 0 : index
      %c0_12 = arith.constant 0 : index
      %c0_13 = arith.constant 0 : index
      %34 = vector.load %arg6[%c0_11, %c0_12, %c0_13] : memref<4x32x24xbf16, #tpu.memory_space<vmem>>, vector<4x32x8xbf16>
      "tpu.trace_start"() <{level = 10 : i32, message = "hqd,hde->hqe"}> : () -> ()
      %cst_14 = arith.constant dense<0.000000e+00> : vector<4x16x8xf32>
      %35 = tpu.matmul %33, %34, %cst_14 {dimension_numbers = #tpu.dot_dimension_numbers<[2], [1], [1], [2], [0, 0, 0, 1, 1, 2], [0], [0]>} : vector<4x16x32xbf16>, vector<4x32x8xbf16>, vector<4x16x8xf32> -> vector<4x16x8xf32>
      "tpu.trace_stop"() : () -> ()
      %cst_15 = arith.constant 0.353553385 : f32
      %36 = vector.broadcast %cst_15 : f32 to vector<4x16x8xf32>
      %37 = arith.mulf %35, %36 : vector<4x16x8xf32>
      %38 = arith.truncf %37 : vector<4x16x8xf32> to vector<4x16x8xbf16>
      %c0_16 = arith.constant 0 : index
      %c0_17 = arith.constant 0 : index
      %c0_18 = arith.constant 0 : index
      %39 = vector.load %arg13[%c0_16, %c0_17, %c0_18] : memref<4x16x8xbf16, #tpu.memory_space<vmem>>, vector<4x16x8xbf16>
      tpu.vector_store %arg13[%c0_16, %c0_17, %c0_18], %38 {strides = array<i32>} : memref<4x16x8xbf16, #tpu.memory_space<vmem>>, vector<4x16x8xbf16>,
      %c0_19 = arith.constant 0 : index
      %c0_20 = arith.constant 0 : index
      %40 = vector.load %arg14[%c0_19, %c0_20] : memref<16x32xf32, #tpu.memory_space<vmem>>, vector<16x32xf32>
      tpu.vector_store %arg14[%c0_19, %c0_20], %14 {strides = array<i32>} : memref<16x32xf32, #tpu.memory_space<vmem>>, vector<16x32xf32>,
      %cst_21 = arith.constant 0xFF800000 : f32
      %41 = vector.broadcast %cst_21 : f32 to vector<4x16x1xf32>
      %c0_22 = arith.constant 0 : index
      %c0_23 = arith.constant 0 : index
      %c0_24 = arith.constant 0 : index
      %42 = vector.load %arg15[%c0_22, %c0_23, %c0_24] : memref<4x16x1xf32, #tpu.memory_space<vmem>>, vector<4x16x1xf32>
      tpu.vector_store %arg15[%c0_22, %c0_23, %c0_24], %41 {strides = array<i32>} : memref<4x16x1xf32, #tpu.memory_space<vmem>>, vector<4x16x1xf32>,
      %cst_25 = arith.constant 0.000000e+00 : f32
      %43 = vector.broadcast %cst_25 : f32 to vector<4x16x1xf32>
      %c0_26 = arith.constant 0 : index
      %c0_27 = arith.constant 0 : index
      %c0_28 = arith.constant 0 : index
      %44 = vector.load %arg16[%c0_26, %c0_27, %c0_28] : memref<4x16x1xf32, #tpu.memory_space<vmem>>, vector<4x16x1xf32>
      tpu.vector_store %arg16[%c0_26, %c0_27, %c0_28], %43 {strides = array<i32>} : memref<4x16x1xf32, #tpu.memory_space<vmem>>, vector<4x16x1xf32>,
      %cst_29 = arith.constant 0.000000e+00 : f32
      %45 = vector.broadcast %cst_29 : f32 to vector<4x16x8xf32>
      %c0_30 = arith.constant 0 : index
      %c0_31 = arith.constant 0 : index
      %c0_32 = arith.constant 0 : index
      %46 = vector.load %arg17[%c0_30, %c0_31, %c0_32] : memref<4x16x8xf32, #tpu.memory_space<vmem>>, vector<4x16x8xf32>
      tpu.vector_store %arg17[%c0_30, %c0_31, %c0_32], %45 {strides = array<i32>} : memref<4x16x8xf32, #tpu.memory_space<vmem>>, vector<4x16x8xf32>,
    } else {
    }
    %c16_i32 = arith.constant 16 : i32
    %3 = arith.muli %arg2, %c16_i32 : i32
    %c16_i32_1 = arith.constant 16 : i32
    %4 = arith.muli %arg1, %c16_i32_1 : i32
    %c15_i32 = arith.constant 15 : i32
    %5 = arith.addi %4, %c15_i32 : i32
    %6 = arith.cmpi sle, %3, %5 : i32
    %7 = arith.extui %6 : i1 to i32
    %c0_i32_2 = arith.constant 0 : i32
    %8 = arith.cmpi ne, %7, %c0_i32_2 : i32
    scf.if %8 {
      %c0 = arith.constant 0 : index
      %c0_5 = arith.constant 0 : index
      %c0_6 = arith.constant 0 : index
      %12 = vector.load %arg4[%c0, %c0_5, %c0_6] : memref<1x16x32xbf16, #tpu.memory_space<vmem>>, vector<1x16x32xbf16>
      %13 = vector.shape_cast %12 : vector<1x16x32xbf16> to vector<16x32xbf16>
      %14 = arith.extf %13 : vector<16x32xbf16> to vector<16x32xf32>
      %c0_7 = arith.constant 0 : index
      %c0_8 = arith.constant 0 : index
      %15 = vector.load %arg5[%c0_7, %c0_8] : memref<1x32xf32, #tpu.memory_space<vmem>>, vector<1x32xf32>
      %16 = vector.shape_cast %15 : vector<1x32xf32> to vector<32xf32>
      %17 = arith.mulf %14, %14 : vector<16x32xf32>
      %cst = arith.constant dense<0.000000e+00> : vector<16xf32>
      %18 = vector.multi_reduction <add>, %17, %cst [1] : vector<16x32xf32> to vector<16xf32>
      %19 = vector.shape_cast %18 : vector<16xf32> to vector<16x1xf32>
      %cst_9 = arith.constant 3.200000e+01 : f32
      %20 = vector.broadcast %cst_9 : f32 to vector<16x1xf32>
      %21 = arith.divf %19, %20 : vector<16x1xf32>
      %cst_10 = arith.constant 9.99999974E-6 : f32
      %22 = vector.broadcast %cst_10 : f32 to vector<16x1xf32>
      %23 = arith.addf %21, %22 : vector<16x1xf32>
      %24 = math.rsqrt %23 : vector<16x1xf32>
      %25 = vector.broadcast %24 : vector<16x1xf32> to vector<16x32xf32>
      %26 = arith.mulf %14, %25 : vector<16x32xf32>
      %27 = vector.shape_cast %16 : vector<32xf32> to vector<1x32xf32>
      %28 = vector.broadcast %27 : vector<1x32xf32> to vector<16x32xf32>
      %29 = arith.mulf %26, %28 : vector<16x32xf32>
      %30 = arith.truncf %29 : vector<16x32xf32> to vector<16x32xbf16>
      %31 = vector.shape_cast %30 : vector<16x32xbf16> to vector<1x16x32xbf16>
      %32 = vector.shape_cast %31 : vector<1x16x32xbf16> to vector<1x16x32xbf16>
      %33 = vector.broadcast %32 : vector<1x16x32xbf16> to vector<4x16x32xbf16>
      %c0_11 = arith.constant 0 : index
      %c0_12 = arith.constant 0 : index
      %c8 = arith.constant 8 : index
      %34 = vector.load %arg6[%c0_11, %c0_12, %c8] : memref<4x32x24xbf16, #tpu.memory_space<vmem>>, vector<4x32x8xbf16>
      "tpu.trace_start"() <{level = 10 : i32, message = "hkd,hde->hke"}> : () -> ()
      %cst_13 = arith.constant dense<0.000000e+00> : vector<4x16x8xf32>
      %35 = tpu.matmul %33, %34, %cst_13 {dimension_numbers = #tpu.dot_dimension_numbers<[2], [1], [1], [2], [0, 0, 0, 1, 1, 2], [0], [0]>} : vector<4x16x32xbf16>, vector<4x32x8xbf16>, vector<4x16x8xf32> -> vector<4x16x8xf32>
      "tpu.trace_stop"() : () -> ()
      %36 = arith.truncf %35 : vector<4x16x8xf32> to vector<4x16x8xbf16>
      %c0_14 = arith.constant 0 : index
      %c0_15 = arith.constant 0 : index
      %c16 = arith.constant 16 : index
      %37 = vector.load %arg6[%c0_14, %c0_15, %c16] : memref<4x32x24xbf16, #tpu.memory_space<vmem>>, vector<4x32x8xbf16>
      "tpu.trace_start"() <{level = 10 : i32, message = "hkd,hde->hke"}> : () -> ()
      %cst_16 = arith.constant dense<0.000000e+00> : vector<4x16x8xf32>
      %38 = tpu.matmul %33, %37, %cst_16 {dimension_numbers = #tpu.dot_dimension_numbers<[2], [1], [1], [2], [0, 0, 0, 1, 1, 2], [0], [0]>} : vector<4x16x32xbf16>, vector<4x32x8xbf16>, vector<4x16x8xf32> -> vector<4x16x8xf32>
      "tpu.trace_stop"() : () -> ()
      %39 = arith.truncf %38 : vector<4x16x8xf32> to vector<4x16x8xbf16>
      %c0_17 = arith.constant 0 : index
      %c0_18 = arith.constant 0 : index
      %c0_19 = arith.constant 0 : index
      %40 = vector.load %arg13[%c0_17, %c0_18, %c0_19] : memref<4x16x8xbf16, #tpu.memory_space<vmem>>, vector<4x16x8xbf16>
      "tpu.trace_start"() <{level = 10 : i32, message = "hqd,hkd->hqk"}> : () -> ()
      %cst_20 = arith.constant dense<0.000000e+00> : vector<4x16x16xf32>
      %41 = tpu.matmul %40, %36, %cst_20 {dimension_numbers = #tpu.dot_dimension_numbers<[2], [2], [1], [1], [0, 0, 0, 1, 1, 1], [0], [0]>} : vector<4x16x8xbf16>, vector<4x16x8xbf16>, vector<4x16x16xf32> -> vector<4x16x16xf32>
      "tpu.trace_stop"() : () -> ()
      %c16_i32_21 = arith.constant 16 : i32
      %42 = arith.muli %arg1, %c16_i32_21 : i32
      %43 = tpu.iota {dimensions = array<i32: 1>} : vector<4x16x16xi32>
      %44 = vector.broadcast %42 : i32 to vector<4x16x16xi32>
      %45 = arith.addi %44, %43 : vector<4x16x16xi32>
      %c16_i32_22 = arith.constant 16 : i32
      %46 = arith.muli %arg2, %c16_i32_22 : i32
      %47 = tpu.iota {dimensions = array<i32: 2>} : vector<4x16x16xi32>
      %48 = vector.broadcast %46 : i32 to vector<4x16x16xi32>
      %49 = arith.addi %48, %47 : vector<4x16x16xi32>
      %50 = arith.cmpi sge, %45, %49 : vector<4x16x16xi32>
      %cst_23 = arith.constant -1.000000e+30 : f32
      %51 = vector.broadcast %cst_23 : f32 to vector<4x16x16xf32>
      %52 = arith.select %50, %41, %51 : vector<4x16x16xi1>, vector<4x16x16xf32>
      %c0_24 = arith.constant 0 : index
      %c0_25 = arith.constant 0 : index
      %c0_26 = arith.constant 0 : index
      %53 = vector.load %arg15[%c0_24, %c0_25, %c0_26] : memref<4x16x1xf32, #tpu.memory_space<vmem>>, vector<4x16x1xf32>
      %cst_27 = arith.constant dense<0xFF800000> : vector<4x16xf32>
      %54 = vector.multi_reduction <maximumf>, %52, %cst_27 [2] : vector<4x16x16xf32> to vector<4x16xf32>
      %55 = vector.shape_cast %54 : vector<4x16xf32> to vector<4x16x1xf32>
      %56 = arith.maximumf %53, %55 : vector<4x16x1xf32>
      %57 = arith.subf %53, %56 : vector<4x16x1xf32>
      %58 = math.exp %57 : vector<4x16x1xf32>
      %59 = vector.broadcast %56 : vector<4x16x1xf32> to vector<4x16x16xf32>
      %60 = arith.subf %52, %59 : vector<4x16x16xf32>
      %61 = math.exp %60 : vector<4x16x16xf32>
      %c0_28 = arith.constant 0 : index
      %c0_29 = arith.constant 0 : index
      %c0_30 = arith.constant 0 : index
      %62 = vector.load %arg16[%c0_28, %c0_29, %c0_30] : memref<4x16x1xf32, #tpu.memory_space<vmem>>, vector<4x16x1xf32>
      %63 = arith.mulf %58, %62 : vector<4x16x1xf32>
      %cst_31 = arith.constant dense<0.000000e+00> : vector<4x16xf32>
      %64 = vector.multi_reduction <add>, %61, %cst_31 [2] : vector<4x16x16xf32> to vector<4x16xf32>
      %65 = vector.shape_cast %64 : vector<4x16xf32> to vector<4x16x1xf32>
      %66 = arith.addf %63, %65 : vector<4x16x1xf32>
      %c0_32 = arith.constant 0 : index
      %c0_33 = arith.constant 0 : index
      %c0_34 = arith.constant 0 : index
      %67 = vector.load %arg16[%c0_32, %c0_33, %c0_34] : memref<4x16x1xf32, #tpu.memory_space<vmem>>, vector<4x16x1xf32>
      tpu.vector_store %arg16[%c0_32, %c0_33, %c0_34], %66 {strides = array<i32>} : memref<4x16x1xf32, #tpu.memory_space<vmem>>, vector<4x16x1xf32>,
      %c0_35 = arith.constant 0 : index
      %c0_36 = arith.constant 0 : index
      %c0_37 = arith.constant 0 : index
      %68 = vector.load %arg17[%c0_35, %c0_36, %c0_37] : memref<4x16x8xf32, #tpu.memory_space<vmem>>, vector<4x16x8xf32>
      %69 = vector.broadcast %58 : vector<4x16x1xf32> to vector<4x16x8xf32>
      %70 = arith.mulf %69, %68 : vector<4x16x8xf32>
      %71 = arith.truncf %61 : vector<4x16x16xf32> to vector<4x16x16xbf16>
      "tpu.trace_start"() <{level = 10 : i32, message = "hqk,hkd->hqd"}> : () -> ()
      %cst_38 = arith.constant dense<0.000000e+00> : vector<4x16x8xf32>
      %72 = tpu.matmul %71, %39, %cst_38 {dimension_numbers = #tpu.dot_dimension_numbers<[2], [1], [1], [2], [0, 0, 0, 1, 1, 2], [0], [0]>} : vector<4x16x16xbf16>, vector<4x16x8xbf16>, vector<4x16x8xf32> -> vector<4x16x8xf32>
      "tpu.trace_stop"() : () -> ()
      %73 = arith.addf %70, %72 : vector<4x16x8xf32>
      %c0_39 = arith.constant 0 : index
      %c0_40 = arith.constant 0 : index
      %c0_41 = arith.constant 0 : index
      %74 = vector.load %arg17[%c0_39, %c0_40, %c0_41] : memref<4x16x8xf32, #tpu.memory_space<vmem>>, vector<4x16x8xf32>
      tpu.vector_store %arg17[%c0_39, %c0_40, %c0_41], %73 {strides = array<i32>} : memref<4x16x8xf32, #tpu.memory_space<vmem>>, vector<4x16x8xf32>,
      %c0_42 = arith.constant 0 : index
      %c0_43 = arith.constant 0 : index
      %c0_44 = arith.constant 0 : index
      %75 = vector.load %arg15[%c0_42, %c0_43, %c0_44] : memref<4x16x1xf32, #tpu.memory_space<vmem>>, vector<4x16x1xf32>
      tpu.vector_store %arg15[%c0_42, %c0_43, %c0_44], %56 {strides = array<i32>} : memref<4x16x1xf32, #tpu.memory_space<vmem>>, vector<4x16x1xf32>,
    } else {
    }
    %c0_i32_3 = arith.constant 0 : i32
    %9 = arith.cmpi eq, %arg2, %c0_i32_3 : i32
    %10 = arith.extui %9 : i1 to i32
    %c0_i32_4 = arith.constant 0 : i32
    %11 = arith.cmpi ne, %10, %c0_i32_4 : i32
    scf.if %11 {
      %c0 = arith.constant 0 : index
      %c0_5 = arith.constant 0 : index
      %c0_6 = arith.constant 0 : index
      %12 = vector.load %arg16[%c0, %c0_5, %c0_6] : memref<4x16x1xf32, #tpu.memory_space<vmem>>, vector<4x16x1xf32>
      %13 = tpu.reciprocal %12 {approx = true} : vector<4x16x1xf32> -> vector<4x16x1xf32>
      %c0_7 = arith.constant 0 : index
      %c0_8 = arith.constant 0 : index
      %c0_9 = arith.constant 0 : index
      %14 = vector.load %arg17[%c0_7, %c0_8, %c0_9] : memref<4x16x8xf32, #tpu.memory_space<vmem>>, vector<4x16x8xf32>
      %15 = vector.broadcast %13 : vector<4x16x1xf32> to vector<4x16x8xf32>
      %16 = arith.mulf %14, %15 : vector<4x16x8xf32>
      %17 = arith.truncf %16 : vector<4x16x8xf32> to vector<4x16x8xbf16>
      %c0_10 = arith.constant 0 : index
      %c0_11 = arith.constant 0 : index
      %c0_12 = arith.constant 0 : index
      %18 = vector.load %arg7[%c0_10, %c0_11, %c0_12] : memref<4x8x32xbf16, #tpu.memory_space<vmem>>, vector<4x8x32xbf16>
      "tpu.trace_start"() <{level = 10 : i32, message = "hqd,hde->hqe"}> : () -> ()
      %cst = arith.constant dense<0.000000e+00> : vector<4x16x32xf32>
      %19 = tpu.matmul %17, %18, %cst {dimension_numbers = #tpu.dot_dimension_numbers<[2], [1], [1], [2], [0, 0, 0, 1, 1, 2], [0], [0]>} : vector<4x16x8xbf16>, vector<4x8x32xbf16>, vector<4x16x32xf32> -> vector<4x16x32xf32>
      "tpu.trace_stop"() : () -> ()
      %cst_13 = arith.constant dense<0.000000e+00> : vector<16x32xf32>
      %20 = vector.multi_reduction <add>, %19, %cst_13 [0] : vector<4x16x32xf32> to vector<16x32xf32>
      %c0_14 = arith.constant 0 : index
      %c0_15 = arith.constant 0 : index
      %21 = vector.load %arg14[%c0_14, %c0_15] : memref<16x32xf32, #tpu.memory_space<vmem>>, vector<16x32xf32>
      %22 = arith.addf %20, %21 : vector<16x32xf32>
      %c0_16 = arith.constant 0 : index
      %c0_17 = arith.constant 0 : index
      %23 = vector.load %arg8[%c0_16, %c0_17] : memref<1x32xf32, #tpu.memory_space<vmem>>, vector<1x32xf32>
      %24 = vector.shape_cast %23 : vector<1x32xf32> to vector<32xf32>
      %25 = arith.mulf %22, %22 : vector<16x32xf32>
      %cst_18 = arith.constant dense<0.000000e+00> : vector<16xf32>
      %26 = vector.multi_reduction <add>, %25, %cst_18 [1] : vector<16x32xf32> to vector<16xf32>
      %27 = vector.shape_cast %26 : vector<16xf32> to vector<16x1xf32>
      %cst_19 = arith.constant 3.200000e+01 : f32
      %28 = vector.broadcast %cst_19 : f32 to vector<16x1xf32>
      %29 = arith.divf %27, %28 : vector<16x1xf32>
      %cst_20 = arith.constant 9.99999974E-6 : f32
      %30 = vector.broadcast %cst_20 : f32 to vector<16x1xf32>
      %31 = arith.addf %29, %30 : vector<16x1xf32>
      %32 = math.rsqrt %31 : vector<16x1xf32>
      %33 = vector.broadcast %32 : vector<16x1xf32> to vector<16x32xf32>
      %34 = arith.mulf %22, %33 : vector<16x32xf32>
      %35 = vector.shape_cast %24 : vector<32xf32> to vector<1x32xf32>
      %36 = vector.broadcast %35 : vector<1x32xf32> to vector<16x32xf32>
      %37 = arith.mulf %34, %36 : vector<16x32xf32>
      %38 = arith.truncf %37 : vector<16x32xf32> to vector<16x32xbf16>
      %c0_21 = arith.constant 0 : index
      %c0_22 = arith.constant 0 : index
      %39 = vector.load %arg9[%c0_21, %c0_22] : memref<32x64xbf16, #tpu.memory_space<vmem>>, vector<32x64xbf16>
      %cst_23 = arith.constant dense<0.000000e+00> : vector<16x64xf32>
      %40 = tpu.matmul %38, %39, %cst_23 {dimension_numbers = #tpu.dot_dimension_numbers<[1], [0], [0], [1], [0, 0, 1, 1], [], []>} : vector<16x32xbf16>, vector<32x64xbf16>, vector<16x64xf32> -> vector<16x64xf32>
      %41 = arith.negf %40 : vector<16x64xf32>
      %42 = math.exp %41 : vector<16x64xf32>
      %cst_24 = arith.constant 1.000000e+00 : f32
      %43 = vector.broadcast %cst_24 : f32 to vector<16x64xf32>
      %44 = arith.addf %43, %42 : vector<16x64xf32>
      %45 = arith.divf %43, %44 : vector<16x64xf32>
      %46 = arith.mulf %40, %45 : vector<16x64xf32>
      %47 = arith.truncf %46 : vector<16x64xf32> to vector<16x64xbf16>
      %c0_25 = arith.constant 0 : index
      %c0_26 = arith.constant 0 : index
      %48 = vector.load %arg10[%c0_25, %c0_26] : memref<64x32xbf16, #tpu.memory_space<vmem>>, vector<64x32xbf16>
      %cst_27 = arith.constant dense<0.000000e+00> : vector<16x32xf32>
      %49 = tpu.matmul %47, %48, %cst_27 {dimension_numbers = #tpu.dot_dimension_numbers<[1], [0], [0], [1], [0, 0, 1, 1], [], []>} : vector<16x64xbf16>, vector<64x32xbf16>, vector<16x32xf32> -> vector<16x32xf32>
      %50 = arith.truncf %49 : vector<16x32xf32> to vector<16x32xbf16>
      %c0_28 = arith.constant 0 : index
      %c0_29 = arith.constant 0 : index
      %c0_30 = arith.constant 0 : index
      %51 = vector.load %arg11[%c0_28, %c0_29, %c0_30] : memref<1x16x32xbf16, #tpu.memory_space<vmem>>, vector<1x16x32xbf16>
      %52 = vector.shape_cast %51 : vector<1x16x32xbf16> to vector<16x32xbf16>
      %53 = vector.shape_cast %50 : vector<16x32xbf16> to vector<1x16x32xbf16>
      tpu.vector_store %arg11[%c0_28, %c0_29, %c0_30], %53 {strides = array<i32>} : memref<1x16x32xbf16, #tpu.memory_space<vmem>>, vector<1x16x32xbf16>,
      %c0_31 = arith.constant 0 : index
      %c0_32 = arith.constant 0 : index
      %c0_33 = arith.constant 0 : index
      %54 = vector.load %arg12[%c0_31, %c0_32, %c0_33] : memref<1x16x32xf32, #tpu.memory_space<vmem>>, vector<1x16x32xf32>
      %55 = vector.shape_cast %54 : vector<1x16x32xf32> to vector<16x32xf32>
      %56 = vector.shape_cast %22 : vector<16x32xf32> to vector<1x16x32xf32>
      tpu.vector_store %arg12[%c0_31, %c0_32, %c0_33], %56 {strides = array<i32>} : memref<1x16x32xf32, #tpu.memory_space<vmem>>, vector<1x16x32xf32>,
    } else {
    }
    return
  }
  func.func @transform_0(%arg0: i32, %arg1: i32, %arg2: i32) -> (i32, i32, i32) {
    %c0_i32 = arith.constant 0 : i32
    %c0_i32_0 = arith.constant 0 : i32
    return %arg0, %arg1, %c0_i32 : i32, i32, i32
  }
  func.func @transform_1(%arg0: i32, %arg1: i32, %arg2: i32) -> (i32, i32, i32) {
    %c0_i32 = arith.constant 0 : i32
    %c0_i32_0 = arith.constant 0 : i32
    return %arg0, %arg2, %c0_i32 : i32, i32, i32
  }
  func.func @transform_2(%arg0: i32, %arg1: i32, %arg2: i32) -> (i32, i32) {
    %c0_i32 = arith.constant 0 : i32
    %c0_i32_0 = arith.constant 0 : i32
    %c0_i32_1 = arith.constant 0 : i32
    return %c0_i32, %c0_i32_0 : i32, i32
  }
  func.func @transform_3(%arg0: i32, %arg1: i32, %arg2: i32) -> (i32, i32, i32) {
    %c0_i32 = arith.constant 0 : i32
    %c0_i32_0 = arith.constant 0 : i32
    %c0_i32_1 = arith.constant 0 : i32
    %c0_i32_2 = arith.constant 0 : i32
    return %c0_i32, %c0_i32_0, %c0_i32_1 : i32, i32, i32
  }
  func.func @transform_4(%arg0: i32, %arg1: i32, %arg2: i32) -> (i32, i32, i32) {
    %c0_i32 = arith.constant 0 : i32
    %c0_i32_0 = arith.constant 0 : i32
    %c0_i32_1 = arith.constant 0 : i32
    %c0_i32_2 = arith.constant 0 : i32
    return %c0_i32, %c0_i32_0, %c0_i32_1 : i32, i32, i32
  }
  func.func @transform_5(%arg0: i32, %arg1: i32, %arg2: i32) -> (i32, i32) {
    %c0_i32 = arith.constant 0 : i32
    %c0_i32_0 = arith.constant 0 : i32
    %c0_i32_1 = arith.constant 0 : i32
    return %c0_i32, %c0_i32_0 : i32, i32
  }
  func.func @transform_6(%arg0: i32, %arg1: i32, %arg2: i32) -> (i32, i32) {
    %c0_i32 = arith.constant 0 : i32
    %c0_i32_0 = arith.constant 0 : i32
    %c0_i32_1 = arith.constant 0 : i32
    return %c0_i32, %c0_i32_0 : i32, i32
  }
  func.func @transform_7(%arg0: i32, %arg1: i32, %arg2: i32) -> (i32, i32) {
    %c0_i32 = arith.constant 0 : i32
    %c0_i32_0 = arith.constant 0 : i32
    %c0_i32_1 = arith.constant 0 : i32
    return %c0_i32, %c0_i32_0 : i32, i32
  }
  func.func @transform_8(%arg0: i32, %arg1: i32, %arg2: i32) -> (i32, i32, i32) {
    %c0_i32 = arith.constant 0 : i32
    %c0_i32_0 = arith.constant 0 : i32
    return %arg0, %arg1, %c0_i32 : i32, i32, i32
  }
  func.func @transform_9(%arg0: i32, %arg1: i32, %arg2: i32) -> (i32, i32, i32) {
    %c0_i32 = arith.constant 0 : i32
    %c0_i32_0 = arith.constant 0 : i32
    return %arg0, %arg1, %c0_i32 : i32, i32, i32
  }
}

</mosaic_0001>

<llo_original>
// kernel: tpu_custom_call.1
$region0: #{tpu_custom_call.1}
  #allocation0 [shape = 'u32[]', space=smem, size = 0x4, offset = 0x4, fixed_abs, tag = 'smem constant byte address 0x4 - core index']
  #allocation1 [shape = 'u32[144,128]{1,0:T(1,128)}', space=vmem, size = 0x12000, scoped, tag = 'internal scratch']
  %s0 = inlined_call_operand.hbm [shape: f32[16,256], index: 0, kind: input, shape index: {}]
  %s1 = inlined_call_operand.hbm [shape: f32[8,128], index: 1, kind: input, shape index: {}]
  %s2 = inlined_call_operand.hbm [shape: f32[16,256], index: 2, kind: output, shape index: {}]
  %s3 = sld [smem:[#allocation0]]
  $region49: #{tpu_custom_call.1} parent=0
    _
  %s5 = ssub.s32 1, %s3
  %s6 = scalar_select 0, %s5, %s3
  $region1: #{tpu_custom_call.1} parent=0
    #allocation2 [shape = 'u8[8192]{0}', space=vmem, size = 0x2000, scoped, tag = 'input window, operand 0']
    #allocation3 [shape = 's32[2]{0}', space=sflag, size = 0x8, scoped, tag = 'scoped memory for tpu_custom_call.1']
    #allocation4 [shape = 's32[2]{0}', space=sflag, size = 0x8, scoped, tag = 'scoped memory for tpu_custom_call.1']
    #allocation5 [shape = 'u8[4096]{0}', space=vmem, size = 0x1000, scoped, tag = 'input window, operand 1, single buffered']
    #allocation6 [shape = 's32[1]{0}', space=sflag, size = 0x4, scoped, tag = 'scoped memory for tpu_custom_call.1']
    #allocation7 [shape = 'u8[8192]{0}', space=vmem, size = 0x2000, scoped, tag = 'output window, operand 0']
    %7 = vsyncpa [#allocation3], 0
    %s8 = scalar_lea.sflag [#allocation3], 1
    %9 = vsyncpa %s8, 0
    %10 = vsyncpa [#allocation6], 0
    %11 = vsyncpa [#allocation4], 0
    %s12 = scalar_lea.sflag [#allocation4], 1
    %13 = vsyncpa %s12, 0
    loop: start=0, step=1, limit=6
    $region2: #{tpu_custom_call.1} parent=1 // loop_pre_header
      _
    $region3: #{tpu_custom_call.1} parent=1 // loop_header
      %s15 = sphi 0, %s19
      %p16 = scmp.ge.s32.totalorder %s15, 6
      %s22 = sphi 0, %s34
      %s23 = sphi 0, %s30
      %s24 = sphi 0, %s22
      %s25 = sphi 0, %s23
      %s26 = sphi 0, %s24
      %s27 = sphi 0, %s25
      %s39 = sphi 0, %s41
      %s42 = sphi 0, %s39
      %s43 = sphi 0, %s42
      %s59 = sphi 0, %s43
      %s63 = sphi 0, %s63
      %s65 = sphi 0, %s63
      %s66 = sphi 0, %s65
      %s80 = sphi 0, %s66
      %s88 = sphi 0, %s90
      %s91 = sphi 0, %s88
      %s92 = sphi 0, %s91
      %s108 = sphi 0, %s92
    $region4: #{tpu_custom_call.1} parent=1 // loop_header_branch
      %18 = sbr.rel (%p16) target = $region8
    $region5: #{tpu_custom_call.1} parent=1 // loop_body
      %s20 = ssub.s32 %s15, 1
      %s21 = ssub.s32 %s15, 2
      %s28 = sadd.s32 1, %s23
      %p29 = scmp.ge.s32.totalorder %s28, 2
      %s30 = scalar_select %p29, 0, %s28
      %s31 = sadd.s32 1, %s22
      %s32 = scalar_select %p29, %s31, %s22
      %p33 = scmp.ge.s32.totalorder %s32, 2
      %s34 = scalar_select %p33, 0, %s32
      %s35 = ssub.s32 %s22, %s34
      %s36 = ssub.s32 %s23, %s30
      %s37 = sor.u32 %s35, %s36
      %p38 = scmp.eq.s32.totalorder %s37, 0
      %s40 = sadd.s32 %s39, 1
      %s41 = scalar_select %p38, %s39, %s40
      %p44 = pneg %p38
      %p45 = scmp.eq.s32.totalorder %s15, 3
      %p46 = por %p44, %p45
      %p47 = scmp.ne.s32.totalorder %s39, %s42
      %p48 = scmp.eq.s32.totalorder %s15, 0
      %p49 = por %p47, %p48
      %p50 = scmp.ne.s32.totalorder %s39, %s42
      %p51 = scmp.eq.s32.totalorder %s20, 3
      %p52 = por %p50, %p51
      %p53 = scmp.ne.s32.totalorder %s42, %s43
      %p54 = scmp.eq.s32.totalorder %s20, 0
      %p55 = por %p53, %p54
      %p56 = scmp.ne.s32.totalorder %s42, %s43
      %p57 = scmp.eq.s32.totalorder %s21, 3
      %p58 = por %p56, %p57
      %p60 = scmp.ne.s32.totalorder %s43, %s59
      %p61 = scmp.eq.s32.totalorder %s21, 0
      %p62 = por %p60, %p61
      %s64 = sadd.s32 %s63, 1
      %p67 = scmp.eq.s32.totalorder %s15, 3
      %p68 = scmp.ne.s32.totalorder %s63, %s65
      %p69 = scmp.eq.s32.totalorder %s15, 0
      %p70 = por %p68, %p69
      %p71 = scmp.ne.s32.totalorder %s63, %s65
      %p72 = scmp.eq.s32.totalorder %s20, 3
      %p73 = por %p71, %p72
      %p74 = scmp.ne.s32.totalorder %s65, %s66
      %p75 = scmp.eq.s32.totalorder %s20, 0
      %p76 = por %p74, %p75
      %p77 = scmp.ne.s32.totalorder %s65, %s66
      %p78 = scmp.eq.s32.totalorder %s21, 3
      %p79 = por %p77, %p78
      %p81 = scmp.ne.s32.totalorder %s66, %s80
      %p82 = scmp.eq.s32.totalorder %s21, 0
      %p83 = por %p81, %p82
      %s84 = ssub.s32 %s22, %s34
      %s85 = ssub.s32 %s23, %s30
      %s86 = sor.u32 %s84, %s85
      %p87 = scmp.eq.s32.totalorder %s86, 0
      %s89 = sadd.s32 %s88, 1
      %s90 = scalar_select %p87, %s88, %s89
      %p93 = pneg %p87
      %p94 = scmp.eq.s32.totalorder %s15, 3
      %p95 = por %p93, %p94
      %p96 = scmp.ne.s32.totalorder %s88, %s91
      %p97 = scmp.eq.s32.totalorder %s15, 0
      %p98 = por %p96, %p97
      %p99 = scmp.ne.s32.totalorder %s88, %s91
      %p100 = scmp.eq.s32.totalorder %s20, 3
      %p101 = por %p99, %p100
      %p102 = scmp.ne.s32.totalorder %s91, %s92
      %p103 = scmp.eq.s32.totalorder %s20, 0
      %p104 = por %p102, %p103
      %p105 = scmp.ne.s32.totalorder %s91, %s92
      %p106 = scmp.eq.s32.totalorder %s21, 3
      %p107 = por %p105, %p106
      %p109 = scmp.ne.s32.totalorder %s92, %s108
      %p110 = scmp.eq.s32.totalorder %s21, 0
      %p111 = por %p109, %p110
      %p112 = scmp.le.s32.totalorder 1, %s15
      %p113 = scmp.lt.s32.totalorder %s15, 5
      %p114 = pnand %p112, %p113
      %p115 = pneg %p114
      // Predicated region
      $region9: #{tpu_custom_call.1} parent=5 // pred_check
        _
      $region10: #{tpu_custom_call.1} parent=5 // pred_check_branch
        %117 = sbr.rel (%p114) target = $region12
      $region11: #{tpu_custom_call.1} parent=5 // pred_region
        %s118 = ssub.s32 %s15, 1
        // Predicated region
        $region13: #{tpu_custom_call.1} parent=11 // pred_check
          %p119 = pneg %p76
        $region14: #{tpu_custom_call.1} parent=11 // pred_check_branch
          %121 = sbr.rel (%p119) target = $region16
        $region15: #{tpu_custom_call.1} parent=11 // pred_region
          %s123 = ssub.s32 128, 128
          %124 = vsyncadd [#allocation6], %s123
          %s126 = sshll.u32 [#allocation5], 4
          %s127 = int_to_ptr.vmem [resolvable:$true] %s126
          %129 = dma.hbm_to_vmem [thread:$0]  %s1, 128, %s127, [#allocation6]
        $region16: #{tpu_custom_call.1} parent=11 // pred_fallthru
          _
      $region12: #{tpu_custom_call.1} parent=5 // pred_fallthru
        _
      %p130 = scmp.lt.s32.totalorder %s15, 4
      // Predicated region
      $region17: #{tpu_custom_call.1} parent=5 // pred_check
        %p131 = pneg %p130
      $region18: #{tpu_custom_call.1} parent=5 // pred_check_branch
        %133 = sbr.rel (%p131) target = $region20
      $region19: #{tpu_custom_call.1} parent=5 // pred_region
        // Predicated region
        $region21: #{tpu_custom_call.1} parent=19 // pred_check
          %p134 = pneg %p49
        $region22: #{tpu_custom_call.1} parent=19 // pred_check_branch
          %136 = sbr.rel (%p134) target = $region24
        $region23: #{tpu_custom_call.1} parent=19 // pred_region
          %s137 = sand.u32 %s39, 1
          %s138 = scalar_lea.sflag [#allocation3], %s137
          %s139 = sand.u32 %s39, 1
          %s140 = smul.addr %s139, 8
          %s141 = scalar_lea.vmem [#allocation2], %s140
          %s143 = ssub.s32 128, 128
          %144 = vsyncadd %s138, %s143
          %s145 = smul.addr %s22, 2
          %s146 = sadd.s32 %s23, %s145
          %s147 = smul.addr %s146, 128
          %s148 = scalar_lea.hbm %s0, %s147
          %s150 = sshll.u32 %s141, 4
          %s151 = int_to_ptr.vmem [resolvable:$true] %s150
          %153 = dma.hbm_to_vmem [thread:$0]  %s148, 128, %s151, %s138
        $region24: #{tpu_custom_call.1} parent=19 // pred_fallthru
          _
      $region20: #{tpu_custom_call.1} parent=5 // pred_fallthru
        _
      %p154 = scmp.le.s32.totalorder 1, %s15
      %p155 = scmp.lt.s32.totalorder %s15, 5
      %p156 = pnand %p154, %p155
      %p157 = pneg %p156
      // Predicated region
      $region25: #{tpu_custom_call.1} parent=5 // pred_check
        _
      $region26: #{tpu_custom_call.1} parent=5 // pred_check_branch
        %159 = sbr.rel (%p156) target = $region28
      $region27: #{tpu_custom_call.1} parent=5 // pred_region
        %s160 = ssub.s32 %s15, 1
        %s161 = sand.u32 %s42, 1
        %s162 = scalar_lea.sflag [#allocation3], %s161
        %s163 = sand.u32 %s42, 1
        %s164 = smul.addr %s163, 8
        %s165 = scalar_lea.vmem [#allocation2], %s164
        // Predicated region
        $region29: #{tpu_custom_call.1} parent=27 // pred_check
          %p166 = pneg %p55
        $region30: #{tpu_custom_call.1} parent=27 // pred_check_branch
          %168 = sbr.rel (%p166) target = $region32
        $region31: #{tpu_custom_call.1} parent=27 // pred_region
          %169 = dma.done %s162, 128
        $region32: #{tpu_custom_call.1} parent=27 // pred_fallthru
          _
        // Predicated region
        $region33: #{tpu_custom_call.1} parent=27 // pred_check
          %p170 = pneg %p76
        $region34: #{tpu_custom_call.1} parent=27 // pred_check_branch
          %172 = sbr.rel (%p170) target = $region36
        $region35: #{tpu_custom_call.1} parent=27 // pred_region
          %173 = dma.done [#allocation6], 128
        $region36: #{tpu_custom_call.1} parent=27 // pred_fallthru
          _
        %s174 = sand.u32 %s42, 1
        %s175 = scalar_lea.sflag [#allocation3], %s174
        %s176 = sand.u32 %s42, 1
        %s177 = smul.addr %s176, 8
        %s178 = scalar_lea.vmem [#allocation2], %s177
        %p179 = pneg %p55
        %p180 = pneg %p52
        %p181 = pneg %p76
        %p182 = pneg %p73
        %p183 = pneg %p104
        %p184 = pneg %p101
        %s185 = sand.u32 %s91, 1
        %s186 = scalar_lea.sflag [#allocation4], %s185
        %s187 = sand.u32 %s91, 1
        %s188 = smul.addr %s187, 8
        %s189 = scalar_lea.vmem [#allocation7], %s188
        %v190 = vld [vmem:[%s165] sm:$0xff]
        %v191 = vld [vmem:[#allocation5] sm:$0xff]
        %v192 = vadd.f32 %v190, %v191
        %193 = vst [vmem:[%s189] sm:$0xff] %v192
        %s194 = sand.u32 %s91, 1
        %s195 = scalar_lea.sflag [#allocation4], %s194
        %s196 = sand.u32 %s91, 1
        %s197 = smul.addr %s196, 8
        %s198 = scalar_lea.vmem [#allocation7], %s197
        // Predicated region
        $region37: #{tpu_custom_call.1} parent=27 // pred_check
          %p199 = pneg %p101
        $region38: #{tpu_custom_call.1} parent=27 // pred_check_branch
          %201 = sbr.rel (%p199) target = $region40
        $region39: #{tpu_custom_call.1} parent=27 // pred_region
          %s203 = ssub.s32 128, 128
          %204 = vsyncadd %s195, %s203
          %s205 = smul.addr %s24, 2
          %s206 = sadd.s32 %s25, %s205
          %s207 = smul.addr %s206, 128
          %s208 = scalar_lea.hbm %s2, %s207
          %s210 = sshll.u32 %s198, 4
          %s211 = int_to_ptr.vmem [resolvable:$true] %s210
          %213 = dma.vmem_to_hbm [thread:$0]  %s211, 128, %s208, %s195
        $region40: #{tpu_custom_call.1} parent=27 // pred_fallthru
          _
      $region28: #{tpu_custom_call.1} parent=5 // pred_fallthru
        _
      %p214 = scmp.le.s32.totalorder 2, %s15
      // Predicated region
      $region41: #{tpu_custom_call.1} parent=5 // pred_check
        %p215 = pneg %p214
      $region42: #{tpu_custom_call.1} parent=5 // pred_check_branch
        %217 = sbr.rel (%p215) target = $region44
      $region43: #{tpu_custom_call.1} parent=5 // pred_region
        %s218 = ssub.s32 %s15, 2
        // Predicated region
        $region45: #{tpu_custom_call.1} parent=43 // pred_check
          %p219 = pneg %p107
        $region46: #{tpu_custom_call.1} parent=43 // pred_check_branch
          %221 = sbr.rel (%p219) target = $region48
        $region47: #{tpu_custom_call.1} parent=43 // pred_region
          %s222 = sand.u32 %s92, 1
          %s223 = scalar_lea.sflag [#allocation4], %s222
          %s224 = sand.u32 %s92, 1
          %s225 = smul.addr %s224, 8
          %s226 = scalar_lea.vmem [#allocation7], %s225
          %227 = dma.done %s223, 128
        $region48: #{tpu_custom_call.1} parent=43 // pred_fallthru
          _
      $region44: #{tpu_custom_call.1} parent=5 // pred_fallthru
        _
    $region6: #{tpu_custom_call.1} parent=1 // loop_footer
      %s19 = sadd.s32 1, %s15
    $region7: #{tpu_custom_call.1} parent=1 // loop_footer_branch
      %14 = sbr.rel target = $region3
    $region8: #{tpu_custom_call.1} parent=1 // loop_exit
      _
    %228 = vsyncpa [#allocation3], 1
    %s229 = scalar_lea.sflag [#allocation3], 1
    %230 = vsyncpa %s229, 1
    %231 = vsyncpa [#allocation6], 1
    %232 = vsyncpa [#allocation4], 1
    %s233 = scalar_lea.sflag [#allocation4], 1
    %234 = vsyncpa %s233, 1

// kernel: tpu_custom_call.1
$region0: #{tpu_custom_call.1}
  #allocation0 [shape = 'u32[]', space=smem, size = 0x4, offset = 0x4, fixed_abs, tag = 'smem constant byte address 0x4 - core index']
  #allocation1 [shape = 'u32[144,128]{1,0:T(1,128)}', space=vmem, size = 0x12000, scoped, tag = 'internal scratch']
  #allocation2 [shape = 'bf16[4,16,8]{2,1,0:T(16,128)(2,1)}', space=vmem, size = 0x4000, scoped, tag = 'scratch operand']
  #allocation3 [shape = 'f32[16,32]{1,0:T(8,128)}', space=vmem, size = 0x2000, scoped, tag = 'scratch operand']
  #allocation4 [shape = 'f32[4,16,1]{2,1,0:T(8,128)}', space=vmem, size = 0x8000, scoped, tag = 'scratch operand']
  #allocation5 [shape = 'f32[4,16,1]{2,1,0:T(8,128)}', space=vmem, size = 0x8000, scoped, tag = 'scratch operand']
  #allocation6 [shape = 'f32[4,16,8]{2,1,0:T(8,128)}', space=vmem, size = 0x8000, scoped, tag = 'scratch operand']
  %s0 = inlined_call_operand.vmem [shape: bf16[2,16,32], index: 0, kind: input, shape index: {}]
  %s1 = inlined_call_operand.vmem [shape: bf16[2,16,32], index: 1, kind: input, shape index: {}]
  %s2 = inlined_call_operand.vmem [shape: f32[1,32], index: 2, kind: input, shape index: {}]
  %s3 = inlined_call_operand.vmem [shape: bf16[4,32,24], index: 3, kind: input, shape index: {}]
  %s4 = inlined_call_operand.vmem [shape: bf16[4,8,32], index: 4, kind: input, shape index: {}]
  %s5 = inlined_call_operand.vmem [shape: f32[1,32], index: 5, kind: input, shape index: {}]
  %s6 = inlined_call_operand.vmem [shape: bf16[32,64], index: 6, kind: input, shape index: {}]
  %s7 = inlined_call_operand.vmem [shape: bf16[64,32], index: 7, kind: input, shape index: {}]
  %s8 = inlined_call_operand.hbm [shape: bf16[2,16,32], index: 8, kind: output, shape index: {0}]
  %s9 = inlined_call_operand.hbm [shape: f32[2,16,32], index: 9, kind: output, shape index: {1}]
  %10 = xla_tuple %s8, %s9
  %s11 = sld [smem:[#allocation0]]
  $region85: #{tpu_custom_call.1} parent=0
    _
  %s13 = ssub.s32 1, %s11
  %s14 = scalar_select 0, %s13, %s11
  $region1: #{tpu_custom_call.1} parent=0
    #allocation7 [shape = 'u8[8192]{0}', space=vmem, size = 0x2000, scoped, tag = 'output window, operand 0']
    #allocation8 [shape = 's32[2]{0}', space=sflag, size = 0x8, scoped, tag = 'scoped memory for tpu_custom_call.1']
    #allocation9 [shape = 'u8[16384]{0}', space=vmem, size = 0x4000, scoped, tag = 'output window, operand 1']
    #allocation10 [shape = 's32[2]{0}', space=sflag, size = 0x8, scoped, tag = 'scoped memory for tpu_custom_call.1']
    %15 = vsyncpa [#allocation8], 0
    %s16 = scalar_lea.sflag [#allocation8], 1
    %17 = vsyncpa %s16, 0
    %18 = vsyncpa [#allocation10], 0
    %s19 = scalar_lea.sflag [#allocation10], 1
    %20 = vsyncpa %s19, 0
    loop: start=0, step=1, limit=4
    $region2: #{tpu_custom_call.1} parent=1 // loop_pre_header
      _
    $region3: #{tpu_custom_call.1} parent=1 // loop_header
      %s22 = sphi 0, %s26
      %p23 = scmp.ge.s32.totalorder %s22, 4
      %s29 = sphi 0, %s48
      %s30 = sphi 0, %s44
      %s31 = sphi 0, %s40
      %s32 = sphi 0, %s29
      %s33 = sphi 0, %s30
      %s34 = sphi 0, %s31
      %s35 = sphi 0, %s32
      %s36 = sphi 0, %s33
      %s37 = sphi 0, %s34
      %s53 = sphi 0, %s55
      %s56 = sphi 0, %s53
      %s57 = sphi 0, %s56
      %s73 = sphi 0, %s57
      %s81 = sphi 0, %s83
      %s84 = sphi 0, %s81
      %s85 = sphi 0, %s84
      %s101 = sphi 0, %s85
      %s105 = sphi 0, %s105
      %s107 = sphi 0, %s105
      %s108 = sphi 0, %s107
      %s122 = sphi 0, %s108
      %s126 = sphi 0, %s126
      %s128 = sphi 0, %s126
      %s129 = sphi 0, %s128
      %s143 = sphi 0, %s129
      %s147 = sphi 0, %s147
      %s149 = sphi 0, %s147
      %s150 = sphi 0, %s149
      %s164 = sphi 0, %s150
      %s168 = sphi 0, %s168
      %s170 = sphi 0, %s168
      %s171 = sphi 0, %s170
      %s185 = sphi 0, %s171
      %s189 = sphi 0, %s189
      %s191 = sphi 0, %s189
      %s192 = sphi 0, %s191
      %s206 = sphi 0, %s192
      %s210 = sphi 0, %s210
      %s212 = sphi 0, %s210
      %s213 = sphi 0, %s212
      %s227 = sphi 0, %s213
      %s235 = sphi 0, %s237
      %s238 = sphi 0, %s235
      %s239 = sphi 0, %s238
      %s255 = sphi 0, %s239
      %s263 = sphi 0, %s265
      %s266 = sphi 0, %s263
      %s267 = sphi 0, %s266
      %s283 = sphi 0, %s267
    $region4: #{tpu_custom_call.1} parent=1 // loop_header_branch
      %25 = sbr.rel (%p23) target = $region8
    $region5: #{tpu_custom_call.1} parent=1 // loop_body
      %s27 = ssub.s32 %s22, 1
      %s28 = ssub.s32 %s22, 2
      %s38 = sadd.s32 1, %s31
      %p39 = scmp.ge.s32.totalorder %s38, 1
      %s40 = scalar_select %p39, 0, %s38
      %s41 = sadd.s32 1, %s30
      %s42 = scalar_select %p39, %s41, %s30
      %p43 = scmp.ge.s32.totalorder %s42, 1
      %s44 = scalar_select %p43, 0, %s42
      %s45 = sadd.s32 1, %s29
      %s46 = scalar_select %p43, %s45, %s29
      %p47 = scmp.ge.s32.totalorder %s46, 2
      %s48 = scalar_select %p47, 0, %s46
      %s49 = ssub.s32 %s29, %s48
      %s50 = ssub.s32 %s30, %s44
      %s51 = sor.u32 %s49, %s50
      %p52 = scmp.eq.s32.totalorder %s51, 0
      %s54 = sadd.s32 %s53, 1
      %s55 = scalar_select %p52, %s53, %s54
      %p58 = pneg %p52
      %p59 = scmp.eq.s32.totalorder %s22, 1
      %p60 = por %p58, %p59
      %p61 = scmp.ne.s32.totalorder %s53, %s56
      %p62 = scmp.eq.s32.totalorder %s22, 0
      %p63 = por %p61, %p62
      %p64 = scmp.ne.s32.totalorder %s53, %s56
      %p65 = scmp.eq.s32.totalorder %s27, 1
      %p66 = por %p64, %p65
      %p67 = scmp.ne.s32.totalorder %s56, %s57
      %p68 = scmp.eq.s32.totalorder %s27, 0
      %p69 = por %p67, %p68
      %p70 = scmp.ne.s32.totalorder %s56, %s57
      %p71 = scmp.eq.s32.totalorder %s28, 1
      %p72 = por %p70, %p71
      %p74 = scmp.ne.s32.totalorder %s57, %s73
      %p75 = scmp.eq.s32.totalorder %s28, 0
      %p76 = por %p74, %p75
      %s77 = ssub.s32 %s29, %s48
      %s78 = ssub.s32 %s31, %s40
      %s79 = sor.u32 %s77, %s78
      %p80 = scmp.eq.s32.totalorder %s79, 0
      %s82 = sadd.s32 %s81, 1
      %s83 = scalar_select %p80, %s81, %s82
      %p86 = pneg %p80
      %p87 = scmp.eq.s32.totalorder %s22, 1
      %p88 = por %p86, %p87
      %p89 = scmp.ne.s32.totalorder %s81, %s84
      %p90 = scmp.eq.s32.totalorder %s22, 0
      %p91 = por %p89, %p90
      %p92 = scmp.ne.s32.totalorder %s81, %s84
      %p93 = scmp.eq.s32.totalorder %s27, 1
      %p94 = por %p92, %p93
      %p95 = scmp.ne.s32.totalorder %s84, %s85
      %p96 = scmp.eq.s32.totalorder %s27, 0
      %p97 = por %p95, %p96
      %p98 = scmp.ne.s32.totalorder %s84, %s85
      %p99 = scmp.eq.s32.totalorder %s28, 1
      %p100 = por %p98, %p99
      %p102 = scmp.ne.s32.totalorder %s85, %s101
      %p103 = scmp.eq.s32.totalorder %s28, 0
      %p104 = por %p102, %p103
      %s106 = sadd.s32 %s105, 1
      %p109 = scmp.eq.s32.totalorder %s22, 1
      %p110 = scmp.ne.s32.totalorder %s105, %s107
      %p111 = scmp.eq.s32.totalorder %s22, 0
      %p112 = por %p110, %p111
      %p113 = scmp.ne.s32.totalorder %s105, %s107
      %p114 = scmp.eq.s32.totalorder %s27, 1
      %p115 = por %p113, %p114
      %p116 = scmp.ne.s32.totalorder %s107, %s108
      %p117 = scmp.eq.s32.totalorder %s27, 0
      %p118 = por %p116, %p117
      %p119 = scmp.ne.s32.totalorder %s107, %s108
      %p120 = scmp.eq.s32.totalorder %s28, 1
      %p121 = por %p119, %p120
      %p123 = scmp.ne.s32.totalorder %s108, %s122
      %p124 = scmp.eq.s32.totalorder %s28, 0
      %p125 = por %p123, %p124
      %s127 = sadd.s32 %s126, 1
      %p130 = scmp.eq.s32.totalorder %s22, 1
      %p131 = scmp.ne.s32.totalorder %s126, %s128
      %p132 = scmp.eq.s32.totalorder %s22, 0
      %p133 = por %p131, %p132
      %p134 = scmp.ne.s32.totalorder %s126, %s128
      %p135 = scmp.eq.s32.totalorder %s27, 1
      %p136 = por %p134, %p135
      %p137 = scmp.ne.s32.totalorder %s128, %s129
      %p138 = scmp.eq.s32.totalorder %s27, 0
      %p139 = por %p137, %p138
      %p140 = scmp.ne.s32.totalorder %s128, %s129
      %p141 = scmp.eq.s32.totalorder %s28, 1
      %p142 = por %p140, %p141
      %p144 = scmp.ne.s32.totalorder %s129, %s143
      %p145 = scmp.eq.s32.totalorder %s28, 0
      %p146 = por %p144, %p145
      %s148 = sadd.s32 %s147, 1
      %p151 = scmp.eq.s32.totalorder %s22, 1
      %p152 = scmp.ne.s32.totalorder %s147, %s149
      %p153 = scmp.eq.s32.totalorder %s22, 0
      %p154 = por %p152, %p153
      %p155 = scmp.ne.s32.totalorder %s147, %s149
      %p156 = scmp.eq.s32.totalorder %s27, 1
      %p157 = por %p155, %p156
      %p158 = scmp.ne.s32.totalorder %s149, %s150
      %p159 = scmp.eq.s32.totalorder %s27, 0
      %p160 = por %p158, %p159
      %p161 = scmp.ne.s32.totalorder %s149, %s150
      %p162 = scmp.eq.s32.totalorder %s28, 1
      %p163 = por %p161, %p162
      %p165 = scmp.ne.s32.totalorder %s150, %s164
      %p166 = scmp.eq.s32.totalorder %s28, 0
      %p167 = por %p165, %p166
      %s169 = sadd.s32 %s168, 1
      %p172 = scmp.eq.s32.totalorder %s22, 1
      %p173 = scmp.ne.s32.totalorder %s168, %s170
      %p174 = scmp.eq.s32.totalorder %s22, 0
      %p175 = por %p173, %p174
      %p176 = scmp.ne.s32.totalorder %s168, %s170
      %p177 = scmp.eq.s32.totalorder %s27, 1
      %p178 = por %p176, %p177
      %p179 = scmp.ne.s32.totalorder %s170, %s171
      %p180 = scmp.eq.s32.totalorder %s27, 0
      %p181 = por %p179, %p180
      %p182 = scmp.ne.s32.totalorder %s170, %s171
      %p183 = scmp.eq.s32.totalorder %s28, 1
      %p184 = por %p182, %p183
      %p186 = scmp.ne.s32.totalorder %s171, %s185
      %p187 = scmp.eq.s32.totalorder %s28, 0
      %p188 = por %p186, %p187
      %s190 = sadd.s32 %s189, 1
      %p193 = scmp.eq.s32.totalorder %s22, 1
      %p194 = scmp.ne.s32.totalorder %s189, %s191
      %p195 = scmp.eq.s32.totalorder %s22, 0
      %p196 = por %p194, %p195
      %p197 = scmp.ne.s32.totalorder %s189, %s191
      %p198 = scmp.eq.s32.totalorder %s27, 1
      %p199 = por %p197, %p198
      %p200 = scmp.ne.s32.totalorder %s191, %s192
      %p201 = scmp.eq.s32.totalorder %s27, 0
      %p202 = por %p200, %p201
      %p203 = scmp.ne.s32.totalorder %s191, %s192
      %p204 = scmp.eq.s32.totalorder %s28, 1
      %p205 = por %p203, %p204
      %p207 = scmp.ne.s32.totalorder %s192, %s206
      %p208 = scmp.eq.s32.totalorder %s28, 0
      %p209 = por %p207, %p208
      %s211 = sadd.s32 %s210, 1
      %p214 = scmp.eq.s32.totalorder %s22, 1
      %p215 = scmp.ne.s32.totalorder %s210, %s212
      %p216 = scmp.eq.s32.totalorder %s22, 0
      %p217 = por %p215, %p216
      %p218 = scmp.ne.s32.totalorder %s210, %s212
      %p219 = scmp.eq.s32.totalorder %s27, 1
      %p220 = por %p218, %p219
      %p221 = scmp.ne.s32.totalorder %s212, %s213
      %p222 = scmp.eq.s32.totalorder %s27, 0
      %p223 = por %p221, %p222
      %p224 = scmp.ne.s32.totalorder %s212, %s213
      %p225 = scmp.eq.s32.totalorder %s28, 1
      %p226 = por %p224, %p225
      %p228 = scmp.ne.s32.totalorder %s213, %s227
      %p229 = scmp.eq.s32.totalorder %s28, 0
      %p230 = por %p228, %p229
      %s231 = ssub.s32 %s29, %s48
      %s232 = ssub.s32 %s30, %s44
      %s233 = sor.u32 %s231, %s232
      %p234 = scmp.eq.s32.totalorder %s233, 0
      %s236 = sadd.s32 %s235, 1
      %s237 = scalar_select %p234, %s235, %s236
      %p240 = pneg %p234
      %p241 = scmp.eq.s32.totalorder %s22, 1
      %p242 = por %p240, %p241
      %p243 = scmp.ne.s32.totalorder %s235, %s238
      %p244 = scmp.eq.s32.totalorder %s22, 0
      %p245 = por %p243, %p244
      %p246 = scmp.ne.s32.totalorder %s235, %s238
      %p247 = scmp.eq.s32.totalorder %s27, 1
      %p248 = por %p246, %p247
      %p249 = scmp.ne.s32.totalorder %s238, %s239
      %p250 = scmp.eq.s32.totalorder %s27, 0
      %p251 = por %p249, %p250
      %p252 = scmp.ne.s32.totalorder %s238, %s239
      %p253 = scmp.eq.s32.totalorder %s28, 1
      %p254 = por %p252, %p253
      %p256 = scmp.ne.s32.totalorder %s239, %s255
      %p257 = scmp.eq.s32.totalorder %s28, 0
      %p258 = por %p256, %p257
      %s259 = ssub.s32 %s29, %s48
      %s260 = ssub.s32 %s30, %s44
      %s261 = sor.u32 %s259, %s260
      %p262 = scmp.eq.s32.totalorder %s261, 0
      %s264 = sadd.s32 %s263, 1
      %s265 = scalar_select %p262, %s263, %s264
      %p268 = pneg %p262
      %p269 = scmp.eq.s32.totalorder %s22, 1
      %p270 = por %p268, %p269
      %p271 = scmp.ne.s32.totalorder %s263, %s266
      %p272 = scmp.eq.s32.totalorder %s22, 0
      %p273 = por %p271, %p272
      %p274 = scmp.ne.s32.totalorder %s263, %s266
      %p275 = scmp.eq.s32.totalorder %s27, 1
      %p276 = por %p274, %p275
      %p277 = scmp.ne.s32.totalorder %s266, %s267
      %p278 = scmp.eq.s32.totalorder %s27, 0
      %p279 = por %p277, %p278
      %p280 = scmp.ne.s32.totalorder %s266, %s267
      %p281 = scmp.eq.s32.totalorder %s28, 1
      %p282 = por %p280, %p281
      %p284 = scmp.ne.s32.totalorder %s267, %s283
      %p285 = scmp.eq.s32.totalorder %s28, 0
      %p286 = por %p284, %p285
      %p287 = scmp.le.s32.totalorder 1, %s22
      %p288 = scmp.lt.s32.totalorder %s22, 3
      %p289 = pnand %p287, %p288
      %p290 = pneg %p289
      // Predicated region
      $region9: #{tpu_custom_call.1} parent=5 // pred_check
        _
      $region10: #{tpu_custom_call.1} parent=5 // pred_check_branch
        %292 = sbr.rel (%p289) target = $region12
      $region11: #{tpu_custom_call.1} parent=5 // pred_region
        %s293 = ssub.s32 %s22, 1
        // Predicated region
        $region13: #{tpu_custom_call.1} parent=11 // pred_check
          %p294 = pneg %p118
        $region14: #{tpu_custom_call.1} parent=11 // pred_check_branch
          %296 = sbr.rel (%p294) target = $region16
        $region15: #{tpu_custom_call.1} parent=11 // pred_region
          _
        $region16: #{tpu_custom_call.1} parent=11 // pred_fallthru
          _
        // Predicated region
        $region17: #{tpu_custom_call.1} parent=11 // pred_check
          %p297 = pneg %p139
        $region18: #{tpu_custom_call.1} parent=11 // pred_check_branch
          %299 = sbr.rel (%p297) target = $region20
        $region19: #{tpu_custom_call.1} parent=11 // pred_region
          _
        $region20: #{tpu_custom_call.1} parent=11 // pred_fallthru
          _
        // Predicated region
        $region21: #{tpu_custom_call.1} parent=11 // pred_check
          %p300 = pneg %p160
        $region22: #{tpu_custom_call.1} parent=11 // pred_check_branch
          %302 = sbr.rel (%p300) target = $region24
        $region23: #{tpu_custom_call.1} parent=11 // pred_region
          _
        $region24: #{tpu_custom_call.1} parent=11 // pred_fallthru
          _
        // Predicated region
        $region25: #{tpu_custom_call.1} parent=11 // pred_check
          %p303 = pneg %p181
        $region26: #{tpu_custom_call.1} parent=11 // pred_check_branch
          %305 = sbr.rel (%p303) target = $region28
        $region27: #{tpu_custom_call.1} parent=11 // pred_region
          _
        $region28: #{tpu_custom_call.1} parent=11 // pred_fallthru
          _
        // Predicated region
        $region29: #{tpu_custom_call.1} parent=11 // pred_check
          %p306 = pneg %p202
        $region30: #{tpu_custom_call.1} parent=11 // pred_check_branch
          %308 = sbr.rel (%p306) target = $region32
        $region31: #{tpu_custom_call.1} parent=11 // pred_region
          _
        $region32: #{tpu_custom_call.1} parent=11 // pred_fallthru
          _
        // Predicated region
        $region33: #{tpu_custom_call.1} parent=11 // pred_check
          %p309 = pneg %p223
        $region34: #{tpu_custom_call.1} parent=11 // pred_check_branch
          %311 = sbr.rel (%p309) target = $region36
        $region35: #{tpu_custom_call.1} parent=11 // pred_region
          _
        $region36: #{tpu_custom_call.1} parent=11 // pred_fallthru
          _
      $region12: #{tpu_custom_call.1} parent=5 // pred_fallthru
        _
      %p312 = scmp.lt.s32.totalorder %s22, 2
      // Predicated region
      $region37: #{tpu_custom_call.1} parent=5 // pred_check
        %p313 = pneg %p312
      $region38: #{tpu_custom_call.1} parent=5 // pred_check_branch
        %315 = sbr.rel (%p313) target = $region40
      $region39: #{tpu_custom_call.1} parent=5 // pred_region
        // Predicated region
        $region41: #{tpu_custom_call.1} parent=39 // pred_check
          %p316 = pneg %p63
        $region42: #{tpu_custom_call.1} parent=39 // pred_check_branch
          %318 = sbr.rel (%p316) target = $region44
        $region43: #{tpu_custom_call.1} parent=39 // pred_region
          %s319 = smul.u32 2, %s30
          %p320 = scmp.lt.s32.totalorder %s29, 1
          %s321 = scalar_select %p320, %s29, 1
          %p322 = scmp.lt.s32.totalorder %s319, 1
          %s323 = scalar_select %p322, %s319, 1
          %s324 = smul.addr %s321, 2
          %s325 = sadd.s32 %s323, %s324
          %s326 = smul.addr %s325, 4
          %s327 = scalar_lea.vmem %s0, %s326
          %s328 = smul.u32 2, %s30
        $region44: #{tpu_custom_call.1} parent=39 // pred_fallthru
          _
        // Predicated region
        $region45: #{tpu_custom_call.1} parent=39 // pred_check
          %p329 = pneg %p91
        $region46: #{tpu_custom_call.1} parent=39 // pred_check_branch
          %331 = sbr.rel (%p329) target = $region48
        $region47: #{tpu_custom_call.1} parent=39 // pred_region
          %s332 = smul.u32 2, %s31
          %p333 = scmp.lt.s32.totalorder %s29, 1
          %s334 = scalar_select %p333, %s29, 1
          %p335 = scmp.lt.s32.totalorder %s332, 1
          %s336 = scalar_select %p335, %s332, 1
          %s337 = smul.addr %s334, 2
          %s338 = sadd.s32 %s336, %s337
          %s339 = smul.addr %s338, 4
          %s340 = scalar_lea.vmem %s1, %s339
          %s341 = smul.u32 2, %s31
        $region48: #{tpu_custom_call.1} parent=39 // pred_fallthru
          _
      $region40: #{tpu_custom_call.1} parent=5 // pred_fallthru
        _
      %p342 = scmp.le.s32.totalorder 1, %s22
      %p343 = scmp.lt.s32.totalorder %s22, 3
      %p344 = pnand %p342, %p343
      %p345 = pneg %p344
      // Predicated region
      $region49: #{tpu_custom_call.1} parent=5 // pred_check
        _
      $region50: #{tpu_custom_call.1} parent=5 // pred_check_branch
        %347 = sbr.rel (%p344) target = $region52
      $region51: #{tpu_custom_call.1} parent=5 // pred_region
        %s348 = ssub.s32 %s22, 1
        %s349 = smul.u32 2, %s33
        %p350 = scmp.lt.s32.totalorder %s32, 1
        %s351 = scalar_select %p350, %s32, 1
        %p352 = scmp.lt.s32.totalorder %s349, 1
        %s353 = scalar_select %p352, %s349, 1
        %s354 = smul.addr %s351, 2
        %s355 = sadd.s32 %s353, %s354
        %s356 = smul.addr %s355, 4
        %s357 = scalar_lea.vmem %s0, %s356
        %p358 = pneg %p69
        %p359 = pneg %p66
        %s360 = smul.u32 2, %s34
        %p361 = scmp.lt.s32.totalorder %s32, 1
        %s362 = scalar_select %p361, %s32, 1
        %p363 = scmp.lt.s32.totalorder %s360, 1
        %s364 = scalar_select %p363, %s360, 1
        %s365 = smul.addr %s362, 2
        %s366 = sadd.s32 %s364, %s365
        %s367 = smul.addr %s366, 4
        %s368 = scalar_lea.vmem %s1, %s367
        %p369 = pneg %p97
        %p370 = pneg %p94
        %p371 = pneg %p118
        %p372 = pneg %p115
        %p373 = pneg %p139
        %p374 = pneg %p136
        %p375 = pneg %p160
        %p376 = pneg %p157
        %p377 = pneg %p181
        %p378 = pneg %p178
        %p379 = pneg %p202
        %p380 = pneg %p199
        %p381 = pneg %p223
        %p382 = pneg %p220
        %p383 = pneg %p251
        %p384 = pneg %p248
        %s385 = sand.u32 %s238, 1
        %s386 = scalar_lea.sflag [#allocation8], %s385
        %s387 = sand.u32 %s238, 1
        %s388 = smul.addr %s387, 8
        %s389 = scalar_lea.vmem [#allocation7], %s388
        %p390 = pneg %p279
        %p391 = pneg %p276
        %s392 = sand.u32 %s266, 1
        %s393 = scalar_lea.sflag [#allocation10], %s392
        %s394 = sand.u32 %s266, 1
        %s395 = smul.addr %s394, 16
        %s396 = scalar_lea.vmem [#allocation9], %s395
        %s397 = smul.u32 2, %s33
        %p398 = scmp.lt.s32.totalorder %s32, 1
        %s399 = scalar_select %p398, %s32, 1
        %p400 = scmp.lt.s32.totalorder %s397, 1
        %s401 = scalar_select %p400, %s397, 1
        %s402 = smul.addr %s399, 2
        %s403 = sadd.s32 %s401, %s402
        %s404 = smul.addr %s403, 4
        %s405 = scalar_lea.vmem %s0, %s404
        %s406 = smul.u32 2, %s33
        %s407 = smul.u32 2, %s34
        %p408 = scmp.lt.s32.totalorder %s32, 1
        %s409 = scalar_select %p408, %s32, 1
        %p410 = scmp.lt.s32.totalorder %s407, 1
        %s411 = scalar_select %p410, %s407, 1
        %s412 = smul.addr %s409, 2
        %s413 = sadd.s32 %s411, %s412
        %s414 = smul.addr %s413, 4
        %s415 = scalar_lea.vmem %s1, %s414
        %s416 = smul.u32 2, %s34
        %s417 = smul.u32 2, %s33
        %s418 = smul.u32 2, %s33
        %p420 = scmp.eq.s32.totalorder %s34, 0
        // Predicated region
        $region53: #{tpu_custom_call.1} parent=51 // pred_check
          %p421 = pneg %p420
        $region54: #{tpu_custom_call.1} parent=51 // pred_check_branch
          %423 = sbr.rel (%p421) target = $region56
        $region55: #{tpu_custom_call.1} parent=51 // pred_region
          %v424 = vld [vmem:[%s405] sm:$0xf]
          %v425 = vld [vmem:[%s405 + $0x4] sm:$0xf]
          %v426 = vunpack.c.l.bf16 %v424
          %v427 = vunpack.c.l.bf16 %v425
          %v428 = vld [vmem:[%s2] sm:$0x1]
          %v429 = vmul.f32 %v426, %v426
          %v430 = vmul.f32 %v427, %v427
          %vm431 = vcmask 261120
          %v432 = vsel %vm431, %v429, 0.0
          %433 = vadd.xlane.f32.xlu0 %v432
          %v434 = vpop.xlane.xlu0 %433
          %v435 = vsel %vm431, %v430, 0.0
          %436 = vadd.xlane.f32.xlu0 %v435
          %v437 = vpop.xlane.xlu0 %436
          %v438 = vrcp.pop 32.0
          %v439 = vmul.f32 %v434, %v438
          %v440 = vmul.f32 %v437, %v438
          %v441 = vadd.f32 %v439, 1e-05
          %v442 = vadd.f32 %v440, 1e-05
          %v443 = vrsqrt.pop %v441
          %v444 = vrsqrt.pop %v442
          %v445 = vmul.f32 %v426, %v443
          %v446 = vmul.f32 %v427, %v444
          %v448 = vlaneseq
          %v449 = vshrl.u32 %v448, 7
          %v450 = vsub.s32 0, %v449
          %v451 = vrot.slane %v428, %v450
          %v453 = vmul.f32 %v445, %v451
          %v454 = vmul.f32 %v446, %v451
          %v455 = vpack.c.bf16 %v454, %v453
          %v456 = vld [vmem:[%s3] sm:$0xf]
          %v457 = vld [vmem:[%s3 + $0x4] sm:$0xf]
          %v458 = vld [vmem:[%s3 + $0x8] sm:$0xf]
          %v459 = vld [vmem:[%s3 + $0xc] sm:$0xf]
          %v460 = vld [vmem:[%s3 + $0x10] sm:$0xf]
          %v461 = vld [vmem:[%s3 + $0x14] sm:$0xf]
          %v462 = vld [vmem:[%s3 + $0x18] sm:$0xf]
          %v463 = vld [vmem:[%s3 + $0x1c] sm:$0xf]
          %v464 = vld [vmem:[%s3 + $0x20] sm:$0xf]
          %v465 = vld [vmem:[%s3 + $0x24] sm:$0xf]
          %v466 = vld [vmem:[%s3 + $0x28] sm:$0xf]
          %v467 = vld [vmem:[%s3 + $0x2c] sm:$0xf]
          %v468 = vld [vmem:[%s3 + $0x30] sm:$0xf]
          %v469 = vld [vmem:[%s3 + $0x34] sm:$0xf]
          %v470 = vld [vmem:[%s3 + $0x38] sm:$0xf]
          %v471 = vld [vmem:[%s3 + $0x3c] sm:$0xf]
          %v476 = vunpack.c.l.b16 %v456
          %v477 = vunpack.c.l.b16 %v457
          %v478 = vunpack.c.l.b16 %v458
          %v479 = vunpack.c.l.b16 %v459
          %v480 = vpack.c.b16 %v477, %v476
          %v481 = vpack.c.b16 %v479, %v478
          %v485 = vsel %vm431, %v455, 0
          %487 = vmatprep.subr.bf16.mxu0 0
          %488 = vmatpush1.bf16.msra.mxu0 %v480
          %489 = vmatprep.subr.bf16.mxu0 0
          %490 = vmatpush1.bf16.msra.mxu0 %v481
          %491 = vmatprep.subr.bf16.mxu0 0
          %492 = vmatpush1.bf16.msra.mxu0 0
          %493 = vmatprep.subr.bf16.mxu0 0
          %494 = vmatpush1.bf16.msra.mxu0 0
          %495 = vmatprep.subr.bf16.mxu0 0
          %496 = vmatpush1.bf16.msra.mxu0 0
          %497 = vmatprep.subr.bf16.mxu0 0
          %498 = vmatpush1.bf16.msra.mxu0 0
          %499 = vmatprep.subr.bf16.mxu0 0
          %500 = vmatpush1.bf16.msra.mxu0 0
          %501 = vmatprep.subr.bf16.mxu0 0
          %502 = vmatpush1.bf16.msra.mxu0 0
          %503 = vmatprep.subr.bf16.mxu0 0
          %504 = vmatpush1.bf16.msra.mxu0 0
          %505 = vmatprep.subr.bf16.mxu0 0
          %506 = vmatpush1.bf16.msra.mxu0 0
          %507 = vmatprep.subr.bf16.mxu0 0
          %508 = vmatpush1.bf16.msra.mxu0 0
          %509 = vmatprep.subr.bf16.mxu0 0
          %510 = vmatpush1.bf16.msra.mxu0 0
          %511 = vmatprep.subr.bf16.mxu0 0
          %512 = vmatpush1.bf16.msra.mxu0 0
          %513 = vmatprep.subr.bf16.mxu0 0
          %514 = vmatpush1.bf16.msra.mxu0 0
          %515 = vmatprep.subr.bf16.mxu0 0
          %516 = vmatpush1.bf16.msra.mxu0 0
          %517 = vmatprep.subr.bf16.mxu0 0
          %518 = vmatpush1.bf16.msra.mxu0 0
          %519 = vmatprep.mubr.bf16.mxu0 0
          %520 = vmatmul.mubr.bf16.gmra.mrb[0].mxu0 %v485
          %v521 = vpop.f32.mrb[0].mxu0
          %v522 = vadd.f32 0.0, %v521
          %v523 = vpop.f32.mrb[0].mxu0
          %v524 = vpop.f32.mrb[0].mxu0
          %v525 = vadd.f32 0.0, %v524
          %v526 = vpop.f32.mrb[0].mxu0
          %527 = vdwg.mxu0
          %v532 = vunpack.c.l.b16 %v460
          %v533 = vunpack.c.l.b16 %v461
          %v534 = vunpack.c.l.b16 %v462
          %v535 = vunpack.c.l.b16 %v463
          %v536 = vpack.c.b16 %v533, %v532
          %v537 = vpack.c.b16 %v535, %v534
          %540 = vmatprep.subr.bf16.mxu0 0
          %541 = vmatpush1.bf16.msra.mxu0 %v536
          %542 = vmatprep.subr.bf16.mxu0 0
          %543 = vmatpush1.bf16.msra.mxu0 %v537
          %544 = vmatprep.subr.bf16.mxu0 0
          %545 = vmatpush1.bf16.msra.mxu0 0
          %546 = vmatprep.subr.bf16.mxu0 0
          %547 = vmatpush1.bf16.msra.mxu0 0
          %548 = vmatprep.subr.bf16.mxu0 0
          %549 = vmatpush1.bf16.msra.mxu0 0
          %550 = vmatprep.subr.bf16.mxu0 0
          %551 = vmatpush1.bf16.msra.mxu0 0
          %552 = vmatprep.subr.bf16.mxu0 0
          %553 = vmatpush1.bf16.msra.mxu0 0
          %554 = vmatprep.subr.bf16.mxu0 0
          %555 = vmatpush1.bf16.msra.mxu0 0
          %556 = vmatprep.subr.bf16.mxu0 0
          %557 = vmatpush1.bf16.msra.mxu0 0
          %558 = vmatprep.subr.bf16.mxu0 0
          %559 = vmatpush1.bf16.msra.mxu0 0
          %560 = vmatprep.subr.bf16.mxu0 0
          %561 = vmatpush1.bf16.msra.mxu0 0
          %562 = vmatprep.subr.bf16.mxu0 0
          %563 = vmatpush1.bf16.msra.mxu0 0
          %564 = vmatprep.subr.bf16.mxu0 0
          %565 = vmatpush1.bf16.msra.mxu0 0
          %566 = vmatprep.subr.bf16.mxu0 0
          %567 = vmatpush1.bf16.msra.mxu0 0
          %568 = vmatprep.subr.bf16.mxu0 0
          %569 = vmatpush1.bf16.msra.mxu0 0
          %570 = vmatprep.subr.bf16.mxu0 0
          %571 = vmatpush1.bf16.msra.mxu0 0
          %572 = vmatprep.mubr.bf16.mxu0 0
          %573 = vmatmul.mubr.bf16.gmra.mrb[0].mxu0 %v485
          %v574 = vpop.f32.mrb[0].mxu0
          %v575 = vadd.f32 0.0, %v574
          %v576 = vpop.f32.mrb[0].mxu0
          %v577 = vpop.f32.mrb[0].mxu0
          %v578 = vadd.f32 0.0, %v577
          %v579 = vpop.f32.mrb[0].mxu0
          %580 = vdwg.mxu0
          %v585 = vunpack.c.l.b16 %v464
          %v586 = vunpack.c.l.b16 %v465
          %v587 = vunpack.c.l.b16 %v466
          %v588 = vunpack.c.l.b16 %v467
          %v589 = vpack.c.b16 %v586, %v585
          %v590 = vpack.c.b16 %v588, %v587
          %593 = vmatprep.subr.bf16.mxu0 0
          %594 = vmatpush1.bf16.msra.mxu0 %v589
          %595 = vmatprep.subr.bf16.mxu0 0
          %596 = vmatpush1.bf16.msra.mxu0 %v590
          %597 = vmatprep.subr.bf16.mxu0 0
          %598 = vmatpush1.bf16.msra.mxu0 0
          %599 = vmatprep.subr.bf16.mxu0 0
          %600 = vmatpush1.bf16.msra.mxu0 0
          %601 = vmatprep.subr.bf16.mxu0 0
          %602 = vmatpush1.bf16.msra.mxu0 0
          %603 = vmatprep.subr.bf16.mxu0 0
          %604 = vmatpush1.bf16.msra.mxu0 0
          %605 = vmatprep.subr.bf16.mxu0 0
          %606 = vmatpush1.bf16.msra.mxu0 0
          %607 = vmatprep.subr.bf16.mxu0 0
          %608 = vmatpush1.bf16.msra.mxu0 0
          %609 = vmatprep.subr.bf16.mxu0 0
          %610 = vmatpush1.bf16.msra.mxu0 0
          %611 = vmatprep.subr.bf16.mxu0 0
          %612 = vmatpush1.bf16.msra.mxu0 0
          %613 = vmatprep.subr.bf16.mxu0 0
          %614 = vmatpush1.bf16.msra.mxu0 0
          %615 = vmatprep.subr.bf16.mxu0 0
          %616 = vmatpush1.bf16.msra.mxu0 0
          %617 = vmatprep.subr.bf16.mxu0 0
          %618 = vmatpush1.bf16.msra.mxu0 0
          %619 = vmatprep.subr.bf16.mxu0 0
          %620 = vmatpush1.bf16.msra.mxu0 0
          %621 = vmatprep.subr.bf16.mxu0 0
          %622 = vmatpush1.bf16.msra.mxu0 0
          %623 = vmatprep.subr.bf16.mxu0 0
          %624 = vmatpush1.bf16.msra.mxu0 0
          %625 = vmatprep.mubr.bf16.mxu0 0
          %626 = vmatmul.mubr.bf16.gmra.mrb[0].mxu0 %v485
          %v627 = vpop.f32.mrb[0].mxu0
          %v628 = vadd.f32 0.0, %v627
          %v629 = vpop.f32.mrb[0].mxu0
          %v630 = vpop.f32.mrb[0].mxu0
          %v631 = vadd.f32 0.0, %v630
          %v632 = vpop.f32.mrb[0].mxu0
          %633 = vdwg.mxu0
          %v638 = vunpack.c.l.b16 %v468
          %v639 = vunpack.c.l.b16 %v469
          %v640 = vunpack.c.l.b16 %v470
          %v641 = vunpack.c.l.b16 %v471
          %v642 = vpack.c.b16 %v639, %v638
          %v643 = vpack.c.b16 %v641, %v640
          %646 = vmatprep.subr.bf16.mxu0 0
          %647 = vmatpush1.bf16.msra.mxu0 %v642
          %648 = vmatprep.subr.bf16.mxu0 0
          %649 = vmatpush1.bf16.msra.mxu0 %v643
          %650 = vmatprep.subr.bf16.mxu0 0
          %651 = vmatpush1.bf16.msra.mxu0 0
          %652 = vmatprep.subr.bf16.mxu0 0
          %653 = vmatpush1.bf16.msra.mxu0 0
          %654 = vmatprep.subr.bf16.mxu0 0
          %655 = vmatpush1.bf16.msra.mxu0 0
          %656 = vmatprep.subr.bf16.mxu0 0
          %657 = vmatpush1.bf16.msra.mxu0 0
          %658 = vmatprep.subr.bf16.mxu0 0
          %659 = vmatpush1.bf16.msra.mxu0 0
          %660 = vmatprep.subr.bf16.mxu0 0
          %661 = vmatpush1.bf16.msra.mxu0 0
          %662 = vmatprep.subr.bf16.mxu0 0
          %663 = vmatpush1.bf16.msra.mxu0 0
          %664 = vmatprep.subr.bf16.mxu0 0
          %665 = vmatpush1.bf16.msra.mxu0 0
          %666 = vmatprep.subr.bf16.mxu0 0
          %667 = vmatpush1.bf16.msra.mxu0 0
          %668 = vmatprep.subr.bf16.mxu0 0
          %669 = vmatpush1.bf16.msra.mxu0 0
          %670 = vmatprep.subr.bf16.mxu0 0
          %671 = vmatpush1.bf16.msra.mxu0 0
          %672 = vmatprep.subr.bf16.mxu0 0
          %673 = vmatpush1.bf16.msra.mxu0 0
          %674 = vmatprep.subr.bf16.mxu0 0
          %675 = vmatpush1.bf16.msra.mxu0 0
          %676 = vmatprep.subr.bf16.mxu0 0
          %677 = vmatpush1.bf16.msra.mxu0 0
          %678 = vmatprep.mubr.bf16.mxu0 0
          %679 = vmatmul.mubr.bf16.gmra.mrb[0].mxu0 %v485
          %v680 = vpop.f32.mrb[0].mxu0
          %v681 = vadd.f32 0.0, %v680
          %v682 = vpop.f32.mrb[0].mxu0
          %v683 = vpop.f32.mrb[0].mxu0
          %v684 = vadd.f32 0.0, %v683
          %v685 = vpop.f32.mrb[0].mxu0
          %686 = vdwg.mxu0
          %v687 = vmul.f32 %v522, 0.35355338
          %v688 = vmul.f32 %v525, 0.35355338
          %v689 = vmul.f32 %v575, 0.35355338
          %v690 = vmul.f32 %v578, 0.35355338
          %v691 = vmul.f32 %v628, 0.35355338
          %v692 = vmul.f32 %v631, 0.35355338
          %v693 = vmul.f32 %v681, 0.35355338
          %v694 = vmul.f32 %v684, 0.35355338
          %v695 = vpack.c.bf16 %v688, %v687
          %v696 = vpack.c.bf16 %v690, %v689
          %v697 = vpack.c.bf16 %v692, %v691
          %v698 = vpack.c.bf16 %v694, %v693
          %vm699 = vcmask 64512
          %700 = vst.msk [vmem:[#allocation2] sm:$0xff] %vm699, %v695
          %701 = vst.msk [vmem:[#allocation2 + $0x8] sm:$0xff] %vm699, %v696
          %702 = vst.msk [vmem:[#allocation2 + $0x10] sm:$0xff] %vm699, %v697
          %703 = vst.msk [vmem:[#allocation2 + $0x18] sm:$0xff] %vm699, %v698
          %704 = vst.msk [vmem:[#allocation3] sm:$0xff] %vm431, %v426
          %705 = vst.msk [vmem:[#allocation3 + $0x8] sm:$0xff] %vm431, %v427
          %vm706 = vcmask 7168
          %707 = vst.msk [vmem:[#allocation4] sm:$0xff] %vm706, -inf
          %708 = vst.msk [vmem:[#allocation4 + $0x8] sm:$0xff] %vm706, -inf
          %709 = vst.msk [vmem:[#allocation4 + $0x10] sm:$0xff] %vm706, -inf
          %710 = vst.msk [vmem:[#allocation4 + $0x18] sm:$0xff] %vm706, -inf
          %711 = vst.msk [vmem:[#allocation4 + $0x20] sm:$0xff] %vm706, -inf
          %712 = vst.msk [vmem:[#allocation4 + $0x28] sm:$0xff] %vm706, -inf
          %713 = vst.msk [vmem:[#allocation4 + $0x30] sm:$0xff] %vm706, -inf
          %714 = vst.msk [vmem:[#allocation4 + $0x38] sm:$0xff] %vm706, -inf
          %715 = vst.msk [vmem:[#allocation5] sm:$0xff] %vm706, 0.0
          %716 = vst.msk [vmem:[#allocation5 + $0x8] sm:$0xff] %vm706, 0.0
          %717 = vst.msk [vmem:[#allocation5 + $0x10] sm:$0xff] %vm706, 0.0
          %718 = vst.msk [vmem:[#allocation5 + $0x18] sm:$0xff] %vm706, 0.0
          %719 = vst.msk [vmem:[#allocation5 + $0x20] sm:$0xff] %vm706, 0.0
          %720 = vst.msk [vmem:[#allocation5 + $0x28] sm:$0xff] %vm706, 0.0
          %721 = vst.msk [vmem:[#allocation5 + $0x30] sm:$0xff] %vm706, 0.0
          %722 = vst.msk [vmem:[#allocation5 + $0x38] sm:$0xff] %vm706, 0.0
          %723 = vst.msk [vmem:[#allocation6] sm:$0xff] %vm699, 0.0
          %724 = vst.msk [vmem:[#allocation6 + $0x8] sm:$0xff] %vm699, 0.0
          %725 = vst.msk [vmem:[#allocation6 + $0x10] sm:$0xff] %vm699, 0.0
          %726 = vst.msk [vmem:[#allocation6 + $0x18] sm:$0xff] %vm699, 0.0
          %727 = vst.msk [vmem:[#allocation6 + $0x20] sm:$0xff] %vm699, 0.0
          %728 = vst.msk [vmem:[#allocation6 + $0x28] sm:$0xff] %vm699, 0.0
          %729 = vst.msk [vmem:[#allocation6 + $0x30] sm:$0xff] %vm699, 0.0
          %730 = vst.msk [vmem:[#allocation6 + $0x38] sm:$0xff] %vm699, 0.0
        $region56: #{tpu_custom_call.1} parent=51 // pred_fallthru
          _
        %s731 = smul.u32 %s34, 16
        %s732 = smul.u32 %s33, 16
        %s733 = sadd.s32 %s732, 15
        %p734 = scmp.le.s32.totalorder %s731, %s733
        // Predicated region
        $region57: #{tpu_custom_call.1} parent=51 // pred_check
          %p735 = pneg %p734
        $region58: #{tpu_custom_call.1} parent=51 // pred_check_branch
          %737 = sbr.rel (%p735) target = $region60
        $region59: #{tpu_custom_call.1} parent=51 // pred_region
          %v738 = vld [vmem:[%s415] sm:$0xf]
          %v739 = vld [vmem:[%s415 + $0x4] sm:$0xf]
          %v740 = vunpack.c.l.bf16 %v738
          %v741 = vunpack.c.l.bf16 %v739
          %v742 = vld [vmem:[%s2] sm:$0x1]
          %v743 = vmul.f32 %v740, %v740
          %v744 = vmul.f32 %v741, %v741
          %vm745 = vcmask 261120
          %v746 = vsel %vm745, %v743, 0.0
          %747 = vadd.xlane.f32.xlu0 %v746
          %v748 = vpop.xlane.xlu0 %747
          %v749 = vsel %vm745, %v744, 0.0
          %750 = vadd.xlane.f32.xlu0 %v749
          %v751 = vpop.xlane.xlu0 %750
          %v752 = vrcp.pop 32.0
          %v753 = vmul.f32 %v748, %v752
          %v754 = vmul.f32 %v751, %v752
          %v755 = vadd.f32 %v753, 1e-05
          %v756 = vadd.f32 %v754, 1e-05
          %v757 = vrsqrt.pop %v755
          %v758 = vrsqrt.pop %v756
          %v759 = vmul.f32 %v740, %v757
          %v760 = vmul.f32 %v741, %v758
          %v762 = vlaneseq
          %v763 = vshrl.u32 %v762, 7
          %v764 = vsub.s32 0, %v763
          %v765 = vrot.slane %v742, %v764
          %v767 = vmul.f32 %v759, %v765
          %v768 = vmul.f32 %v760, %v765
          %v769 = vpack.c.bf16 %v768, %v767
          %v770 = vld [vmem:[%s3] sm:$0xf]
          %v771 = vld [vmem:[%s3 + $0x4] sm:$0xf]
          %v772 = vld [vmem:[%s3 + $0x8] sm:$0xf]
          %v773 = vld [vmem:[%s3 + $0xc] sm:$0xf]
          %v774 = vld [vmem:[%s3 + $0x10] sm:$0xf]
          %v775 = vld [vmem:[%s3 + $0x14] sm:$0xf]
          %v776 = vld [vmem:[%s3 + $0x18] sm:$0xf]
          %v777 = vld [vmem:[%s3 + $0x1c] sm:$0xf]
          %v778 = vld [vmem:[%s3 + $0x20] sm:$0xf]
          %v779 = vld [vmem:[%s3 + $0x24] sm:$0xf]
          %v780 = vld [vmem:[%s3 + $0x28] sm:$0xf]
          %v781 = vld [vmem:[%s3 + $0x2c] sm:$0xf]
          %v782 = vld [vmem:[%s3 + $0x30] sm:$0xf]
          %v783 = vld [vmem:[%s3 + $0x34] sm:$0xf]
          %v784 = vld [vmem:[%s3 + $0x38] sm:$0xf]
          %v785 = vld [vmem:[%s3 + $0x3c] sm:$0xf]
          %v790 = vunpack.c.l.b16 %v770
          %v791 = vunpack.c.l.b16 %v771
          %v792 = vunpack.c.l.b16 %v772
          %v793 = vunpack.c.l.b16 %v773
          %v794 = vpack.c.b16 %v791, %v790
          %v795 = vpack.c.b16 %v793, %v792
          %796 = vrot.lane.b32.xlu0 %v794, 120
          %v797 = vpop.permute.xlu0 %796
          %798 = vrot.lane.b32.xlu0 %v795, 120
          %v799 = vpop.permute.xlu0 %798
          %v803 = vsel %vm745, %v769, 0
          %805 = vmatprep.subr.bf16.mxu0 0
          %806 = vmatpush1.bf16.msra.mxu0 %v797
          %807 = vmatprep.subr.bf16.mxu0 0
          %808 = vmatpush1.bf16.msra.mxu0 %v799
          %809 = vmatprep.subr.bf16.mxu0 0
          %810 = vmatpush1.bf16.msra.mxu0 0
          %811 = vmatprep.subr.bf16.mxu0 0
          %812 = vmatpush1.bf16.msra.mxu0 0
          %813 = vmatprep.subr.bf16.mxu0 0
          %814 = vmatpush1.bf16.msra.mxu0 0
          %815 = vmatprep.subr.bf16.mxu0 0
          %816 = vmatpush1.bf16.msra.mxu0 0
          %817 = vmatprep.subr.bf16.mxu0 0
          %818 = vmatpush1.bf16.msra.mxu0 0
          %819 = vmatprep.subr.bf16.mxu0 0
          %820 = vmatpush1.bf16.msra.mxu0 0
          %821 = vmatprep.subr.bf16.mxu0 0
          %822 = vmatpush1.bf16.msra.mxu0 0
          %823 = vmatprep.subr.bf16.mxu0 0
          %824 = vmatpush1.bf16.msra.mxu0 0
          %825 = vmatprep.subr.bf16.mxu0 0
          %826 = vmatpush1.bf16.msra.mxu0 0
          %827 = vmatprep.subr.bf16.mxu0 0
          %828 = vmatpush1.bf16.msra.mxu0 0
          %829 = vmatprep.subr.bf16.mxu0 0
          %830 = vmatpush1.bf16.msra.mxu0 0
          %831 = vmatprep.subr.bf16.mxu0 0
          %832 = vmatpush1.bf16.msra.mxu0 0
          %833 = vmatprep.subr.bf16.mxu0 0
          %834 = vmatpush1.bf16.msra.mxu0 0
          %835 = vmatprep.subr.bf16.mxu0 0
          %836 = vmatpush1.bf16.msra.mxu0 0
          %837 = vmatprep.mubr.bf16.mxu0 0
          %838 = vmatmul.mubr.bf16.gmra.mrb[0].mxu0 %v803
          %v839 = vpop.f32.mrb[0].mxu0
          %v840 = vadd.f32 0.0, %v839
          %v841 = vpop.f32.mrb[0].mxu0
          %v842 = vpop.f32.mrb[0].mxu0
          %v843 = vadd.f32 0.0, %v842
          %v844 = vpop.f32.mrb[0].mxu0
          %845 = vdwg.mxu0
          %v850 = vunpack.c.l.b16 %v774
          %v851 = vunpack.c.l.b16 %v775
          %v852 = vunpack.c.l.b16 %v776
          %v853 = vunpack.c.l.b16 %v777
          %v854 = vpack.c.b16 %v851, %v850
          %v855 = vpack.c.b16 %v853, %v852
          %856 = vrot.lane.b32.xlu0 %v854, 120
          %v857 = vpop.permute.xlu0 %856
          %858 = vrot.lane.b32.xlu0 %v855, 120
          %v859 = vpop.permute.xlu0 %858
          %862 = vmatprep.subr.bf16.mxu0 0
          %863 = vmatpush1.bf16.msra.mxu0 %v857
          %864 = vmatprep.subr.bf16.mxu0 0
          %865 = vmatpush1.bf16.msra.mxu0 %v859
          %866 = vmatprep.subr.bf16.mxu0 0
          %867 = vmatpush1.bf16.msra.mxu0 0
          %868 = vmatprep.subr.bf16.mxu0 0
          %869 = vmatpush1.bf16.msra.mxu0 0
          %870 = vmatprep.subr.bf16.mxu0 0
          %871 = vmatpush1.bf16.msra.mxu0 0
          %872 = vmatprep.subr.bf16.mxu0 0
          %873 = vmatpush1.bf16.msra.mxu0 0
          %874 = vmatprep.subr.bf16.mxu0 0
          %875 = vmatpush1.bf16.msra.mxu0 0
          %876 = vmatprep.subr.bf16.mxu0 0
          %877 = vmatpush1.bf16.msra.mxu0 0
          %878 = vmatprep.subr.bf16.mxu0 0
          %879 = vmatpush1.bf16.msra.mxu0 0
          %880 = vmatprep.subr.bf16.mxu0 0
          %881 = vmatpush1.bf16.msra.mxu0 0
          %882 = vmatprep.subr.bf16.mxu0 0
          %883 = vmatpush1.bf16.msra.mxu0 0
          %884 = vmatprep.subr.bf16.mxu0 0
          %885 = vmatpush1.bf16.msra.mxu0 0
          %886 = vmatprep.subr.bf16.mxu0 0
          %887 = vmatpush1.bf16.msra.mxu0 0
          %888 = vmatprep.subr.bf16.mxu0 0
          %889 = vmatpush1.bf16.msra.mxu0 0
          %890 = vmatprep.subr.bf16.mxu0 0
          %891 = vmatpush1.bf16.msra.mxu0 0
          %892 = vmatprep.subr.bf16.mxu0 0
          %893 = vmatpush1.bf16.msra.mxu0 0
          %894 = vmatprep.mubr.bf16.mxu0 0
          %895 = vmatmul.mubr.bf16.gmra.mrb[0].mxu0 %v803
          %v896 = vpop.f32.mrb[0].mxu0
          %v897 = vadd.f32 0.0, %v896
          %v898 = vpop.f32.mrb[0].mxu0
          %v899 = vpop.f32.mrb[0].mxu0
          %v900 = vadd.f32 0.0, %v899
          %v901 = vpop.f32.mrb[0].mxu0
          %902 = vdwg.mxu0
          %v907 = vunpack.c.l.b16 %v778
          %v908 = vunpack.c.l.b16 %v779
          %v909 = vunpack.c.l.b16 %v780
          %v910 = vunpack.c.l.b16 %v781
          %v911 = vpack.c.b16 %v908, %v907
          %v912 = vpack.c.b16 %v910, %v909
          %913 = vrot.lane.b32.xlu0 %v911, 120
          %v914 = vpop.permute.xlu0 %913
          %915 = vrot.lane.b32.xlu0 %v912, 120
          %v916 = vpop.permute.xlu0 %915
          %919 = vmatprep.subr.bf16.mxu0 0
          %920 = vmatpush1.bf16.msra.mxu0 %v914
          %921 = vmatprep.subr.bf16.mxu0 0
          %922 = vmatpush1.bf16.msra.mxu0 %v916
          %923 = vmatprep.subr.bf16.mxu0 0
          %924 = vmatpush1.bf16.msra.mxu0 0
          %925 = vmatprep.subr.bf16.mxu0 0
          %926 = vmatpush1.bf16.msra.mxu0 0
          %927 = vmatprep.subr.bf16.mxu0 0
          %928 = vmatpush1.bf16.msra.mxu0 0
          %929 = vmatprep.subr.bf16.mxu0 0
          %930 = vmatpush1.bf16.msra.mxu0 0
          %931 = vmatprep.subr.bf16.mxu0 0
          %932 = vmatpush1.bf16.msra.mxu0 0
          %933 = vmatprep.subr.bf16.mxu0 0
          %934 = vmatpush1.bf16.msra.mxu0 0
          %935 = vmatprep.subr.bf16.mxu0 0
          %936 = vmatpush1.bf16.msra.mxu0 0
          %937 = vmatprep.subr.bf16.mxu0 0
          %938 = vmatpush1.bf16.msra.mxu0 0
          %939 = vmatprep.subr.bf16.mxu0 0
          %940 = vmatpush1.bf16.msra.mxu0 0
          %941 = vmatprep.subr.bf16.mxu0 0
          %942 = vmatpush1.bf16.msra.mxu0 0
          %943 = vmatprep.subr.bf16.mxu0 0
          %944 = vmatpush1.bf16.msra.mxu0 0
          %945 = vmatprep.subr.bf16.mxu0 0
          %946 = vmatpush1.bf16.msra.mxu0 0
          %947 = vmatprep.subr.bf16.mxu0 0
          %948 = vmatpush1.bf16.msra.mxu0 0
          %949 = vmatprep.subr.bf16.mxu0 0
          %950 = vmatpush1.bf16.msra.mxu0 0
          %951 = vmatprep.mubr.bf16.mxu0 0
          %952 = vmatmul.mubr.bf16.gmra.mrb[0].mxu0 %v803
          %v953 = vpop.f32.mrb[0].mxu0
          %v954 = vadd.f32 0.0, %v953
          %v955 = vpop.f32.mrb[0].mxu0
          %v956 = vpop.f32.mrb[0].mxu0
          %v957 = vadd.f32 0.0, %v956
          %v958 = vpop.f32.mrb[0].mxu0
          %959 = vdwg.mxu0
          %v964 = vunpack.c.l.b16 %v782
          %v965 = vunpack.c.l.b16 %v783
          %v966 = vunpack.c.l.b16 %v784
          %v967 = vunpack.c.l.b16 %v785
          %v968 = vpack.c.b16 %v965, %v964
          %v969 = vpack.c.b16 %v967, %v966
          %970 = vrot.lane.b32.xlu0 %v968, 120
          %v971 = vpop.permute.xlu0 %970
          %972 = vrot.lane.b32.xlu0 %v969, 120
          %v973 = vpop.permute.xlu0 %972
          %976 = vmatprep.subr.bf16.mxu0 0
          %977 = vmatpush1.bf16.msra.mxu0 %v971
          %978 = vmatprep.subr.bf16.mxu0 0
          %979 = vmatpush1.bf16.msra.mxu0 %v973
          %980 = vmatprep.subr.bf16.mxu0 0
          %981 = vmatpush1.bf16.msra.mxu0 0
          %982 = vmatprep.subr.bf16.mxu0 0
          %983 = vmatpush1.bf16.msra.mxu0 0
          %984 = vmatprep.subr.bf16.mxu0 0
          %985 = vmatpush1.bf16.msra.mxu0 0
          %986 = vmatprep.subr.bf16.mxu0 0
          %987 = vmatpush1.bf16.msra.mxu0 0
          %988 = vmatprep.subr.bf16.mxu0 0
          %989 = vmatpush1.bf16.msra.mxu0 0
          %990 = vmatprep.subr.bf16.mxu0 0
          %991 = vmatpush1.bf16.msra.mxu0 0
          %992 = vmatprep.subr.bf16.mxu0 0
          %993 = vmatpush1.bf16.msra.mxu0 0
          %994 = vmatprep.subr.bf16.mxu0 0
          %995 = vmatpush1.bf16.msra.mxu0 0
          %996 = vmatprep.subr.bf16.mxu0 0
          %997 = vmatpush1.bf16.msra.mxu0 0
          %998 = vmatprep.subr.bf16.mxu0 0
          %999 = vmatpush1.bf16.msra.mxu0 0
          %1000 = vmatprep.subr.bf16.mxu0 0
          %1001 = vmatpush1.bf16.msra.mxu0 0
          %1002 = vmatprep.subr.bf16.mxu0 0
          %1003 = vmatpush1.bf16.msra.mxu0 0
          %1004 = vmatprep.subr.bf16.mxu0 0
          %1005 = vmatpush1.bf16.msra.mxu0 0
          %1006 = vmatprep.subr.bf16.mxu0 0
          %1007 = vmatpush1.bf16.msra.mxu0 0
          %1008 = vmatprep.mubr.bf16.mxu0 0
          %1009 = vmatmul.mubr.bf16.gmra.mrb[0].mxu0 %v803
          %v1010 = vpop.f32.mrb[0].mxu0
          %v1011 = vadd.f32 0.0, %v1010
          %v1012 = vpop.f32.mrb[0].mxu0
          %v1013 = vpop.f32.mrb[0].mxu0
          %v1014 = vadd.f32 0.0, %v1013
          %v1015 = vpop.f32.mrb[0].mxu0
          %1016 = vdwg.mxu0
          %v1017 = vpack.c.bf16 %v843, %v840
          %v1018 = vpack.c.bf16 %v900, %v897
          %v1019 = vpack.c.bf16 %v957, %v954
          %v1020 = vpack.c.bf16 %v1014, %v1011
          %v1021 = vld [vmem:[%s3] sm:$0xf]
          %v1022 = vld [vmem:[%s3 + $0x4] sm:$0xf]
          %v1023 = vld [vmem:[%s3 + $0x8] sm:$0xf]
          %v1024 = vld [vmem:[%s3 + $0xc] sm:$0xf]
          %v1025 = vld [vmem:[%s3 + $0x10] sm:$0xf]
          %v1026 = vld [vmem:[%s3 + $0x14] sm:$0xf]
          %v1027 = vld [vmem:[%s3 + $0x18] sm:$0xf]
          %v1028 = vld [vmem:[%s3 + $0x1c] sm:$0xf]
          %v1029 = vld [vmem:[%s3 + $0x20] sm:$0xf]
          %v1030 = vld [vmem:[%s3 + $0x24] sm:$0xf]
          %v1031 = vld [vmem:[%s3 + $0x28] sm:$0xf]
          %v1032 = vld [vmem:[%s3 + $0x2c] sm:$0xf]
          %v1033 = vld [vmem:[%s3 + $0x30] sm:$0xf]
          %v1034 = vld [vmem:[%s3 + $0x34] sm:$0xf]
          %v1035 = vld [vmem:[%s3 + $0x38] sm:$0xf]
          %v1036 = vld [vmem:[%s3 + $0x3c] sm:$0xf]
          %v1041 = vunpack.c.l.b16 %v1021
          %v1042 = vunpack.c.l.b16 %v1022
          %v1043 = vunpack.c.l.b16 %v1023
          %v1044 = vunpack.c.l.b16 %v1024
          %v1045 = vpack.c.b16 %v1042, %v1041
          %v1046 = vpack.c.b16 %v1044, %v1043
          %1047 = vrot.lane.b32.xlu0 %v1045, 112
          %v1048 = vpop.permute.xlu0 %1047
          %1049 = vrot.lane.b32.xlu0 %v1046, 112
          %v1050 = vpop.permute.xlu0 %1049
          %1053 = vmatprep.subr.bf16.mxu0 0
          %1054 = vmatpush1.bf16.msra.mxu0 %v1048
          %1055 = vmatprep.subr.bf16.mxu0 0
          %1056 = vmatpush1.bf16.msra.mxu0 %v1050
          %1057 = vmatprep.subr.bf16.mxu0 0
          %1058 = vmatpush1.bf16.msra.mxu0 0
          %1059 = vmatprep.subr.bf16.mxu0 0
          %1060 = vmatpush1.bf16.msra.mxu0 0
          %1061 = vmatprep.subr.bf16.mxu0 0
          %1062 = vmatpush1.bf16.msra.mxu0 0
          %1063 = vmatprep.subr.bf16.mxu0 0
          %1064 = vmatpush1.bf16.msra.mxu0 0
          %1065 = vmatprep.subr.bf16.mxu0 0
          %1066 = vmatpush1.bf16.msra.mxu0 0
          %1067 = vmatprep.subr.bf16.mxu0 0
          %1068 = vmatpush1.bf16.msra.mxu0 0
          %1069 = vmatprep.subr.bf16.mxu0 0
          %1070 = vmatpush1.bf16.msra.mxu0 0
          %1071 = vmatprep.subr.bf16.mxu0 0
          %1072 = vmatpush1.bf16.msra.mxu0 0
          %1073 = vmatprep.subr.bf16.mxu0 0
          %1074 = vmatpush1.bf16.msra.mxu0 0
          %1075 = vmatprep.subr.bf16.mxu0 0
          %1076 = vmatpush1.bf16.msra.mxu0 0
          %1077 = vmatprep.subr.bf16.mxu0 0
          %1078 = vmatpush1.bf16.msra.mxu0 0
          %1079 = vmatprep.subr.bf16.mxu0 0
          %1080 = vmatpush1.bf16.msra.mxu0 0
          %1081 = vmatprep.subr.bf16.mxu0 0
          %1082 = vmatpush1.bf16.msra.mxu0 0
          %1083 = vmatprep.subr.bf16.mxu0 0
          %1084 = vmatpush1.bf16.msra.mxu0 0
          %1085 = vmatprep.mubr.bf16.mxu0 0
          %1086 = vmatmul.mubr.bf16.gmra.mrb[0].mxu0 %v803
          %v1087 = vpop.f32.mrb[0].mxu0
          %v1088 = vadd.f32 0.0, %v1087
          %v1089 = vpop.f32.mrb[0].mxu0
          %v1090 = vpop.f32.mrb[0].mxu0
          %v1091 = vadd.f32 0.0, %v1090
          %v1092 = vpop.f32.mrb[0].mxu0
          %1093 = vdwg.mxu0
          %v1098 = vunpack.c.l.b16 %v1025
          %v1099 = vunpack.c.l.b16 %v1026
          %v1100 = vunpack.c.l.b16 %v1027
          %v1101 = vunpack.c.l.b16 %v1028
          %v1102 = vpack.c.b16 %v1099, %v1098
          %v1103 = vpack.c.b16 %v1101, %v1100
          %1104 = vrot.lane.b32.xlu0 %v1102, 112
          %v1105 = vpop.permute.xlu0 %1104
          %1106 = vrot.lane.b32.xlu0 %v1103, 112
          %v1107 = vpop.permute.xlu0 %1106
          %1110 = vmatprep.subr.bf16.mxu0 0
          %1111 = vmatpush1.bf16.msra.mxu0 %v1105
          %1112 = vmatprep.subr.bf16.mxu0 0
          %1113 = vmatpush1.bf16.msra.mxu0 %v1107
          %1114 = vmatprep.subr.bf16.mxu0 0
          %1115 = vmatpush1.bf16.msra.mxu0 0
          %1116 = vmatprep.subr.bf16.mxu0 0
          %1117 = vmatpush1.bf16.msra.mxu0 0
          %1118 = vmatprep.subr.bf16.mxu0 0
          %1119 = vmatpush1.bf16.msra.mxu0 0
          %1120 = vmatprep.subr.bf16.mxu0 0
          %1121 = vmatpush1.bf16.msra.mxu0 0
          %1122 = vmatprep.subr.bf16.mxu0 0
          %1123 = vmatpush1.bf16.msra.mxu0 0
          %1124 = vmatprep.subr.bf16.mxu0 0
          %1125 = vmatpush1.bf16.msra.mxu0 0
          %1126 = vmatprep.subr.bf16.mxu0 0
          %1127 = vmatpush1.bf16.msra.mxu0 0
          %1128 = vmatprep.subr.bf16.mxu0 0
          %1129 = vmatpush1.bf16.msra.mxu0 0
          %1130 = vmatprep.subr.bf16.mxu0 0
          %1131 = vmatpush1.bf16.msra.mxu0 0
          %1132 = vmatprep.subr.bf16.mxu0 0
          %1133 = vmatpush1.bf16.msra.mxu0 0
          %1134 = vmatprep.subr.bf16.mxu0 0
          %1135 = vmatpush1.bf16.msra.mxu0 0
          %1136 = vmatprep.subr.bf16.mxu0 0
          %1137 = vmatpush1.bf16.msra.mxu0 0
          %1138 = vmatprep.subr.bf16.mxu0 0
          %1139 = vmatpush1.bf16.msra.mxu0 0
          %1140 = vmatprep.subr.bf16.mxu0 0
          %1141 = vmatpush1.bf16.msra.mxu0 0
          %1142 = vmatprep.mubr.bf16.mxu0 0
          %1143 = vmatmul.mubr.bf16.gmra.mrb[0].mxu0 %v803
          %v1144 = vpop.f32.mrb[0].mxu0
          %v1145 = vadd.f32 0.0, %v1144
          %v1146 = vpop.f32.mrb[0].mxu0
          %v1147 = vpop.f32.mrb[0].mxu0
          %v1148 = vadd.f32 0.0, %v1147
          %v1149 = vpop.f32.mrb[0].mxu0
          %1150 = vdwg.mxu0
          %v1155 = vunpack.c.l.b16 %v1029
          %v1156 = vunpack.c.l.b16 %v1030
          %v1157 = vunpack.c.l.b16 %v1031
          %v1158 = vunpack.c.l.b16 %v1032
          %v1159 = vpack.c.b16 %v1156, %v1155
          %v1160 = vpack.c.b16 %v1158, %v1157
          %1161 = vrot.lane.b32.xlu0 %v1159, 112
          %v1162 = vpop.permute.xlu0 %1161
          %1163 = vrot.lane.b32.xlu0 %v1160, 112
          %v1164 = vpop.permute.xlu0 %1163
          %1167 = vmatprep.subr.bf16.mxu0 0
          %1168 = vmatpush1.bf16.msra.mxu0 %v1162
          %1169 = vmatprep.subr.bf16.mxu0 0
          %1170 = vmatpush1.bf16.msra.mxu0 %v1164
          %1171 = vmatprep.subr.bf16.mxu0 0
          %1172 = vmatpush1.bf16.msra.mxu0 0
          %1173 = vmatprep.subr.bf16.mxu0 0
          %1174 = vmatpush1.bf16.msra.mxu0 0
          %1175 = vmatprep.subr.bf16.mxu0 0
          %1176 = vmatpush1.bf16.msra.mxu0 0
          %1177 = vmatprep.subr.bf16.mxu0 0
          %1178 = vmatpush1.bf16.msra.mxu0 0
          %1179 = vmatprep.subr.bf16.mxu0 0
          %1180 = vmatpush1.bf16.msra.mxu0 0
          %1181 = vmatprep.subr.bf16.mxu0 0
          %1182 = vmatpush1.bf16.msra.mxu0 0
          %1183 = vmatprep.subr.bf16.mxu0 0
          %1184 = vmatpush1.bf16.msra.mxu0 0
          %1185 = vmatprep.subr.bf16.mxu0 0
          %1186 = vmatpush1.bf16.msra.mxu0 0
          %1187 = vmatprep.subr.bf16.mxu0 0
          %1188 = vmatpush1.bf16.msra.mxu0 0
          %1189 = vmatprep.subr.bf16.mxu0 0
          %1190 = vmatpush1.bf16.msra.mxu0 0
          %1191 = vmatprep.subr.bf16.mxu0 0
          %1192 = vmatpush1.bf16.msra.mxu0 0
          %1193 = vmatprep.subr.bf16.mxu0 0
          %1194 = vmatpush1.bf16.msra.mxu0 0
          %1195 = vmatprep.subr.bf16.mxu0 0
          %1196 = vmatpush1.bf16.msra.mxu0 0
          %1197 = vmatprep.subr.bf16.mxu0 0
          %1198 = vmatpush1.bf16.msra.mxu0 0
          %1199 = vmatprep.mubr.bf16.mxu0 0
          %1200 = vmatmul.mubr.bf16.gmra.mrb[0].mxu0 %v803
          %v1201 = vpop.f32.mrb[0].mxu0
          %v1202 = vadd.f32 0.0, %v1201
          %v1203 = vpop.f32.mrb[0].mxu0
          %v1204 = vpop.f32.mrb[0].mxu0
          %v1205 = vadd.f32 0.0, %v1204
          %v1206 = vpop.f32.mrb[0].mxu0
          %1207 = vdwg.mxu0
          %v1212 = vunpack.c.l.b16 %v1033
          %v1213 = vunpack.c.l.b16 %v1034
          %v1214 = vunpack.c.l.b16 %v1035
          %v1215 = vunpack.c.l.b16 %v1036
          %v1216 = vpack.c.b16 %v1213, %v1212
          %v1217 = vpack.c.b16 %v1215, %v1214
          %1218 = vrot.lane.b32.xlu0 %v1216, 112
          %v1219 = vpop.permute.xlu0 %1218
          %1220 = vrot.lane.b32.xlu0 %v1217, 112
          %v1221 = vpop.permute.xlu0 %1220
          %1224 = vmatprep.subr.bf16.mxu0 0
          %1225 = vmatpush1.bf16.msra.mxu0 %v1219
          %1226 = vmatprep.subr.bf16.mxu0 0
          %1227 = vmatpush1.bf16.msra.mxu0 %v1221
          %1228 = vmatprep.subr.bf16.mxu0 0
          %1229 = vmatpush1.bf16.msra.mxu0 0
          %1230 = vmatprep.subr.bf16.mxu0 0
          %1231 = vmatpush1.bf16.msra.mxu0 0
          %1232 = vmatprep.subr.bf16.mxu0 0
          %1233 = vmatpush1.bf16.msra.mxu0 0
          %1234 = vmatprep.subr.bf16.mxu0 0
          %1235 = vmatpush1.bf16.msra.mxu0 0
          %1236 = vmatprep.subr.bf16.mxu0 0
          %1237 = vmatpush1.bf16.msra.mxu0 0
          %1238 = vmatprep.subr.bf16.mxu0 0
          %1239 = vmatpush1.bf16.msra.mxu0 0
          %1240 = vmatprep.subr.bf16.mxu0 0
          %1241 = vmatpush1.bf16.msra.mxu0 0
          %1242 = vmatprep.subr.bf16.mxu0 0
          %1243 = vmatpush1.bf16.msra.mxu0 0
          %1244 = vmatprep.subr.bf16.mxu0 0
          %1245 = vmatpush1.bf16.msra.mxu0 0
          %1246 = vmatprep.subr.bf16.mxu0 0
          %1247 = vmatpush1.bf16.msra.mxu0 0
          %1248 = vmatprep.subr.bf16.mxu0 0
          %1249 = vmatpush1.bf16.msra.mxu0 0
          %1250 = vmatprep.subr.bf16.mxu0 0
          %1251 = vmatpush1.bf16.msra.mxu0 0
          %1252 = vmatprep.subr.bf16.mxu0 0
          %1253 = vmatpush1.bf16.msra.mxu0 0
          %1254 = vmatprep.subr.bf16.mxu0 0
          %1255 = vmatpush1.bf16.msra.mxu0 0
          %1256 = vmatprep.mubr.bf16.mxu0 0
          %1257 = vmatmul.mubr.bf16.gmra.mrb[0].mxu0 %v803
          %v1258 = vpop.f32.mrb[0].mxu0
          %v1259 = vadd.f32 0.0, %v1258
          %v1260 = vpop.f32.mrb[0].mxu0
          %v1261 = vpop.f32.mrb[0].mxu0
          %v1262 = vadd.f32 0.0, %v1261
          %v1263 = vpop.f32.mrb[0].mxu0
          %1264 = vdwg.mxu0
          %v1265 = vpack.c.bf16 %v1091, %v1088
          %v1266 = vpack.c.bf16 %v1148, %v1145
          %v1267 = vpack.c.bf16 %v1205, %v1202
          %v1268 = vpack.c.bf16 %v1262, %v1259
          %v1269 = vld [vmem:[#allocation2] sm:$0xff]
          %v1270 = vld [vmem:[#allocation2 + $0x8] sm:$0xff]
          %v1271 = vld [vmem:[#allocation2 + $0x10] sm:$0xff]
          %v1272 = vld [vmem:[#allocation2 + $0x18] sm:$0xff]
          %vm1273 = vcmask 64512
          %v1275 = vsel %vm1273, %v1269, 0
          %v1278 = vsel %vm1273, %v1017, 0
          %1280 = vmatprep.subr.bf16.mxu0 0
          %1281 = vmatpush1.bf16.xpose.msra.mxu0 %v1278
          %1282 = vmatprep.subr.bf16.mxu0 0
          %1283 = vmatpush1.bf16.xpose.msra.mxu0 0
          %1284 = vmatprep.subr.bf16.mxu0 0
          %1285 = vmatpush1.bf16.xpose.msra.mxu0 0
          %1286 = vmatprep.subr.bf16.mxu0 0
          %1287 = vmatpush1.bf16.xpose.msra.mxu0 0
          %1288 = vmatprep.subr.bf16.mxu0 0
          %1289 = vmatpush1.bf16.xpose.msra.mxu0 0
          %1290 = vmatprep.subr.bf16.mxu0 0
          %1291 = vmatpush1.bf16.xpose.msra.mxu0 0
          %1292 = vmatprep.subr.bf16.mxu0 0
          %1293 = vmatpush1.bf16.xpose.msra.mxu0 0
          %1294 = vmatprep.subr.bf16.mxu0 0
          %1295 = vmatpush1.bf16.xpose.msra.mxu0 0
          %1296 = vmatprep.subr.bf16.mxu0 0
          %1297 = vmatpush1.bf16.xpose.msra.mxu0 0
          %1298 = vmatprep.subr.bf16.mxu0 0
          %1299 = vmatpush1.bf16.xpose.msra.mxu0 0
          %1300 = vmatprep.subr.bf16.mxu0 0
          %1301 = vmatpush1.bf16.xpose.msra.mxu0 0
          %1302 = vmatprep.subr.bf16.mxu0 0
          %1303 = vmatpush1.bf16.xpose.msra.mxu0 0
          %1304 = vmatprep.subr.bf16.mxu0 0
          %1305 = vmatpush1.bf16.xpose.msra.mxu0 0
          %1306 = vmatprep.subr.bf16.mxu0 0
          %1307 = vmatpush1.bf16.xpose.msra.mxu0 0
          %1308 = vmatprep.subr.bf16.mxu0 0
          %1309 = vmatpush1.bf16.xpose.msra.mxu0 0
          %1310 = vmatprep.subr.bf16.mxu0 0
          %1311 = vmatpush1.bf16.xpose.msra.mxu0 0
          %1312 = vmatprep.mubr.bf16.mxu0 0
          %1313 = vmatmul.mubr.bf16.gmra.mrb[0].mxu0 %v1275
          %v1314 = vpop.f32.mrb[0].mxu0
          %v1315 = vadd.f32 0.0, %v1314
          %v1316 = vpop.f32.mrb[0].mxu0
          %v1317 = vpop.f32.mrb[0].mxu0
          %v1318 = vadd.f32 0.0, %v1317
          %v1319 = vpop.f32.mrb[0].mxu0
          %1320 = vdwg.mxu0
          %v1322 = vsel %vm1273, %v1270, 0
          %v1325 = vsel %vm1273, %v1018, 0
          %1327 = vmatprep.subr.bf16.mxu0 0
          %1328 = vmatpush1.bf16.xpose.msra.mxu0 %v1325
          %1329 = vmatprep.subr.bf16.mxu0 0
          %1330 = vmatpush1.bf16.xpose.msra.mxu0 0
          %1331 = vmatprep.subr.bf16.mxu0 0
          %1332 = vmatpush1.bf16.xpose.msra.mxu0 0
          %1333 = vmatprep.subr.bf16.mxu0 0
          %1334 = vmatpush1.bf16.xpose.msra.mxu0 0
          %1335 = vmatprep.subr.bf16.mxu0 0
          %1336 = vmatpush1.bf16.xpose.msra.mxu0 0
          %1337 = vmatprep.subr.bf16.mxu0 0
          %1338 = vmatpush1.bf16.xpose.msra.mxu0 0
          %1339 = vmatprep.subr.bf16.mxu0 0
          %1340 = vmatpush1.bf16.xpose.msra.mxu0 0
          %1341 = vmatprep.subr.bf16.mxu0 0
          %1342 = vmatpush1.bf16.xpose.msra.mxu0 0
          %1343 = vmatprep.subr.bf16.mxu0 0
          %1344 = vmatpush1.bf16.xpose.msra.mxu0 0
          %1345 = vmatprep.subr.bf16.mxu0 0
          %1346 = vmatpush1.bf16.xpose.msra.mxu0 0
          %1347 = vmatprep.subr.bf16.mxu0 0
          %1348 = vmatpush1.bf16.xpose.msra.mxu0 0
          %1349 = vmatprep.subr.bf16.mxu0 0
          %1350 = vmatpush1.bf16.xpose.msra.mxu0 0
          %1351 = vmatprep.subr.bf16.mxu0 0
          %1352 = vmatpush1.bf16.xpose.msra.mxu0 0
          %1353 = vmatprep.subr.bf16.mxu0 0
          %1354 = vmatpush1.bf16.xpose.msra.mxu0 0
          %1355 = vmatprep.subr.bf16.mxu0 0
          %1356 = vmatpush1.bf16.xpose.msra.mxu0 0
          %1357 = vmatprep.subr.bf16.mxu0 0
          %1358 = vmatpush1.bf16.xpose.msra.mxu0 0
          %1359 = vmatprep.mubr.bf16.mxu0 0
          %1360 = vmatmul.mubr.bf16.gmra.mrb[0].mxu0 %v1322
          %v1361 = vpop.f32.mrb[0].mxu0
          %v1362 = vadd.f32 0.0, %v1361
          %v1363 = vpop.f32.mrb[0].mxu0
          %v1364 = vpop.f32.mrb[0].mxu0
          %v1365 = vadd.f32 0.0, %v1364
          %v1366 = vpop.f32.mrb[0].mxu0
          %1367 = vdwg.mxu0
          %v1369 = vsel %vm1273, %v1271, 0
          %v1372 = vsel %vm1273, %v1019, 0
          %1374 = vmatprep.subr.bf16.mxu0 0
          %1375 = vmatpush1.bf16.xpose.msra.mxu0 %v1372
          %1376 = vmatprep.subr.bf16.mxu0 0
          %1377 = vmatpush1.bf16.xpose.msra.mxu0 0
          %1378 = vmatprep.subr.bf16.mxu0 0
          %1379 = vmatpush1.bf16.xpose.msra.mxu0 0
          %1380 = vmatprep.subr.bf16.mxu0 0
          %1381 = vmatpush1.bf16.xpose.msra.mxu0 0
          %1382 = vmatprep.subr.bf16.mxu0 0
          %1383 = vmatpush1.bf16.xpose.msra.mxu0 0
          %1384 = vmatprep.subr.bf16.mxu0 0
          %1385 = vmatpush1.bf16.xpose.msra.mxu0 0
          %1386 = vmatprep.subr.bf16.mxu0 0
          %1387 = vmatpush1.bf16.xpose.msra.mxu0 0
          %1388 = vmatprep.subr.bf16.mxu0 0
          %1389 = vmatpush1.bf16.xpose.msra.mxu0 0
          %1390 = vmatprep.subr.bf16.mxu0 0
          %1391 = vmatpush1.bf16.xpose.msra.mxu0 0
          %1392 = vmatprep.subr.bf16.mxu0 0
          %1393 = vmatpush1.bf16.xpose.msra.mxu0 0
          %1394 = vmatprep.subr.bf16.mxu0 0
          %1395 = vmatpush1.bf16.xpose.msra.mxu0 0
          %1396 = vmatprep.subr.bf16.mxu0 0
          %1397 = vmatpush1.bf16.xpose.msra.mxu0 0
          %1398 = vmatprep.subr.bf16.mxu0 0
          %1399 = vmatpush1.bf16.xpose.msra.mxu0 0
          %1400 = vmatprep.subr.bf16.mxu0 0
          %1401 = vmatpush1.bf16.xpose.msra.mxu0 0
          %1402 = vmatprep.subr.bf16.mxu0 0
          %1403 = vmatpush1.bf16.xpose.msra.mxu0 0
          %1404 = vmatprep.subr.bf16.mxu0 0
          %1405 = vmatpush1.bf16.xpose.msra.mxu0 0
          %1406 = vmatprep.mubr.bf16.mxu0 0
          %1407 = vmatmul.mubr.bf16.gmra.mrb[0].mxu0 %v1369
          %v1408 = vpop.f32.mrb[0].mxu0
          %v1409 = vadd.f32 0.0, %v1408
          %v1410 = vpop.f32.mrb[0].mxu0
          %v1411 = vpop.f32.mrb[0].mxu0
          %v1412 = vadd.f32 0.0, %v1411
          %v1413 = vpop.f32.mrb[0].mxu0
          %1414 = vdwg.mxu0
          %v1416 = vsel %vm1273, %v1272, 0
          %v1419 = vsel %vm1273, %v1020, 0
          %1421 = vmatprep.subr.bf16.mxu0 0
          %1422 = vmatpush1.bf16.xpose.msra.mxu0 %v1419
          %1423 = vmatprep.subr.bf16.mxu0 0
          %1424 = vmatpush1.bf16.xpose.msra.mxu0 0
          %1425 = vmatprep.subr.bf16.mxu0 0
          %1426 = vmatpush1.bf16.xpose.msra.mxu0 0
          %1427 = vmatprep.subr.bf16.mxu0 0
          %1428 = vmatpush1.bf16.xpose.msra.mxu0 0
          %1429 = vmatprep.subr.bf16.mxu0 0
          %1430 = vmatpush1.bf16.xpose.msra.mxu0 0
          %1431 = vmatprep.subr.bf16.mxu0 0
          %1432 = vmatpush1.bf16.xpose.msra.mxu0 0
          %1433 = vmatprep.subr.bf16.mxu0 0
          %1434 = vmatpush1.bf16.xpose.msra.mxu0 0
          %1435 = vmatprep.subr.bf16.mxu0 0
          %1436 = vmatpush1.bf16.xpose.msra.mxu0 0
          %1437 = vmatprep.subr.bf16.mxu0 0
          %1438 = vmatpush1.bf16.xpose.msra.mxu0 0
          %1439 = vmatprep.subr.bf16.mxu0 0
          %1440 = vmatpush1.bf16.xpose.msra.mxu0 0
          %1441 = vmatprep.subr.bf16.mxu0 0
          %1442 = vmatpush1.bf16.xpose.msra.mxu0 0
          %1443 = vmatprep.subr.bf16.mxu0 0
          %1444 = vmatpush1.bf16.xpose.msra.mxu0 0
          %1445 = vmatprep.subr.bf16.mxu0 0
          %1446 = vmatpush1.bf16.xpose.msra.mxu0 0
          %1447 = vmatprep.subr.bf16.mxu0 0
          %1448 = vmatpush1.bf16.xpose.msra.mxu0 0
          %1449 = vmatprep.subr.bf16.mxu0 0
          %1450 = vmatpush1.bf16.xpose.msra.mxu0 0
          %1451 = vmatprep.subr.bf16.mxu0 0
          %1452 = vmatpush1.bf16.xpose.msra.mxu0 0
          %1453 = vmatprep.mubr.bf16.mxu0 0
          %1454 = vmatmul.mubr.bf16.gmra.mrb[0].mxu0 %v1416
          %v1455 = vpop.f32.mrb[0].mxu0
          %v1456 = vadd.f32 0.0, %v1455
          %v1457 = vpop.f32.mrb[0].mxu0
          %v1458 = vpop.f32.mrb[0].mxu0
          %v1459 = vadd.f32 0.0, %v1458
          %v1460 = vpop.f32.mrb[0].mxu0
          %1461 = vdwg.mxu0
          %v1462 = vlaneseq
          %v1463 = vshrl.u32 %v1462, 7
          %v1464 = vadd.s32 %v1463, 8
          %v1465 = vstv %s732
          %v1466 = vadd.s32 %v1465, %v1463
          %v1467 = vadd.s32 %v1465, %v1464
          %v1468 = vlaneseq
          %v1469 = vand.u32 %v1468, 127
          %v1470 = vstv %s731
          %v1471 = vadd.s32 %v1470, %v1469
          %vm1472 = vcmp.ge.s32.totalorder %v1466, %v1471
          %vm1473 = vcmp.ge.s32.totalorder %v1467, %v1471
          %v1474 = vsel %vm1472, %v1315, -1e+30
          %v1475 = vsel %vm1473, %v1318, -1e+30
          %v1476 = vsel %vm1472, %v1362, -1e+30
          %v1477 = vsel %vm1473, %v1365, -1e+30
          %v1478 = vsel %vm1472, %v1409, -1e+30
          %v1479 = vsel %vm1473, %v1412, -1e+30
          %v1480 = vsel %vm1472, %v1456, -1e+30
          %v1481 = vsel %vm1473, %v1459, -1e+30
          %v1482 = vld [vmem:[#allocation4] sm:$0xff]
          %v1483 = vld [vmem:[#allocation4 + $0x8] sm:$0xff]
          %v1484 = vld [vmem:[#allocation4 + $0x10] sm:$0xff]
          %v1485 = vld [vmem:[#allocation4 + $0x18] sm:$0xff]
          %v1486 = vld [vmem:[#allocation4 + $0x20] sm:$0xff]
          %v1487 = vld [vmem:[#allocation4 + $0x28] sm:$0xff]
          %v1488 = vld [vmem:[#allocation4 + $0x30] sm:$0xff]
          %v1489 = vld [vmem:[#allocation4 + $0x38] sm:$0xff]
          %vm1490 = vcmask 130048
          %v1491 = vsel %vm1490, %v1474, -inf
          %1492 = vmax.xlane.f32.xlu0 %v1491
          %v1493 = vpop.xlane.xlu0 %1492
          %v1494 = vsel %vm1490, %v1475, -inf
          %1495 = vmax.xlane.f32.xlu0 %v1494
          %v1496 = vpop.xlane.xlu0 %1495
          %v1497 = vsel %vm1490, %v1476, -inf
          %1498 = vmax.xlane.f32.xlu0 %v1497
          %v1499 = vpop.xlane.xlu0 %1498
          %v1500 = vsel %vm1490, %v1477, -inf
          %1501 = vmax.xlane.f32.xlu0 %v1500
          %v1502 = vpop.xlane.xlu0 %1501
          %v1503 = vsel %vm1490, %v1478, -inf
          %1504 = vmax.xlane.f32.xlu0 %v1503
          %v1505 = vpop.xlane.xlu0 %1504
          %v1506 = vsel %vm1490, %v1479, -inf
          %1507 = vmax.xlane.f32.xlu0 %v1506
          %v1508 = vpop.xlane.xlu0 %1507
          %v1509 = vsel %vm1490, %v1480, -inf
          %1510 = vmax.xlane.f32.xlu0 %v1509
          %v1511 = vpop.xlane.xlu0 %1510
          %v1512 = vsel %vm1490, %v1481, -inf
          %1513 = vmax.xlane.f32.xlu0 %v1512
          %v1514 = vpop.xlane.xlu0 %1513
          %v1515 = vmax.f32 %v1482, %v1493
          %v1516 = vmax.f32 %v1483, %v1496
          %v1517 = vmax.f32 %v1484, %v1499
          %v1518 = vmax.f32 %v1485, %v1502
          %v1519 = vmax.f32 %v1486, %v1505
          %v1520 = vmax.f32 %v1487, %v1508
          %v1521 = vmax.f32 %v1488, %v1511
          %v1522 = vmax.f32 %v1489, %v1514
          %v1523 = vsub.f32 %v1482, %v1515
          %v1524 = vsub.f32 %v1483, %v1516
          %v1525 = vsub.f32 %v1484, %v1517
          %v1526 = vsub.f32 %v1485, %v1518
          %v1527 = vsub.f32 %v1486, %v1519
          %v1528 = vsub.f32 %v1487, %v1520
          %v1529 = vsub.f32 %v1488, %v1521
          %v1530 = vsub.f32 %v1489, %v1522
          %v1531 = vmul.f32 %v1523, 1.442695
          %v1532 = vpow.pop %v1531
          %v1533 = vmul.f32 %v1524, 1.442695
          %v1534 = vpow.pop %v1533
          %v1535 = vmul.f32 %v1525, 1.442695
          %v1536 = vpow.pop %v1535
          %v1537 = vmul.f32 %v1526, 1.442695
          %v1538 = vpow.pop %v1537
          %v1539 = vmul.f32 %v1527, 1.442695
          %v1540 = vpow.pop %v1539
          %v1541 = vmul.f32 %v1528, 1.442695
          %v1542 = vpow.pop %v1541
          %v1543 = vmul.f32 %v1529, 1.442695
          %v1544 = vpow.pop %v1543
          %v1545 = vmul.f32 %v1530, 1.442695
          %v1546 = vpow.pop %v1545
          %1548 = vset.pattern.permute.xlu0 0
          %1549 = vperm.xlu0 %1548, %v1515
          %v1550 = vpop.permute.xlu0 %1549
          %1553 = vset.pattern.permute.xlu0 0
          %1554 = vperm.xlu0 %1553, %v1516
          %v1555 = vpop.permute.xlu0 %1554
          %1558 = vset.pattern.permute.xlu0 0
          %1559 = vperm.xlu0 %1558, %v1517
          %v1560 = vpop.permute.xlu0 %1559
          %1563 = vset.pattern.permute.xlu0 0
          %1564 = vperm.xlu0 %1563, %v1518
          %v1565 = vpop.permute.xlu0 %1564
          %1568 = vset.pattern.permute.xlu0 0
          %1569 = vperm.xlu0 %1568, %v1519
          %v1570 = vpop.permute.xlu0 %1569
          %1573 = vset.pattern.permute.xlu0 0
          %1574 = vperm.xlu0 %1573, %v1520
          %v1575 = vpop.permute.xlu0 %1574
          %1578 = vset.pattern.permute.xlu0 0
          %1579 = vperm.xlu0 %1578, %v1521
          %v1580 = vpop.permute.xlu0 %1579
          %1583 = vset.pattern.permute.xlu0 0
          %1584 = vperm.xlu0 %1583, %v1522
          %v1585 = vpop.permute.xlu0 %1584
          %v1587 = vsub.f32 %v1474, %v1550
          %v1588 = vsub.f32 %v1475, %v1555
          %v1589 = vsub.f32 %v1476, %v1560
          %v1590 = vsub.f32 %v1477, %v1565
          %v1591 = vsub.f32 %v1478, %v1570
          %v1592 = vsub.f32 %v1479, %v1575
          %v1593 = vsub.f32 %v1480, %v1580
          %v1594 = vsub.f32 %v1481, %v1585
          %v1595 = vmul.f32 %v1587, 1.442695
          %v1596 = vpow.pop %v1595
          %v1597 = vmul.f32 %v1588, 1.442695
          %v1598 = vpow.pop %v1597
          %v1599 = vmul.f32 %v1589, 1.442695
          %v1600 = vpow.pop %v1599
          %v1601 = vmul.f32 %v1590, 1.442695
          %v1602 = vpow.pop %v1601
          %v1603 = vmul.f32 %v1591, 1.442695
          %v1604 = vpow.pop %v1603
          %v1605 = vmul.f32 %v1592, 1.442695
          %v1606 = vpow.pop %v1605
          %v1607 = vmul.f32 %v1593, 1.442695
          %v1608 = vpow.pop %v1607
          %v1609 = vmul.f32 %v1594, 1.442695
          %v1610 = vpow.pop %v1609
          %v1611 = vld [vmem:[#allocation5] sm:$0xff]
          %v1612 = vld [vmem:[#allocation5 + $0x8] sm:$0xff]
          %v1613 = vld [vmem:[#allocation5 + $0x10] sm:$0xff]
          %v1614 = vld [vmem:[#allocation5 + $0x18] sm:$0xff]
          %v1615 = vld [vmem:[#allocation5 + $0x20] sm:$0xff]
          %v1616 = vld [vmem:[#allocation5 + $0x28] sm:$0xff]
          %v1617 = vld [vmem:[#allocation5 + $0x30] sm:$0xff]
          %v1618 = vld [vmem:[#allocation5 + $0x38] sm:$0xff]
          %v1619 = vmul.f32 %v1532, %v1611
          %v1620 = vmul.f32 %v1534, %v1612
          %v1621 = vmul.f32 %v1536, %v1613
          %v1622 = vmul.f32 %v1538, %v1614
          %v1623 = vmul.f32 %v1540, %v1615
          %v1624 = vmul.f32 %v1542, %v1616
          %v1625 = vmul.f32 %v1544, %v1617
          %v1626 = vmul.f32 %v1546, %v1618
          %v1627 = vsel %vm1490, %v1596, 0.0
          %1628 = vadd.xlane.f32.xlu0 %v1627
          %v1629 = vpop.xlane.xlu0 %1628
          %v1630 = vsel %vm1490, %v1598, 0.0
          %1631 = vadd.xlane.f32.xlu0 %v1630
          %v1632 = vpop.xlane.xlu0 %1631
          %v1633 = vsel %vm1490, %v1600, 0.0
          %1634 = vadd.xlane.f32.xlu0 %v1633
          %v1635 = vpop.xlane.xlu0 %1634
          %v1636 = vsel %vm1490, %v1602, 0.0
          %1637 = vadd.xlane.f32.xlu0 %v1636
          %v1638 = vpop.xlane.xlu0 %1637
          %v1639 = vsel %vm1490, %v1604, 0.0
          %1640 = vadd.xlane.f32.xlu0 %v1639
          %v1641 = vpop.xlane.xlu0 %1640
          %v1642 = vsel %vm1490, %v1606, 0.0
          %1643 = vadd.xlane.f32.xlu0 %v1642
          %v1644 = vpop.xlane.xlu0 %1643
          %v1645 = vsel %vm1490, %v1608, 0.0
          %1646 = vadd.xlane.f32.xlu0 %v1645
          %v1647 = vpop.xlane.xlu0 %1646
          %v1648 = vsel %vm1490, %v1610, 0.0
          %1649 = vadd.xlane.f32.xlu0 %v1648
          %v1650 = vpop.xlane.xlu0 %1649
          %v1651 = vadd.f32 %v1619, %v1629
          %v1652 = vadd.f32 %v1620, %v1632
          %v1653 = vadd.f32 %v1621, %v1635
          %v1654 = vadd.f32 %v1622, %v1638
          %v1655 = vadd.f32 %v1623, %v1641
          %v1656 = vadd.f32 %v1624, %v1644
          %v1657 = vadd.f32 %v1625, %v1647
          %v1658 = vadd.f32 %v1626, %v1650
          %vm1659 = vcmask 7168
          %1660 = vst.msk [vmem:[#allocation5] sm:$0xff] %vm1659, %v1651
          %1661 = vst.msk [vmem:[#allocation5 + $0x8] sm:$0xff] %vm1659, %v1652
          %1662 = vst.msk [vmem:[#allocation5 + $0x10] sm:$0xff] %vm1659, %v1653
          %1663 = vst.msk [vmem:[#allocation5 + $0x18] sm:$0xff] %vm1659, %v1654
          %1664 = vst.msk [vmem:[#allocation5 + $0x20] sm:$0xff] %vm1659, %v1655
          %1665 = vst.msk [vmem:[#allocation5 + $0x28] sm:$0xff] %vm1659, %v1656
          %1666 = vst.msk [vmem:[#allocation5 + $0x30] sm:$0xff] %vm1659, %v1657
          %1667 = vst.msk [vmem:[#allocation5 + $0x38] sm:$0xff] %vm1659, %v1658
          %v1668 = vld [vmem:[#allocation6] sm:$0xff]
          %v1669 = vld [vmem:[#allocation6 + $0x8] sm:$0xff]
          %v1670 = vld [vmem:[#allocation6 + $0x10] sm:$0xff]
          %v1671 = vld [vmem:[#allocation6 + $0x18] sm:$0xff]
          %v1672 = vld [vmem:[#allocation6 + $0x20] sm:$0xff]
          %v1673 = vld [vmem:[#allocation6 + $0x28] sm:$0xff]
          %v1674 = vld [vmem:[#allocation6 + $0x30] sm:$0xff]
          %v1675 = vld [vmem:[#allocation6 + $0x38] sm:$0xff]
          %1677 = vset.pattern.permute.xlu0 0
          %1678 = vperm.xlu0 %1677, %v1532
          %v1679 = vpop.permute.xlu0 %1678
          %1682 = vset.pattern.permute.xlu0 0
          %1683 = vperm.xlu0 %1682, %v1534
          %v1684 = vpop.permute.xlu0 %1683
          %1687 = vset.pattern.permute.xlu0 0
          %1688 = vperm.xlu0 %1687, %v1536
          %v1689 = vpop.permute.xlu0 %1688
          %1692 = vset.pattern.permute.xlu0 0
          %1693 = vperm.xlu0 %1692, %v1538
          %v1694 = vpop.permute.xlu0 %1693
          %1697 = vset.pattern.permute.xlu0 0
          %1698 = vperm.xlu0 %1697, %v1540
          %v1699 = vpop.permute.xlu0 %1698
          %1702 = vset.pattern.permute.xlu0 0
          %1703 = vperm.xlu0 %1702, %v1542
          %v1704 = vpop.permute.xlu0 %1703
          %1707 = vset.pattern.permute.xlu0 0
          %1708 = vperm.xlu0 %1707, %v1544
          %v1709 = vpop.permute.xlu0 %1708
          %1712 = vset.pattern.permute.xlu0 0
          %1713 = vperm.xlu0 %1712, %v1546
          %v1714 = vpop.permute.xlu0 %1713
          %v1716 = vmul.f32 %v1679, %v1668
          %v1717 = vmul.f32 %v1684, %v1669
          %v1718 = vmul.f32 %v1689, %v1670
          %v1719 = vmul.f32 %v1694, %v1671
          %v1720 = vmul.f32 %v1699, %v1672
          %v1721 = vmul.f32 %v1704, %v1673
          %v1722 = vmul.f32 %v1709, %v1674
          %v1723 = vmul.f32 %v1714, %v1675
          %v1724 = vpack.c.bf16 %v1598, %v1596
          %v1725 = vpack.c.bf16 %v1602, %v1600
          %v1726 = vpack.c.bf16 %v1606, %v1604
          %v1727 = vpack.c.bf16 %v1610, %v1608
          %v1729 = vsel %vm1490, %v1724, 0
          %1731 = vmatprep.subr.bf16.mxu0 0
          %1732 = vmatpush1.bf16.msra.mxu0 %v1265
          %1733 = vmatprep.subr.bf16.mxu0 0
          %1734 = vmatpush1.bf16.msra.mxu0 0
          %1735 = vmatprep.subr.bf16.mxu0 0
          %1736 = vmatpush1.bf16.msra.mxu0 0
          %1737 = vmatprep.subr.bf16.mxu0 0
          %1738 = vmatpush1.bf16.msra.mxu0 0
          %1739 = vmatprep.subr.bf16.mxu0 0
          %1740 = vmatpush1.bf16.msra.mxu0 0
          %1741 = vmatprep.subr.bf16.mxu0 0
          %1742 = vmatpush1.bf16.msra.mxu0 0
          %1743 = vmatprep.subr.bf16.mxu0 0
          %1744 = vmatpush1.bf16.msra.mxu0 0
          %1745 = vmatprep.subr.bf16.mxu0 0
          %1746 = vmatpush1.bf16.msra.mxu0 0
          %1747 = vmatprep.subr.bf16.mxu0 0
          %1748 = vmatpush1.bf16.msra.mxu0 0
          %1749 = vmatprep.subr.bf16.mxu0 0
          %1750 = vmatpush1.bf16.msra.mxu0 0
          %1751 = vmatprep.subr.bf16.mxu0 0
          %1752 = vmatpush1.bf16.msra.mxu0 0
          %1753 = vmatprep.subr.bf16.mxu0 0
          %1754 = vmatpush1.bf16.msra.mxu0 0
          %1755 = vmatprep.subr.bf16.mxu0 0
          %1756 = vmatpush1.bf16.msra.mxu0 0
          %1757 = vmatprep.subr.bf16.mxu0 0
          %1758 = vmatpush1.bf16.msra.mxu0 0
          %1759 = vmatprep.subr.bf16.mxu0 0
          %1760 = vmatpush1.bf16.msra.mxu0 0
          %1761 = vmatprep.subr.bf16.mxu0 0
          %1762 = vmatpush1.bf16.msra.mxu0 0
          %1763 = vmatprep.mubr.bf16.mxu0 0
          %1764 = vmatmul.mubr.bf16.gmra.mrb[0].mxu0 %v1729
          %v1765 = vpop.f32.mrb[0].mxu0
          %v1766 = vadd.f32 0.0, %v1765
          %v1767 = vpop.f32.mrb[0].mxu0
          %v1768 = vpop.f32.mrb[0].mxu0
          %v1769 = vadd.f32 0.0, %v1768
          %v1770 = vpop.f32.mrb[0].mxu0
          %1771 = vdwg.mxu0
          %v1773 = vsel %vm1490, %v1725, 0
          %1775 = vmatprep.subr.bf16.mxu0 0
          %1776 = vmatpush1.bf16.msra.mxu0 %v1266
          %1777 = vmatprep.subr.bf16.mxu0 0
          %1778 = vmatpush1.bf16.msra.mxu0 0
          %1779 = vmatprep.subr.bf16.mxu0 0
          %1780 = vmatpush1.bf16.msra.mxu0 0
          %1781 = vmatprep.subr.bf16.mxu0 0
          %1782 = vmatpush1.bf16.msra.mxu0 0
          %1783 = vmatprep.subr.bf16.mxu0 0
          %1784 = vmatpush1.bf16.msra.mxu0 0
          %1785 = vmatprep.subr.bf16.mxu0 0
          %1786 = vmatpush1.bf16.msra.mxu0 0
          %1787 = vmatprep.subr.bf16.mxu0 0
          %1788 = vmatpush1.bf16.msra.mxu0 0
          %1789 = vmatprep.subr.bf16.mxu0 0
          %1790 = vmatpush1.bf16.msra.mxu0 0
          %1791 = vmatprep.subr.bf16.mxu0 0
          %1792 = vmatpush1.bf16.msra.mxu0 0
          %1793 = vmatprep.subr.bf16.mxu0 0
          %1794 = vmatpush1.bf16.msra.mxu0 0
          %1795 = vmatprep.subr.bf16.mxu0 0
          %1796 = vmatpush1.bf16.msra.mxu0 0
          %1797 = vmatprep.subr.bf16.mxu0 0
          %1798 = vmatpush1.bf16.msra.mxu0 0
          %1799 = vmatprep.subr.bf16.mxu0 0
          %1800 = vmatpush1.bf16.msra.mxu0 0
          %1801 = vmatprep.subr.bf16.mxu0 0
          %1802 = vmatpush1.bf16.msra.mxu0 0
          %1803 = vmatprep.subr.bf16.mxu0 0
          %1804 = vmatpush1.bf16.msra.mxu0 0
          %1805 = vmatprep.subr.bf16.mxu0 0
          %1806 = vmatpush1.bf16.msra.mxu0 0
          %1807 = vmatprep.mubr.bf16.mxu0 0
          %1808 = vmatmul.mubr.bf16.gmra.mrb[0].mxu0 %v1773
          %v1809 = vpop.f32.mrb[0].mxu0
          %v1810 = vadd.f32 0.0, %v1809
          %v1811 = vpop.f32.mrb[0].mxu0
          %v1812 = vpop.f32.mrb[0].mxu0
          %v1813 = vadd.f32 0.0, %v1812
          %v1814 = vpop.f32.mrb[0].mxu0
          %1815 = vdwg.mxu0
          %v1817 = vsel %vm1490, %v1726, 0
          %1819 = vmatprep.subr.bf16.mxu0 0
          %1820 = vmatpush1.bf16.msra.mxu0 %v1267
          %1821 = vmatprep.subr.bf16.mxu0 0
          %1822 = vmatpush1.bf16.msra.mxu0 0
          %1823 = vmatprep.subr.bf16.mxu0 0
          %1824 = vmatpush1.bf16.msra.mxu0 0
          %1825 = vmatprep.subr.bf16.mxu0 0
          %1826 = vmatpush1.bf16.msra.mxu0 0
          %1827 = vmatprep.subr.bf16.mxu0 0
          %1828 = vmatpush1.bf16.msra.mxu0 0
          %1829 = vmatprep.subr.bf16.mxu0 0
          %1830 = vmatpush1.bf16.msra.mxu0 0
          %1831 = vmatprep.subr.bf16.mxu0 0
          %1832 = vmatpush1.bf16.msra.mxu0 0
          %1833 = vmatprep.subr.bf16.mxu0 0
          %1834 = vmatpush1.bf16.msra.mxu0 0
          %1835 = vmatprep.subr.bf16.mxu0 0
          %1836 = vmatpush1.bf16.msra.mxu0 0
          %1837 = vmatprep.subr.bf16.mxu0 0
          %1838 = vmatpush1.bf16.msra.mxu0 0
          %1839 = vmatprep.subr.bf16.mxu0 0
          %1840 = vmatpush1.bf16.msra.mxu0 0
          %1841 = vmatprep.subr.bf16.mxu0 0
          %1842 = vmatpush1.bf16.msra.mxu0 0
          %1843 = vmatprep.subr.bf16.mxu0 0
          %1844 = vmatpush1.bf16.msra.mxu0 0
          %1845 = vmatprep.subr.bf16.mxu0 0
          %1846 = vmatpush1.bf16.msra.mxu0 0
          %1847 = vmatprep.subr.bf16.mxu0 0
          %1848 = vmatpush1.bf16.msra.mxu0 0
          %1849 = vmatprep.subr.bf16.mxu0 0
          %1850 = vmatpush1.bf16.msra.mxu0 0
          %1851 = vmatprep.mubr.bf16.mxu0 0
          %1852 = vmatmul.mubr.bf16.gmra.mrb[0].mxu0 %v1817
          %v1853 = vpop.f32.mrb[0].mxu0
          %v1854 = vadd.f32 0.0, %v1853
          %v1855 = vpop.f32.mrb[0].mxu0
          %v1856 = vpop.f32.mrb[0].mxu0
          %v1857 = vadd.f32 0.0, %v1856
          %v1858 = vpop.f32.mrb[0].mxu0
          %1859 = vdwg.mxu0
          %v1861 = vsel %vm1490, %v1727, 0
          %1863 = vmatprep.subr.bf16.mxu0 0
          %1864 = vmatpush1.bf16.msra.mxu0 %v1268
          %1865 = vmatprep.subr.bf16.mxu0 0
          %1866 = vmatpush1.bf16.msra.mxu0 0
          %1867 = vmatprep.subr.bf16.mxu0 0
          %1868 = vmatpush1.bf16.msra.mxu0 0
          %1869 = vmatprep.subr.bf16.mxu0 0
          %1870 = vmatpush1.bf16.msra.mxu0 0
          %1871 = vmatprep.subr.bf16.mxu0 0
          %1872 = vmatpush1.bf16.msra.mxu0 0
          %1873 = vmatprep.subr.bf16.mxu0 0
          %1874 = vmatpush1.bf16.msra.mxu0 0
          %1875 = vmatprep.subr.bf16.mxu0 0
          %1876 = vmatpush1.bf16.msra.mxu0 0
          %1877 = vmatprep.subr.bf16.mxu0 0
          %1878 = vmatpush1.bf16.msra.mxu0 0
          %1879 = vmatprep.subr.bf16.mxu0 0
          %1880 = vmatpush1.bf16.msra.mxu0 0
          %1881 = vmatprep.subr.bf16.mxu0 0
          %1882 = vmatpush1.bf16.msra.mxu0 0
          %1883 = vmatprep.subr.bf16.mxu0 0
          %1884 = vmatpush1.bf16.msra.mxu0 0
          %1885 = vmatprep.subr.bf16.mxu0 0
          %1886 = vmatpush1.bf16.msra.mxu0 0
          %1887 = vmatprep.subr.bf16.mxu0 0
          %1888 = vmatpush1.bf16.msra.mxu0 0
          %1889 = vmatprep.subr.bf16.mxu0 0
          %1890 = vmatpush1.bf16.msra.mxu0 0
          %1891 = vmatprep.subr.bf16.mxu0 0
          %1892 = vmatpush1.bf16.msra.mxu0 0
          %1893 = vmatprep.subr.bf16.mxu0 0
          %1894 = vmatpush1.bf16.msra.mxu0 0
          %1895 = vmatprep.mubr.bf16.mxu0 0
          %1896 = vmatmul.mubr.bf16.gmra.mrb[0].mxu0 %v1861
          %v1897 = vpop.f32.mrb[0].mxu0
          %v1898 = vadd.f32 0.0, %v1897
          %v1899 = vpop.f32.mrb[0].mxu0
          %v1900 = vpop.f32.mrb[0].mxu0
          %v1901 = vadd.f32 0.0, %v1900
          %v1902 = vpop.f32.mrb[0].mxu0
          %1903 = vdwg.mxu0
          %v1904 = vadd.f32 %v1716, %v1766
          %v1905 = vadd.f32 %v1717, %v1769
          %v1906 = vadd.f32 %v1718, %v1810
          %v1907 = vadd.f32 %v1719, %v1813
          %v1908 = vadd.f32 %v1720, %v1854
          %v1909 = vadd.f32 %v1721, %v1857
          %v1910 = vadd.f32 %v1722, %v1898
          %v1911 = vadd.f32 %v1723, %v1901
          %1912 = vst.msk [vmem:[#allocation6] sm:$0xff] %vm1273, %v1904
          %1913 = vst.msk [vmem:[#allocation6 + $0x8] sm:$0xff] %vm1273, %v1905
          %1914 = vst.msk [vmem:[#allocation6 + $0x10] sm:$0xff] %vm1273, %v1906
          %1915 = vst.msk [vmem:[#allocation6 + $0x18] sm:$0xff] %vm1273, %v1907
          %1916 = vst.msk [vmem:[#allocation6 + $0x20] sm:$0xff] %vm1273, %v1908
          %1917 = vst.msk [vmem:[#allocation6 + $0x28] sm:$0xff] %vm1273, %v1909
          %1918 = vst.msk [vmem:[#allocation6 + $0x30] sm:$0xff] %vm1273, %v1910
          %1919 = vst.msk [vmem:[#allocation6 + $0x38] sm:$0xff] %vm1273, %v1911
          %1920 = vst.msk [vmem:[#allocation4] sm:$0xff] %vm1659, %v1515
          %1921 = vst.msk [vmem:[#allocation4 + $0x8] sm:$0xff] %vm1659, %v1516
          %1922 = vst.msk [vmem:[#allocation4 + $0x10] sm:$0xff] %vm1659, %v1517
          %1923 = vst.msk [vmem:[#allocation4 + $0x18] sm:$0xff] %vm1659, %v1518
          %1924 = vst.msk [vmem:[#allocation4 + $0x20] sm:$0xff] %vm1659, %v1519
          %1925 = vst.msk [vmem:[#allocation4 + $0x28] sm:$0xff] %vm1659, %v1520
          %1926 = vst.msk [vmem:[#allocation4 + $0x30] sm:$0xff] %vm1659, %v1521
          %1927 = vst.msk [vmem:[#allocation4 + $0x38] sm:$0xff] %vm1659, %v1522
        $region60: #{tpu_custom_call.1} parent=51 // pred_fallthru
          _
        // Predicated region
        $region61: #{tpu_custom_call.1} parent=51 // pred_check
          %p1928 = pneg %p420
        $region62: #{tpu_custom_call.1} parent=51 // pred_check_branch
          %1930 = sbr.rel (%p1928) target = $region64
        $region63: #{tpu_custom_call.1} parent=51 // pred_region
          %v1931 = vld [vmem:[#allocation5] sm:$0xff]
          %v1932 = vld [vmem:[#allocation5 + $0x8] sm:$0xff]
          %v1933 = vld [vmem:[#allocation5 + $0x10] sm:$0xff]
          %v1934 = vld [vmem:[#allocation5 + $0x18] sm:$0xff]
          %v1935 = vld [vmem:[#allocation5 + $0x20] sm:$0xff]
          %v1936 = vld [vmem:[#allocation5 + $0x28] sm:$0xff]
          %v1937 = vld [vmem:[#allocation5 + $0x30] sm:$0xff]
          %v1938 = vld [vmem:[#allocation5 + $0x38] sm:$0xff]
          %v1939 = vrcp.pop %v1931
          %v1940 = vrcp.pop %v1932
          %v1941 = vrcp.pop %v1933
          %v1942 = vrcp.pop %v1934
          %v1943 = vrcp.pop %v1935
          %v1944 = vrcp.pop %v1936
          %v1945 = vrcp.pop %v1937
          %v1946 = vrcp.pop %v1938
          %v1947 = vld [vmem:[#allocation6] sm:$0xff]
          %v1948 = vld [vmem:[#allocation6 + $0x8] sm:$0xff]
          %v1949 = vld [vmem:[#allocation6 + $0x10] sm:$0xff]
          %v1950 = vld [vmem:[#allocation6 + $0x18] sm:$0xff]
          %v1951 = vld [vmem:[#allocation6 + $0x20] sm:$0xff]
          %v1952 = vld [vmem:[#allocation6 + $0x28] sm:$0xff]
          %v1953 = vld [vmem:[#allocation6 + $0x30] sm:$0xff]
          %v1954 = vld [vmem:[#allocation6 + $0x38] sm:$0xff]
          %1956 = vset.pattern.permute.xlu0 0
          %1957 = vperm.xlu0 %1956, %v1939
          %v1958 = vpop.permute.xlu0 %1957
          %1961 = vset.pattern.permute.xlu0 0
          %1962 = vperm.xlu0 %1961, %v1940
          %v1963 = vpop.permute.xlu0 %1962
          %1966 = vset.pattern.permute.xlu0 0
          %1967 = vperm.xlu0 %1966, %v1941
          %v1968 = vpop.permute.xlu0 %1967
          %1971 = vset.pattern.permute.xlu0 0
          %1972 = vperm.xlu0 %1971, %v1942
          %v1973 = vpop.permute.xlu0 %1972
          %1976 = vset.pattern.permute.xlu0 0
          %1977 = vperm.xlu0 %1976, %v1943
          %v1978 = vpop.permute.xlu0 %1977
          %1981 = vset.pattern.permute.xlu0 0
          %1982 = vperm.xlu0 %1981, %v1944
          %v1983 = vpop.permute.xlu0 %1982
          %1986 = vset.pattern.permute.xlu0 0
          %1987 = vperm.xlu0 %1986, %v1945
          %v1988 = vpop.permute.xlu0 %1987
          %1991 = vset.pattern.permute.xlu0 0
          %1992 = vperm.xlu0 %1991, %v1946
          %v1993 = vpop.permute.xlu0 %1992
          %v1995 = vmul.f32 %v1947, %v1958
          %v1996 = vmul.f32 %v1948, %v1963
          %v1997 = vmul.f32 %v1949, %v1968
          %v1998 = vmul.f32 %v1950, %v1973
          %v1999 = vmul.f32 %v1951, %v1978
          %v2000 = vmul.f32 %v1952, %v1983
          %v2001 = vmul.f32 %v1953, %v1988
          %v2002 = vmul.f32 %v1954, %v1993
          %v2003 = vpack.c.bf16 %v1996, %v1995
          %v2004 = vpack.c.bf16 %v1998, %v1997
          %v2005 = vpack.c.bf16 %v2000, %v1999
          %v2006 = vpack.c.bf16 %v2002, %v2001
          %v2007 = vld [vmem:[%s4] sm:$0xf]
          %v2008 = vld [vmem:[%s4 + $0x4] sm:$0xf]
          %v2009 = vld [vmem:[%s4 + $0x8] sm:$0xf]
          %v2010 = vld [vmem:[%s4 + $0xc] sm:$0xf]
          %vm2011 = vcmask 64512
          %v2013 = vsel %vm2011, %v2003, 0
          %vm2015 = vcmask 1043456
          %v2017 = vsel %vm2015, %v2007, 0
          %2019 = vmatprep.subr.bf16.mxu0 0
          %2020 = vmatpush1.bf16.msra.mxu0 %v2017
          %2021 = vmatprep.subr.bf16.mxu0 0
          %2022 = vmatpush1.bf16.msra.mxu0 0
          %2023 = vmatprep.subr.bf16.mxu0 0
          %2024 = vmatpush1.bf16.msra.mxu0 0
          %2025 = vmatprep.subr.bf16.mxu0 0
          %2026 = vmatpush1.bf16.msra.mxu0 0
          %2027 = vmatprep.subr.bf16.mxu0 0
          %2028 = vmatpush1.bf16.msra.mxu0 0
          %2029 = vmatprep.subr.bf16.mxu0 0
          %2030 = vmatpush1.bf16.msra.mxu0 0
          %2031 = vmatprep.subr.bf16.mxu0 0
          %2032 = vmatpush1.bf16.msra.mxu0 0
          %2033 = vmatprep.subr.bf16.mxu0 0
          %2034 = vmatpush1.bf16.msra.mxu0 0
          %2035 = vmatprep.subr.bf16.mxu0 0
          %2036 = vmatpush1.bf16.msra.mxu0 0
          %2037 = vmatprep.subr.bf16.mxu0 0
          %2038 = vmatpush1.bf16.msra.mxu0 0
          %2039 = vmatprep.subr.bf16.mxu0 0
          %2040 = vmatpush1.bf16.msra.mxu0 0
          %2041 = vmatprep.subr.bf16.mxu0 0
          %2042 = vmatpush1.bf16.msra.mxu0 0
          %2043 = vmatprep.subr.bf16.mxu0 0
          %2044 = vmatpush1.bf16.msra.mxu0 0
          %2045 = vmatprep.subr.bf16.mxu0 0
          %2046 = vmatpush1.bf16.msra.mxu0 0
          %2047 = vmatprep.subr.bf16.mxu0 0
          %2048 = vmatpush1.bf16.msra.mxu0 0
          %2049 = vmatprep.subr.bf16.mxu0 0
          %2050 = vmatpush1.bf16.msra.mxu0 0
          %2051 = vmatprep.mubr.bf16.mxu0 0
          %2052 = vmatmul.mubr.bf16.gmra.mrb[0].mxu0 %v2013
          %v2053 = vpop.f32.mrb[0].mxu0
          %v2054 = vadd.f32 0.0, %v2053
          %v2055 = vpop.f32.mrb[0].mxu0
          %v2056 = vpop.f32.mrb[0].mxu0
          %v2057 = vadd.f32 0.0, %v2056
          %v2058 = vpop.f32.mrb[0].mxu0
          %2059 = vdwg.mxu0
          %v2061 = vsel %vm2011, %v2004, 0
          %v2064 = vsel %vm2015, %v2008, 0
          %2066 = vmatprep.subr.bf16.mxu0 0
          %2067 = vmatpush1.bf16.msra.mxu0 %v2064
          %2068 = vmatprep.subr.bf16.mxu0 0
          %2069 = vmatpush1.bf16.msra.mxu0 0
          %2070 = vmatprep.subr.bf16.mxu0 0
          %2071 = vmatpush1.bf16.msra.mxu0 0
          %2072 = vmatprep.subr.bf16.mxu0 0
          %2073 = vmatpush1.bf16.msra.mxu0 0
          %2074 = vmatprep.subr.bf16.mxu0 0
          %2075 = vmatpush1.bf16.msra.mxu0 0
          %2076 = vmatprep.subr.bf16.mxu0 0
          %2077 = vmatpush1.bf16.msra.mxu0 0
          %2078 = vmatprep.subr.bf16.mxu0 0
          %2079 = vmatpush1.bf16.msra.mxu0 0
          %2080 = vmatprep.subr.bf16.mxu0 0
          %2081 = vmatpush1.bf16.msra.mxu0 0
          %2082 = vmatprep.subr.bf16.mxu0 0
          %2083 = vmatpush1.bf16.msra.mxu0 0
          %2084 = vmatprep.subr.bf16.mxu0 0
          %2085 = vmatpush1.bf16.msra.mxu0 0
          %2086 = vmatprep.subr.bf16.mxu0 0
          %2087 = vmatpush1.bf16.msra.mxu0 0
          %2088 = vmatprep.subr.bf16.mxu0 0
          %2089 = vmatpush1.bf16.msra.mxu0 0
          %2090 = vmatprep.subr.bf16.mxu0 0
          %2091 = vmatpush1.bf16.msra.mxu0 0
          %2092 = vmatprep.subr.bf16.mxu0 0
          %2093 = vmatpush1.bf16.msra.mxu0 0
          %2094 = vmatprep.subr.bf16.mxu0 0
          %2095 = vmatpush1.bf16.msra.mxu0 0
          %2096 = vmatprep.subr.bf16.mxu0 0
          %2097 = vmatpush1.bf16.msra.mxu0 0
          %2098 = vmatprep.mubr.bf16.mxu0 0
          %2099 = vmatmul.mubr.bf16.gmra.mrb[0].mxu0 %v2061
          %v2100 = vpop.f32.mrb[0].mxu0
          %v2101 = vadd.f32 0.0, %v2100
          %v2102 = vpop.f32.mrb[0].mxu0
          %v2103 = vpop.f32.mrb[0].mxu0
          %v2104 = vadd.f32 0.0, %v2103
          %v2105 = vpop.f32.mrb[0].mxu0
          %2106 = vdwg.mxu0
          %v2108 = vsel %vm2011, %v2005, 0
          %v2111 = vsel %vm2015, %v2009, 0
          %2113 = vmatprep.subr.bf16.mxu0 0
          %2114 = vmatpush1.bf16.msra.mxu0 %v2111
          %2115 = vmatprep.subr.bf16.mxu0 0
          %2116 = vmatpush1.bf16.msra.mxu0 0
          %2117 = vmatprep.subr.bf16.mxu0 0
          %2118 = vmatpush1.bf16.msra.mxu0 0
          %2119 = vmatprep.subr.bf16.mxu0 0
          %2120 = vmatpush1.bf16.msra.mxu0 0
          %2121 = vmatprep.subr.bf16.mxu0 0
          %2122 = vmatpush1.bf16.msra.mxu0 0
          %2123 = vmatprep.subr.bf16.mxu0 0
          %2124 = vmatpush1.bf16.msra.mxu0 0
          %2125 = vmatprep.subr.bf16.mxu0 0
          %2126 = vmatpush1.bf16.msra.mxu0 0
          %2127 = vmatprep.subr.bf16.mxu0 0
          %2128 = vmatpush1.bf16.msra.mxu0 0
          %2129 = vmatprep.subr.bf16.mxu0 0
          %2130 = vmatpush1.bf16.msra.mxu0 0
          %2131 = vmatprep.subr.bf16.mxu0 0
          %2132 = vmatpush1.bf16.msra.mxu0 0
          %2133 = vmatprep.subr.bf16.mxu0 0
          %2134 = vmatpush1.bf16.msra.mxu0 0
          %2135 = vmatprep.subr.bf16.mxu0 0
          %2136 = vmatpush1.bf16.msra.mxu0 0
          %2137 = vmatprep.subr.bf16.mxu0 0
          %2138 = vmatpush1.bf16.msra.mxu0 0
          %2139 = vmatprep.subr.bf16.mxu0 0
          %2140 = vmatpush1.bf16.msra.mxu0 0
          %2141 = vmatprep.subr.bf16.mxu0 0
          %2142 = vmatpush1.bf16.msra.mxu0 0
          %2143 = vmatprep.subr.bf16.mxu0 0
          %2144 = vmatpush1.bf16.msra.mxu0 0
          %2145 = vmatprep.mubr.bf16.mxu0 0
          %2146 = vmatmul.mubr.bf16.gmra.mrb[0].mxu0 %v2108
          %v2147 = vpop.f32.mrb[0].mxu0
          %v2148 = vadd.f32 0.0, %v2147
          %v2149 = vpop.f32.mrb[0].mxu0
          %v2150 = vpop.f32.mrb[0].mxu0
          %v2151 = vadd.f32 0.0, %v2150
          %v2152 = vpop.f32.mrb[0].mxu0
          %2153 = vdwg.mxu0
          %v2155 = vsel %vm2011, %v2006, 0
          %v2158 = vsel %vm2015, %v2010, 0
          %2160 = vmatprep.subr.bf16.mxu0 0
          %2161 = vmatpush1.bf16.msra.mxu0 %v2158
          %2162 = vmatprep.subr.bf16.mxu0 0
          %2163 = vmatpush1.bf16.msra.mxu0 0
          %2164 = vmatprep.subr.bf16.mxu0 0
          %2165 = vmatpush1.bf16.msra.mxu0 0
          %2166 = vmatprep.subr.bf16.mxu0 0
          %2167 = vmatpush1.bf16.msra.mxu0 0
          %2168 = vmatprep.subr.bf16.mxu0 0
          %2169 = vmatpush1.bf16.msra.mxu0 0
          %2170 = vmatprep.subr.bf16.mxu0 0
          %2171 = vmatpush1.bf16.msra.mxu0 0
          %2172 = vmatprep.subr.bf16.mxu0 0
          %2173 = vmatpush1.bf16.msra.mxu0 0
          %2174 = vmatprep.subr.bf16.mxu0 0
          %2175 = vmatpush1.bf16.msra.mxu0 0
          %2176 = vmatprep.subr.bf16.mxu0 0
          %2177 = vmatpush1.bf16.msra.mxu0 0
          %2178 = vmatprep.subr.bf16.mxu0 0
          %2179 = vmatpush1.bf16.msra.mxu0 0
          %2180 = vmatprep.subr.bf16.mxu0 0
          %2181 = vmatpush1.bf16.msra.mxu0 0
          %2182 = vmatprep.subr.bf16.mxu0 0
          %2183 = vmatpush1.bf16.msra.mxu0 0
          %2184 = vmatprep.subr.bf16.mxu0 0
          %2185 = vmatpush1.bf16.msra.mxu0 0
          %2186 = vmatprep.subr.bf16.mxu0 0
          %2187 = vmatpush1.bf16.msra.mxu0 0
          %2188 = vmatprep.subr.bf16.mxu0 0
          %2189 = vmatpush1.bf16.msra.mxu0 0
          %2190 = vmatprep.subr.bf16.mxu0 0
          %2191 = vmatpush1.bf16.msra.mxu0 0
          %2192 = vmatprep.mubr.bf16.mxu0 0
          %2193 = vmatmul.mubr.bf16.gmra.mrb[0].mxu0 %v2155
          %v2194 = vpop.f32.mrb[0].mxu0
          %v2195 = vadd.f32 0.0, %v2194
          %v2196 = vpop.f32.mrb[0].mxu0
          %v2197 = vpop.f32.mrb[0].mxu0
          %v2198 = vadd.f32 0.0, %v2197
          %v2199 = vpop.f32.mrb[0].mxu0
          %2200 = vdwg.mxu0
          %vm2201 = vcmask 261120
          %v2202 = vsel %vm2201, %v2054, 0.0
          %v2203 = vsel %vm2201, %v2101, 0.0
          %v2204 = vadd.f32 %v2202, %v2203
          %v2205 = vsel %vm2201, %v2148, 0.0
          %v2206 = vadd.f32 %v2204, %v2205
          %v2207 = vsel %vm2201, %v2195, 0.0
          %v2208 = vadd.f32 %v2206, %v2207
          %v2209 = vsel %vm2201, %v2057, 0.0
          %v2210 = vsel %vm2201, %v2104, 0.0
          %v2211 = vadd.f32 %v2209, %v2210
          %v2212 = vsel %vm2201, %v2151, 0.0
          %v2213 = vadd.f32 %v2211, %v2212
          %v2214 = vsel %vm2201, %v2198, 0.0
          %v2215 = vadd.f32 %v2213, %v2214
          %v2216 = vld [vmem:[#allocation3] sm:$0xff]
          %v2217 = vld [vmem:[#allocation3 + $0x8] sm:$0xff]
          %v2218 = vadd.f32 %v2208, %v2216
          %v2219 = vadd.f32 %v2215, %v2217
          %v2220 = vld [vmem:[%s5] sm:$0x1]
          %v2221 = vmul.f32 %v2218, %v2218
          %v2222 = vmul.f32 %v2219, %v2219
          %v2223 = vsel %vm2201, %v2221, 0.0
          %2224 = vadd.xlane.f32.xlu0 %v2223
          %v2225 = vpop.xlane.xlu0 %2224
          %v2226 = vsel %vm2201, %v2222, 0.0
          %2227 = vadd.xlane.f32.xlu0 %v2226
          %v2228 = vpop.xlane.xlu0 %2227
          %v2229 = vrcp.pop 32.0
          %v2230 = vmul.f32 %v2225, %v2229
          %v2231 = vmul.f32 %v2228, %v2229
          %v2232 = vadd.f32 %v2230, 1e-05
          %v2233 = vadd.f32 %v2231, 1e-05
          %v2234 = vrsqrt.pop %v2232
          %v2235 = vrsqrt.pop %v2233
          %v2236 = vmul.f32 %v2218, %v2234
          %v2237 = vmul.f32 %v2219, %v2235
          %v2239 = vlaneseq
          %v2240 = vshrl.u32 %v2239, 7
          %v2241 = vsub.s32 0, %v2240
          %v2242 = vrot.slane %v2220, %v2241
          %v2244 = vmul.f32 %v2236, %v2242
          %v2245 = vmul.f32 %v2237, %v2242
          %v2246 = vpack.c.bf16 %v2245, %v2244
          %v2247 = vld [vmem:[%s6] sm:$0xf]
          %v2248 = vld [vmem:[%s6 + $0x4] sm:$0xf]
          %v2249 = vld [vmem:[%s6 + $0x8] sm:$0xf]
          %v2250 = vld [vmem:[%s6 + $0xc] sm:$0xf]
          %v2255 = vunpack.c.l.b16 %v2247
          %v2256 = vunpack.c.l.b16 %v2248
          %v2257 = vunpack.c.l.b16 %v2249
          %v2258 = vunpack.c.l.b16 %v2250
          %v2259 = vpack.c.b16 %v2256, %v2255
          %v2260 = vpack.c.b16 %v2258, %v2257
          %v2264 = vsel %vm2201, %v2246, 0
          %2266 = vmatprep.subr.bf16.mxu0 0
          %2267 = vmatpush1.bf16.msra.mxu0 %v2259
          %2268 = vmatprep.subr.bf16.mxu0 0
          %2269 = vmatpush1.bf16.msra.mxu0 %v2260
          %2270 = vmatprep.subr.bf16.mxu0 0
          %2271 = vmatpush1.bf16.msra.mxu0 0
          %2272 = vmatprep.subr.bf16.mxu0 0
          %2273 = vmatpush1.bf16.msra.mxu0 0
          %2274 = vmatprep.subr.bf16.mxu0 0
          %2275 = vmatpush1.bf16.msra.mxu0 0
          %2276 = vmatprep.subr.bf16.mxu0 0
          %2277 = vmatpush1.bf16.msra.mxu0 0
          %2278 = vmatprep.subr.bf16.mxu0 0
          %2279 = vmatpush1.bf16.msra.mxu0 0
          %2280 = vmatprep.subr.bf16.mxu0 0
          %2281 = vmatpush1.bf16.msra.mxu0 0
          %2282 = vmatprep.subr.bf16.mxu0 0
          %2283 = vmatpush1.bf16.msra.mxu0 0
          %2284 = vmatprep.subr.bf16.mxu0 0
          %2285 = vmatpush1.bf16.msra.mxu0 0
          %2286 = vmatprep.subr.bf16.mxu0 0
          %2287 = vmatpush1.bf16.msra.mxu0 0
          %2288 = vmatprep.subr.bf16.mxu0 0
          %2289 = vmatpush1.bf16.msra.mxu0 0
          %2290 = vmatprep.subr.bf16.mxu0 0
          %2291 = vmatpush1.bf16.msra.mxu0 0
          %2292 = vmatprep.subr.bf16.mxu0 0
          %2293 = vmatpush1.bf16.msra.mxu0 0
          %2294 = vmatprep.subr.bf16.mxu0 0
          %2295 = vmatpush1.bf16.msra.mxu0 0
          %2296 = vmatprep.subr.bf16.mxu0 0
          %2297 = vmatpush1.bf16.msra.mxu0 0
          %2298 = vmatprep.mubr.bf16.mxu0 0
          %2299 = vmatmul.mubr.bf16.gmra.mrb[0].mxu0 %v2264
          %v2300 = vpop.f32.mrb[0].mxu0
          %v2301 = vadd.f32 0.0, %v2300
          %v2302 = vpop.f32.mrb[0].mxu0
          %v2303 = vpop.f32.mrb[0].mxu0
          %v2304 = vadd.f32 0.0, %v2303
          %v2305 = vpop.f32.mrb[0].mxu0
          %2306 = vdwg.mxu0
          %v2307 = vxor.u32 %v2301, 2147483648
          %v2308 = vxor.u32 %v2304, 2147483648
          %v2309 = vmul.f32 %v2307, 1.442695
          %v2310 = vpow.pop %v2309
          %v2311 = vmul.f32 %v2308, 1.442695
          %v2312 = vpow.pop %v2311
          %v2313 = vadd.f32 %v2310, 1.0
          %v2314 = vadd.f32 %v2312, 1.0
          %v2315 = vrcp.pop %v2313
          %v2316 = vmul.f32 1.0, %v2315
          %v2317 = vrcp.pop %v2314
          %v2318 = vmul.f32 1.0, %v2317
          %v2319 = vmul.f32 %v2301, %v2316
          %v2320 = vmul.f32 %v2304, %v2318
          %v2321 = vpack.c.bf16 %v2320, %v2319
          %v2322 = vld [vmem:[%s7] sm:$0xf]
          %v2323 = vld [vmem:[%s7 + $0x4] sm:$0xf]
          %v2324 = vld [vmem:[%s7 + $0x8] sm:$0xf]
          %v2325 = vld [vmem:[%s7 + $0xc] sm:$0xf]
          %v2326 = vld [vmem:[%s7 + $0x10] sm:$0xf]
          %v2327 = vld [vmem:[%s7 + $0x14] sm:$0xf]
          %v2328 = vld [vmem:[%s7 + $0x18] sm:$0xf]
          %v2329 = vld [vmem:[%s7 + $0x1c] sm:$0xf]
          %v2338 = vunpack.c.l.b16 %v2322
          %v2339 = vunpack.c.l.b16 %v2323
          %v2340 = vunpack.c.l.b16 %v2324
          %v2341 = vunpack.c.l.b16 %v2325
          %v2342 = vunpack.c.l.b16 %v2326
          %v2343 = vunpack.c.l.b16 %v2327
          %v2344 = vunpack.c.l.b16 %v2328
          %v2345 = vunpack.c.l.b16 %v2329
          %v2346 = vpack.c.b16 %v2339, %v2338
          %v2347 = vpack.c.b16 %v2341, %v2340
          %v2348 = vpack.c.b16 %v2343, %v2342
          %v2349 = vpack.c.b16 %v2345, %v2344
          %vm2354 = vcmask 523264
          %v2356 = vsel %vm2354, %v2321, 0
          %2358 = vmatprep.subr.bf16.mxu0 0
          %2359 = vmatpush1.bf16.msra.mxu0 %v2346
          %2360 = vmatprep.subr.bf16.mxu0 0
          %2361 = vmatpush1.bf16.msra.mxu0 %v2347
          %2362 = vmatprep.subr.bf16.mxu0 0
          %2363 = vmatpush1.bf16.msra.mxu0 %v2348
          %2364 = vmatprep.subr.bf16.mxu0 0
          %2365 = vmatpush1.bf16.msra.mxu0 %v2349
          %2366 = vmatprep.subr.bf16.mxu0 0
          %2367 = vmatpush1.bf16.msra.mxu0 0
          %2368 = vmatprep.subr.bf16.mxu0 0
          %2369 = vmatpush1.bf16.msra.mxu0 0
          %2370 = vmatprep.subr.bf16.mxu0 0
          %2371 = vmatpush1.bf16.msra.mxu0 0
          %2372 = vmatprep.subr.bf16.mxu0 0
          %2373 = vmatpush1.bf16.msra.mxu0 0
          %2374 = vmatprep.subr.bf16.mxu0 0
          %2375 = vmatpush1.bf16.msra.mxu0 0
          %2376 = vmatprep.subr.bf16.mxu0 0
          %2377 = vmatpush1.bf16.msra.mxu0 0
          %2378 = vmatprep.subr.bf16.mxu0 0
          %2379 = vmatpush1.bf16.msra.mxu0 0
          %2380 = vmatprep.subr.bf16.mxu0 0
          %2381 = vmatpush1.bf16.msra.mxu0 0
          %2382 = vmatprep.subr.bf16.mxu0 0
          %2383 = vmatpush1.bf16.msra.mxu0 0
          %2384 = vmatprep.subr.bf16.mxu0 0
          %2385 = vmatpush1.bf16.msra.mxu0 0
          %2386 = vmatprep.subr.bf16.mxu0 0
          %2387 = vmatpush1.bf16.msra.mxu0 0
          %2388 = vmatprep.subr.bf16.mxu0 0
          %2389 = vmatpush1.bf16.msra.mxu0 0
          %2390 = vmatprep.mubr.bf16.mxu0 0
          %2391 = vmatmul.mubr.bf16.gmra.mrb[0].mxu0 %v2356
          %v2392 = vpop.f32.mrb[0].mxu0
          %v2393 = vadd.f32 0.0, %v2392
          %v2394 = vpop.f32.mrb[0].mxu0
          %v2395 = vpop.f32.mrb[0].mxu0
          %v2396 = vadd.f32 0.0, %v2395
          %v2397 = vpop.f32.mrb[0].mxu0
          %2398 = vdwg.mxu0
          %v2399 = vpack.c.bf16 %v2396, %v2393
          %v2401 = vunpack.c.l.b16 %v2399
          %v2402 = vunpack.c.h.b16 %v2399
          %v2403 = vpack.c.b16 %v2401, %v2401
          %v2404 = vpack.c.b16 %v2402, %v2402
          %vm2407 = vcmask 257024
          %2408 = vst.msk [vmem:[%s389] sm:$0xf] %vm2407, %v2403
          %2409 = vst.msk [vmem:[%s389 + $0x4] sm:$0xf] %vm2407, %v2404
          %2410 = vst.msk [vmem:[%s396] sm:$0xff] %vm2201, %v2218
          %2411 = vst.msk [vmem:[%s396 + $0x8] sm:$0xff] %vm2201, %v2219
        $region64: #{tpu_custom_call.1} parent=51 // pred_fallthru
          _
        %s2412 = sand.u32 %s238, 1
        %s2413 = scalar_lea.sflag [#allocation8], %s2412
        %s2414 = sand.u32 %s238, 1
        %s2415 = smul.addr %s2414, 8
        %s2416 = scalar_lea.vmem [#allocation7], %s2415
        %s2417 = sand.u32 %s266, 1
        %s2418 = scalar_lea.sflag [#allocation10], %s2417
        %s2419 = sand.u32 %s266, 1
        %s2420 = smul.addr %s2419, 16
        %s2421 = scalar_lea.vmem [#allocation9], %s2420
        // Predicated region
        $region65: #{tpu_custom_call.1} parent=51 // pred_check
          %p2422 = pneg %p248
        $region66: #{tpu_custom_call.1} parent=51 // pred_check_branch
          %2424 = sbr.rel (%p2422) target = $region68
        $region67: #{tpu_custom_call.1} parent=51 // pred_region
          %s2425 = smul.u32 2, %s33
          %s2427 = ssub.s32 128, 128
          %2428 = vsyncadd %s2413, %s2427
          %s2429 = smul.addr %s32, 2
          %s2430 = sadd.s32 %s2425, %s2429
          %s2431 = smul.addr %s2430, 64
          %s2432 = scalar_lea.hbm %s8, %s2431
          %s2433 = sshll.u32 %s2416, 4
          %s2434 = int_to_ptr.vmem [resolvable:$true] %s2433
          %2439 = dma.vmem_to_hbm [thread:$0]  %s2434, 128, %s2432, %s2413, 64, 64, 4
        $region68: #{tpu_custom_call.1} parent=51 // pred_fallthru
          _
        // Predicated region
        $region69: #{tpu_custom_call.1} parent=51 // pred_check
          %p2440 = pneg %p276
        $region70: #{tpu_custom_call.1} parent=51 // pred_check_branch
          %2442 = sbr.rel (%p2440) target = $region72
        $region71: #{tpu_custom_call.1} parent=51 // pred_region
          %s2443 = smul.u32 2, %s33
          %s2445 = ssub.s32 256, 256
          %2446 = vsyncadd %s2418, %s2445
          %s2447 = smul.addr %s32, 2
          %s2448 = sadd.s32 %s2443, %s2447
          %s2449 = smul.addr %s2448, 128
          %s2450 = scalar_lea.hbm %s9, %s2449
          %s2451 = sshll.u32 %s2421, 4
          %s2452 = int_to_ptr.vmem [resolvable:$true] %s2451
          %2457 = dma.vmem_to_hbm [thread:$0]  %s2452, 256, %s2450, %s2418, 128, 128, 8
        $region72: #{tpu_custom_call.1} parent=51 // pred_fallthru
          _
      $region52: #{tpu_custom_call.1} parent=5 // pred_fallthru
        _
      %p2458 = scmp.le.s32.totalorder 2, %s22
      // Predicated region
      $region73: #{tpu_custom_call.1} parent=5 // pred_check
        %p2459 = pneg %p2458
      $region74: #{tpu_custom_call.1} parent=5 // pred_check_branch
        %2461 = sbr.rel (%p2459) target = $region76
      $region75: #{tpu_custom_call.1} parent=5 // pred_region
        %s2462 = ssub.s32 %s22, 2
        // Predicated region
        $region77: #{tpu_custom_call.1} parent=75 // pred_check
          %p2463 = pneg %p254
        $region78: #{tpu_custom_call.1} parent=75 // pred_check_branch
          %2465 = sbr.rel (%p2463) target = $region80
        $region79: #{tpu_custom_call.1} parent=75 // pred_region
          %s2466 = sand.u32 %s239, 1
          %s2467 = scalar_lea.sflag [#allocation8], %s2466
          %s2468 = sand.u32 %s239, 1
          %s2469 = smul.addr %s2468, 8
          %s2470 = scalar_lea.vmem [#allocation7], %s2469
          %2471 = dma.done %s2467, 128
        $region80: #{tpu_custom_call.1} parent=75 // pred_fallthru
          _
        // Predicated region
        $region81: #{tpu_custom_call.1} parent=75 // pred_check
          %p2472 = pneg %p282
        $region82: #{tpu_custom_call.1} parent=75 // pred_check_branch
          %2474 = sbr.rel (%p2472) target = $region84
        $region83: #{tpu_custom_call.1} parent=75 // pred_region
          %s2475 = sand.u32 %s267, 1
          %s2476 = scalar_lea.sflag [#allocation10], %s2475
          %s2477 = sand.u32 %s267, 1
          %s2478 = smul.addr %s2477, 16
          %s2479 = scalar_lea.vmem [#allocation9], %s2478
          %2480 = dma.done %s2476, 256
        $region84: #{tpu_custom_call.1} parent=75 // pred_fallthru
          _
      $region76: #{tpu_custom_call.1} parent=5 // pred_fallthru
        _
    $region6: #{tpu_custom_call.1} parent=1 // loop_footer
      %s26 = sadd.s32 1, %s22
    $region7: #{tpu_custom_call.1} parent=1 // loop_footer_branch
      %21 = sbr.rel target = $region3
    $region8: #{tpu_custom_call.1} parent=1 // loop_exit
      _
    %2481 = vsyncpa [#allocation8], 1
    %s2482 = scalar_lea.sflag [#allocation8], 1
    %2483 = vsyncpa %s2482, 1
    %2484 = vsyncpa [#allocation10], 1
    %s2485 = scalar_lea.sflag [#allocation10], 1
    %2486 = vsyncpa %s2485, 1

</llo_original>
